<compile_context>
chip_gen: v7x
topology: tpu7x:2x2x1
jax: 0.10.0
libtpu: 0.0.40
codegen_flags: <defaults>
</compile_context>

<pallas_src>
import functools

import jax
import jax.numpy as jnp
from jax.experimental import pallas as pl
from jax.experimental.pallas import tpu as pltpu

LANES = 128           # padded feature width (lane-dense stores, full MXU width)
NEG_BIG = -1e30       # finite "-inf" sentinel, safe in f32
LEAKY_SLOPE = 0.01    # F.leaky_relu default negative_slope


def _ceil_to(x, m):
    return ((x + m - 1) // m) * m


def _choose_tiling(n):
    """Padded node count (multiple of 128) and the largest dividing tile."""
    n_pad = _ceil_to(n, 128)
    for t in (512, 256, 128):
        if n_pad % t == 0:
            return n_pad, t
    return n_pad, 128  # unreachable (n_pad is a multiple of 128)


def _pad2d(x, rows, cols, dtype):
    out = jnp.zeros((rows, cols), dtype)
    return out.at[:x.shape[0], :x.shape[1]].set(x.astype(dtype))


def _split_attention_vec(a, d):
    # torch layout: a is (2d, 1) with a[:d] the src projection, a[d:] the dst.
    return jnp.concatenate([a[:d, :], a[d:, :]], axis=1)      # (d, 2)


# ----------------------------------------------------------------------------
# Kernel 1: layer-1 projection
#   H = X @ W            (bf16 inputs, f32 accumulation, bf16 lane-dense out)
#   e = H @ [a_src|a_dst] (per-node src / dst attention scores, width-2 dot)
# ----------------------------------------------------------------------------
def _proj_kernel(x_ref, w_ref, a_ref, h_ref, e_ref):
    h = jnp.dot(x_ref[...], w_ref[...], preferred_element_type=jnp.float32)
    h_ref[...] = h.astype(h_ref.dtype)
    e_ref[...] = jnp.dot(h, a_ref[...], preferred_element_type=jnp.float32)


def _project(x_bf, w_bf, a_f32, *, tm):
    n, k = x_bf.shape
    dp = w_bf.shape[1]
    return pl.pallas_call(
        _proj_kernel,
        out_shape=(jax.ShapeDtypeStruct((n, dp), jnp.bfloat16),
                   jax.ShapeDtypeStruct((n, 2), jnp.float32)),
        grid=(n // tm,),
        in_specs=[
            pl.BlockSpec((tm, k), lambda i: (i, 0)),
            pl.BlockSpec((k, dp), lambda i: (0, 0)),   # W resident in VMEM
            pl.BlockSpec((dp, 2), lambda i: (0, 0)),   # a resident in VMEM
        ],
        out_specs=(pl.BlockSpec((tm, dp), lambda i: (i, 0)),
                   pl.BlockSpec((tm, 2), lambda i: (i, 0))),
        compiler_params=pltpu.CompilerParams(
            dimension_semantics=("parallel",)),
    )(x_bf, w_bf, a_f32)


# ----------------------------------------------------------------------------
# Shared online masked-softmax step (flash-attention style)
#   score(i, j) = leaky_relu(a_src.h_i + a_dst.h_j) on existing edges only
#   masked row softmax accumulated across kv tiles in m/l/acc VMEM scratch
# ----------------------------------------------------------------------------
def _online_softmax_step(esrc_ref, edst_ref, adj_ref, h_ref, m_sc, l_sc, acc_sc):
    @pl.when(pl.program_id(1) == 0)
    def _():
        m_sc[...] = jnp.full_like(m_sc, NEG_BIG)
        l_sc[...] = jnp.zeros_like(l_sc)
        acc_sc[...] = jnp.zeros_like(acc_sc)

    s = esrc_ref[...] + edst_ref[...]                  # (tm,1)+(1,tk) -> (tm,tk)
    s = jnp.where(s >= 0, s, LEAKY_SLOPE * s)          # leaky_relu on edge score
    mask = adj_ref[...] != 0                           # int8 adjacency stream
    s = jnp.where(mask, s, NEG_BIG)

    m_new = jnp.maximum(m_sc[...], jnp.max(s, axis=1, keepdims=True))
    alpha = jnp.exp(m_sc[...] - m_new)
    p = jnp.where(mask, jnp.exp(s - m_new), 0.0)
    l_sc[...] = alpha * l_sc[...] + jnp.sum(p, axis=1, keepdims=True)
    acc_sc[...] = alpha * acc_sc[...] + jnp.dot(
        p.astype(h_ref.dtype), h_ref[...], preferred_element_type=jnp.float32)
    m_sc[...] = m_new


def _softmax_finalize(l_sc, acc_sc):
    # Rows with no edges have l == 0: output 0, matching torch.sparse.mm on an
    # empty attention row (no NaNs / infs).
    inv = pl.reciprocal(jnp.maximum(l_sc[...], 1e-30), approx=True)
    return acc_sc[...] * inv


# ----------------------------------------------------------------------------
# Kernel 2: layer-1 attention  (+ ELU + fused layer-2 projection epilogue)
# ----------------------------------------------------------------------------
def _attn_layer1_kernel(esrc_ref, edst_ref, adj_ref, h_ref, w2_ref, a2_ref,
                        h2_ref, e2_ref, m_sc, l_sc, acc_sc):
    _online_softmax_step(esrc_ref, edst_ref, adj_ref, h_ref, m_sc, l_sc, acc_sc)

    @pl.when(pl.program_id(1) == pl.num_programs(1) - 1)
    def _():
        hidden = _softmax_finalize(l_sc, acc_sc)                       # (tm, DP)
        hidden = jnp.where(hidden > 0, hidden, jnp.exp(hidden) - 1.0)  # F.elu
        # Fused next-layer projection: H2 = ELU(hidden) @ W2, e2 = H2 @ [a|a]
        h2 = jnp.dot(hidden.astype(jnp.bfloat16), w2_ref[...],
                     preferred_element_type=jnp.float32)
        h2_ref[...] = h2.astype(h2_ref.dtype)
        e2_ref[...] = jnp.dot(h2, a2_ref[...],
                              preferred_element_type=jnp.float32)


def _attention_layer1(esrc, edst, adj, h_bf, w2_bf, a2_f32, *, tm, tk):
    n = adj.shape[0]
    dp = h_bf.shape[1]
    return pl.pallas_call(
        _attn_layer1_kernel,
        out_shape=(jax.ShapeDtypeStruct((n, dp), jnp.bfloat16),
                   jax.ShapeDtypeStruct((n, 2), jnp.float32)),
        grid=(n // tm, n // tk),
        in_specs=[
            pl.BlockSpec((tm, 1), lambda qi, ki: (qi, 0)),    # e_src (rows)
            pl.BlockSpec((1, tk), lambda qi, ki: (0, ki)),    # e_dst (lanes)
            pl.BlockSpec((tm, tk), lambda qi, ki: (qi, ki)),  # int8 adjacency
            pl.BlockSpec((tk, dp), lambda qi, ki: (ki, 0)),   # H1 kv tile
            pl.BlockSpec((dp, dp), lambda qi, ki: (0, 0)),    # W2 resident
            pl.BlockSpec((dp, 2), lambda qi, ki: (0, 0)),     # a2 resident
        ],
        out_specs=(pl.BlockSpec((tm, dp), lambda qi, ki: (qi, 0)),
                   pl.BlockSpec((tm, 2), lambda qi, ki: (qi, 0))),
        scratch_shapes=[pltpu.VMEM((tm, 1), jnp.float32),
                        pltpu.VMEM((tm, 1), jnp.float32),
                        pltpu.VMEM((tm, dp), jnp.float32)],
        compiler_params=pltpu.CompilerParams(
            dimension_semantics=("parallel", "arbitrary")),
    )(esrc, edst, adj, h_bf, w2_bf, a2_f32)


# ----------------------------------------------------------------------------
# Kernel 3: layer-2 attention  (+ fused log_softmax epilogue)
# ----------------------------------------------------------------------------
def _attn_layer2_kernel(esrc_ref, edst_ref, adj_ref, h_ref, out_ref,
                        m_sc, l_sc, acc_sc, *, num_classes):
    _online_softmax_step(esrc_ref, edst_ref, adj_ref, h_ref, m_sc, l_sc, acc_sc)

    @pl.when(pl.program_id(1) == pl.num_programs(1) - 1)
    def _():
        out = _softmax_finalize(l_sc, acc_sc)                 # (tm, DP) f32
        lane = jax.lax.broadcasted_iota(jnp.int32, out.shape, 1)
        valid = lane < num_classes                            # real class lanes
        mx = jnp.max(jnp.where(valid, out, NEG_BIG), axis=1, keepdims=True)
        z = out - mx
        lse = jnp.log(jnp.sum(jnp.where(valid, jnp.exp(z), 0.0),
                              axis=1, keepdims=True))
        out_ref[...] = jnp.where(valid, z - lse, 0.0)         # lane-dense store


def _attention_layer2(esrc, edst, adj, h_bf, *, num_classes, tm, tk):
    n = adj.shape[0]
    dp = h_bf.shape[1]
    kernel = functools.partial(_attn_layer2_kernel, num_classes=num_classes)
    return pl.pallas_call(
        kernel,
        out_shape=jax.ShapeDtypeStruct((n, dp), jnp.float32),
        grid=(n // tm, n // tk),
        in_specs=[
            pl.BlockSpec((tm, 1), lambda qi, ki: (qi, 0)),
            pl.BlockSpec((1, tk), lambda qi, ki: (0, ki)),
            pl.BlockSpec((tm, tk), lambda qi, ki: (qi, ki)),
            pl.BlockSpec((tk, dp), lambda qi, ki: (ki, 0)),
        ],
        out_specs=pl.BlockSpec((tm, dp), lambda qi, ki: (qi, 0)),
        scratch_shapes=[pltpu.VMEM((tm, 1), jnp.float32),
                        pltpu.VMEM((tm, 1), jnp.float32),
                        pltpu.VMEM((tm, dp), jnp.float32)],
        compiler_params=pltpu.CompilerParams(
            dimension_semantics=("parallel", "arbitrary")),
    )(esrc, edst, adj, h_bf)


# ----------------------------------------------------------------------------
# Full GAT forward (2 layers), mirroring the PyTorch module
# ----------------------------------------------------------------------------
@jax.jit
def gat_forward(x, adj_i8, w1, aw1, w2, aw2):
    n, in_dim = x.shape
    hidden_dim = w1.shape[1]
    num_classes = w2.shape[1]
    assert hidden_dim <= LANES and num_classes <= LANES

    n_pad, tile = _choose_tiling(n)

    # Pad node axis to a tile multiple (zero rows/cols: no edges, sliced off)
    # and feature axes to 128 lanes (lane-dense stores + full MXU width).
    x_p = _pad2d(x, n_pad, in_dim, jnp.bfloat16)
    adj_p = _pad2d(adj_i8, n_pad, n_pad, jnp.int8)
    w1p = _pad2d(w1, in_dim, LANES, jnp.bfloat16)
    a1p = _pad2d(_split_attention_vec(aw1, hidden_dim), LANES, 2, jnp.float32)
    w2p = _pad2d(w2, LANES, LANES, jnp.bfloat16)
    a2p = _pad2d(_split_attention_vec(aw2, num_classes), LANES, 2, jnp.float32)

    # Layer 1 projection (DistMMLayer 'L1' == local @ W at world size 1).
    h1, e1 = _project(x_p, w1p, a1p, tm=tile)
    esrc1 = e1[:, 0:1]                     # (n_pad, 1) column (sublane) layout
    edst1 = e1[:, 1].reshape(1, n_pad)     # (1, n_pad) row (lane) layout

    # Layer 1 attention + ELU, with layer-2 projection ('L2') fused in.
    h2, e2 = _attention_layer1(esrc1, edst1, adj_p, h1, w2p, a2p,
                               tm=tile, tk=tile)
    esrc2 = e2[:, 0:1]
    edst2 = e2[:, 1].reshape(1, n_pad)

    # Layer 2 attention with fused log_softmax epilogue.
    out_pad = _attention_layer2(esrc2, edst2, adj_p, h2,
                                num_classes=num_classes, tm=tile, tk=tile)
    return out_pad[:n, :num_classes]


if __name__ == "__main__":
    # Small synthetic graph consistent with the module's shapes.
    N = 64            # number of nodes
    IN_DIM = 32       # g.features.size(1)
    HIDDEN = 16       # hidden_dim
    NUM_CLASSES = 8   # g.num_classes

    key = jax.random.PRNGKey(0)
    k_x, k_adj, k_w1, k_w2, k_a1, k_a2 = jax.random.split(key, 6)

    # Node features.
    x = jax.random.uniform(k_x, (N, IN_DIM), dtype=jnp.float32)

    # Random adjacency as an int8 mask with self-loops (every row has >= 1 edge).
    adj = jax.random.uniform(k_adj, (N, N)) < 0.2
    adj = jnp.logical_or(adj, jnp.eye(N, dtype=bool)).astype(jnp.int8)

    # Parameters (uniform[0,1), mirroring torch.rand under manual_seed(0)).
    w1 = jax.random.uniform(k_w1, (IN_DIM, HIDDEN), dtype=jnp.float32)
    w2 = jax.random.uniform(k_w2, (HIDDEN, NUM_CLASSES), dtype=jnp.float32)
    aw1 = jax.random.uniform(k_a1, (2 * HIDDEN, 1), dtype=jnp.float32)
    aw2 = jax.random.uniform(k_a2, (2 * NUM_CLASSES, 1), dtype=jnp.float32)

    out = gat_forward(x, adj, w1, aw1, w2, aw2)
    out = jax.block_until_ready(out)

    assert out.shape == (N, NUM_CLASSES)
    assert bool(jnp.all(jnp.isfinite(out)))
    # log_softmax rows must exponentiate-sum to 1 (epilogue computed in f32).
    row_sum = jnp.sum(jnp.exp(out), axis=1)
    assert bool(jnp.all(jnp.abs(row_sum - 1.0) < 1e-2))
    print("KERNEL_OK")
</pallas_src>

<mosaic_0001>
module attributes {stable_mosaic.version = 11 : i64} {
  func.func @_proj_kernel(%arg0: i32, %arg1: memref<128x32xbf16, #tpu.memory_space<vmem>>, %arg2: memref<32x128xbf16, #tpu.memory_space<vmem>>, %arg3: memref<128x2xf32, #tpu.memory_space<vmem>>, %arg4: memref<128x128xbf16, #tpu.memory_space<vmem>>, %arg5: memref<128x2xf32, #tpu.memory_space<vmem>>) attributes {dimension_semantics = [#tpu.dimension_semantics<parallel>], iteration_bounds = array<i64: 1>, scalar_prefetch = 0 : i64, scratch_operands = 0 : i64, tpu.core_type = #tpu.core_type<tc>, window_params = [{transform_indices = @transform_0, window_bounds = array<i64: 128, 32>}, {pipeline_mode = #tpu.pipeline_mode<synchronous>, transform_indices = @transform_1, window_bounds = array<i64: 32, 128>}, {pipeline_mode = #tpu.pipeline_mode<synchronous>, transform_indices = @transform_2, window_bounds = array<i64: 128, 2>}, {transform_indices = @transform_3, window_bounds = array<i64: 128, 128>}, {transform_indices = @transform_4, window_bounds = array<i64: 128, 2>}]} {
    %c0 = arith.constant 0 : index
    %c0_0 = arith.constant 0 : index
    %0 = vector.load %arg1[%c0, %c0_0] : memref<128x32xbf16, #tpu.memory_space<vmem>>, vector<128x32xbf16>
    %c0_1 = arith.constant 0 : index
    %c0_2 = arith.constant 0 : index
    %1 = vector.load %arg2[%c0_1, %c0_2] : memref<32x128xbf16, #tpu.memory_space<vmem>>, vector<32x128xbf16>
    %cst = arith.constant dense<0.000000e+00> : vector<128x128xf32>
    %2 = tpu.matmul %0, %1, %cst {dimension_numbers = #tpu.dot_dimension_numbers<[1], [0], [0], [1], [0, 0, 1, 1], [], []>} : vector<128x32xbf16>, vector<32x128xbf16>, vector<128x128xf32> -> vector<128x128xf32>
    %3 = arith.truncf %2 : vector<128x128xf32> to vector<128x128xbf16>
    %c0_3 = arith.constant 0 : index
    %c0_4 = arith.constant 0 : index
    %4 = vector.load %arg4[%c0_3, %c0_4] : memref<128x128xbf16, #tpu.memory_space<vmem>>, vector<128x128xbf16>
    tpu.vector_store %arg4[%c0_3, %c0_4], %3 {strides = array<i32>} : memref<128x128xbf16, #tpu.memory_space<vmem>>, vector<128x128xbf16>,
    %c0_5 = arith.constant 0 : index
    %c0_6 = arith.constant 0 : index
    %5 = vector.load %arg3[%c0_5, %c0_6] : memref<128x2xf32, #tpu.memory_space<vmem>>, vector<128x2xf32>
    %cst_7 = arith.constant dense<0.000000e+00> : vector<128x2xf32>
    %6 = tpu.matmul %2, %5, %cst_7 {dimension_numbers = #tpu.dot_dimension_numbers<[1], [0], [0], [1], [0, 0, 1, 1], [], []>} : vector<128x128xf32>, vector<128x2xf32>, vector<128x2xf32> -> vector<128x2xf32>
    %c0_8 = arith.constant 0 : index
    %c0_9 = arith.constant 0 : index
    %7 = vector.load %arg5[%c0_8, %c0_9] : memref<128x2xf32, #tpu.memory_space<vmem>>, vector<128x2xf32>
    tpu.vector_store %arg5[%c0_8, %c0_9], %6 {strides = array<i32>} : memref<128x2xf32, #tpu.memory_space<vmem>>, vector<128x2xf32>,
    return
  }
  func.func @transform_0(%arg0: i32) -> (i32, i32) {
    %c0_i32 = arith.constant 0 : i32
    %c0_i32_0 = arith.constant 0 : i32
    return %arg0, %c0_i32 : i32, i32
  }
  func.func @transform_1(%arg0: i32) -> (i32, i32) {
    %c0_i32 = arith.constant 0 : i32
    %c0_i32_0 = arith.constant 0 : i32
    %c0_i32_1 = arith.constant 0 : i32
    return %c0_i32, %c0_i32_0 : i32, i32
  }
  func.func @transform_2(%arg0: i32) -> (i32, i32) {
    %c0_i32 = arith.constant 0 : i32
    %c0_i32_0 = arith.constant 0 : i32
    %c0_i32_1 = arith.constant 0 : i32
    return %c0_i32, %c0_i32_0 : i32, i32
  }
  func.func @transform_3(%arg0: i32) -> (i32, i32) {
    %c0_i32 = arith.constant 0 : i32
    %c0_i32_0 = arith.constant 0 : i32
    return %arg0, %c0_i32 : i32, i32
  }
  func.func @transform_4(%arg0: i32) -> (i32, i32) {
    %c0_i32 = arith.constant 0 : i32
    %c0_i32_0 = arith.constant 0 : i32
    return %arg0, %c0_i32 : i32, i32
  }
}

module attributes {stable_mosaic.version = 11 : i64} {
  func.func @_attn_layer2_kernel(%arg0: i32, %arg1: i32, %arg2: memref<128x1xf32, #tpu.memory_space<vmem>>, %arg3: memref<1x128xf32, #tpu.memory_space<vmem>>, %arg4: memref<128x128xi8, #tpu.memory_space<vmem>>, %arg5: memref<128x128xbf16, #tpu.memory_space<vmem>>, %arg6: memref<128x128xf32, #tpu.memory_space<vmem>>, %arg7: memref<128x1xf32, #tpu.memory_space<vmem>>, %arg8: memref<128x1xf32, #tpu.memory_space<vmem>>, %arg9: memref<128x128xf32, #tpu.memory_space<vmem>>) attributes {dimension_semantics = [#tpu.dimension_semantics<parallel>, #tpu.dimension_semantics<arbitrary>], iteration_bounds = array<i64: 1, 1>, scalar_prefetch = 0 : i64, scratch_operands = 3 : i64, tpu.core_type = #tpu.core_type<tc>, window_params = [{transform_indices = @transform_0, window_bounds = array<i64: 128, 1>}, {transform_indices = @transform_1, window_bounds = array<i64: 1, 128>}, {transform_indices = @transform_2, window_bounds = array<i64: 128, 128>}, {transform_indices = @transform_3, window_bounds = array<i64: 128, 128>}, {transform_indices = @transform_4, window_bounds = array<i64: 128, 128>}]} {
    %c0_i32 = arith.constant 0 : i32
    %0 = arith.cmpi eq, %arg1, %c0_i32 : i32
    %1 = arith.extui %0 : i1 to i32
    %c0_i32_0 = arith.constant 0 : i32
    %2 = arith.cmpi ne, %1, %c0_i32_0 : i32
    scf.if %2 {
      %cst_30 = arith.constant -1.000000e+30 : f32
      %48 = vector.broadcast %cst_30 : f32 to vector<128x1xf32>
      %c0_31 = arith.constant 0 : index
      %c0_32 = arith.constant 0 : index
      %49 = vector.load %arg7[%c0_31, %c0_32] : memref<128x1xf32, #tpu.memory_space<vmem>>, vector<128x1xf32>
      tpu.vector_store %arg7[%c0_31, %c0_32], %48 {strides = array<i32>} : memref<128x1xf32, #tpu.memory_space<vmem>>, vector<128x1xf32>,
      %cst_33 = arith.constant 0.000000e+00 : f32
      %50 = vector.broadcast %cst_33 : f32 to vector<128x1xf32>
      %c0_34 = arith.constant 0 : index
      %c0_35 = arith.constant 0 : index
      %51 = vector.load %arg8[%c0_34, %c0_35] : memref<128x1xf32, #tpu.memory_space<vmem>>, vector<128x1xf32>
      tpu.vector_store %arg8[%c0_34, %c0_35], %50 {strides = array<i32>} : memref<128x1xf32, #tpu.memory_space<vmem>>, vector<128x1xf32>,
      %cst_36 = arith.constant 0.000000e+00 : f32
      %52 = vector.broadcast %cst_36 : f32 to vector<128x128xf32>
      %c0_37 = arith.constant 0 : index
      %c0_38 = arith.constant 0 : index
      %53 = vector.load %arg9[%c0_37, %c0_38] : memref<128x128xf32, #tpu.memory_space<vmem>>, vector<128x128xf32>
      tpu.vector_store %arg9[%c0_37, %c0_38], %52 {strides = array<i32>} : memref<128x128xf32, #tpu.memory_space<vmem>>, vector<128x128xf32>,
    } else {
    }
    %c0 = arith.constant 0 : index
    %c0_1 = arith.constant 0 : index
    %3 = vector.load %arg2[%c0, %c0_1] : memref<128x1xf32, #tpu.memory_space<vmem>>, vector<128x1xf32>
    %c0_2 = arith.constant 0 : index
    %c0_3 = arith.constant 0 : index
    %4 = vector.load %arg3[%c0_2, %c0_3] : memref<1x128xf32, #tpu.memory_space<vmem>>, vector<1x128xf32>
    %5 = vector.broadcast %3 : vector<128x1xf32> to vector<128x128xf32>
    %6 = vector.broadcast %4 : vector<1x128xf32> to vector<128x128xf32>
    %7 = arith.addf %5, %6 : vector<128x128xf32>
    %cst = arith.constant 0.000000e+00 : f32
    %8 = vector.broadcast %cst : f32 to vector<128x128xf32>
    %9 = arith.cmpf oge, %7, %8 : vector<128x128xf32>
    %cst_4 = arith.constant 0.00999999977 : f32
    %10 = vector.broadcast %cst_4 : f32 to vector<128x128xf32>
    %11 = arith.mulf %10, %7 : vector<128x128xf32>
    %12 = arith.select %9, %7, %11 : vector<128x128xi1>, vector<128x128xf32>
    %c0_5 = arith.constant 0 : index
    %c0_6 = arith.constant 0 : index
    %13 = vector.load %arg4[%c0_5, %c0_6] : memref<128x128xi8, #tpu.memory_space<vmem>>, vector<128x128xi8>
    %c0_i8 = arith.constant 0 : i8
    %14 = vector.broadcast %c0_i8 : i8 to vector<128x128xi8>
    %15 = arith.cmpi ne, %13, %14 : vector<128x128xi8>
    %cst_7 = arith.constant -1.000000e+30 : f32
    %16 = vector.broadcast %cst_7 : f32 to vector<128x128xf32>
    %17 = arith.select %15, %12, %16 : vector<128x128xi1>, vector<128x128xf32>
    %c0_8 = arith.constant 0 : index
    %c0_9 = arith.constant 0 : index
    %18 = vector.load %arg7[%c0_8, %c0_9] : memref<128x1xf32, #tpu.memory_space<vmem>>, vector<128x1xf32>
    %cst_10 = arith.constant dense<0xFF800000> : vector<128xf32>
    %19 = vector.multi_reduction <maximumf>, %17, %cst_10 [1] : vector<128x128xf32> to vector<128xf32>
    %20 = vector.shape_cast %19 : vector<128xf32> to vector<128x1xf32>
    %21 = arith.maximumf %18, %20 : vector<128x1xf32>
    %c0_11 = arith.constant 0 : index
    %c0_12 = arith.constant 0 : index
    %22 = vector.load %arg7[%c0_11, %c0_12] : memref<128x1xf32, #tpu.memory_space<vmem>>, vector<128x1xf32>
    %23 = arith.subf %22, %21 : vector<128x1xf32>
    %24 = math.exp %23 : vector<128x1xf32>
    %25 = vector.broadcast %21 : vector<128x1xf32> to vector<128x128xf32>
    %26 = arith.subf %17, %25 : vector<128x128xf32>
    %27 = math.exp %26 : vector<128x128xf32>
    %cst_13 = arith.constant 0.000000e+00 : f32
    %28 = vector.broadcast %cst_13 : f32 to vector<128x128xf32>
    %29 = arith.select %15, %27, %28 : vector<128x128xi1>, vector<128x128xf32>
    %c0_14 = arith.constant 0 : index
    %c0_15 = arith.constant 0 : index
    %30 = vector.load %arg8[%c0_14, %c0_15] : memref<128x1xf32, #tpu.memory_space<vmem>>, vector<128x1xf32>
    %31 = arith.mulf %24, %30 : vector<128x1xf32>
    %cst_16 = arith.constant dense<0.000000e+00> : vector<128xf32>
    %32 = vector.multi_reduction <add>, %29, %cst_16 [1] : vector<128x128xf32> to vector<128xf32>
    %33 = vector.shape_cast %32 : vector<128xf32> to vector<128x1xf32>
    %34 = arith.addf %31, %33 : vector<128x1xf32>
    %c0_17 = arith.constant 0 : index
    %c0_18 = arith.constant 0 : index
    %35 = vector.load %arg8[%c0_17, %c0_18] : memref<128x1xf32, #tpu.memory_space<vmem>>, vector<128x1xf32>
    tpu.vector_store %arg8[%c0_17, %c0_18], %34 {strides = array<i32>} : memref<128x1xf32, #tpu.memory_space<vmem>>, vector<128x1xf32>,
    %c0_19 = arith.constant 0 : index
    %c0_20 = arith.constant 0 : index
    %36 = vector.load %arg9[%c0_19, %c0_20] : memref<128x128xf32, #tpu.memory_space<vmem>>, vector<128x128xf32>
    %37 = vector.broadcast %24 : vector<128x1xf32> to vector<128x128xf32>
    %38 = arith.mulf %37, %36 : vector<128x128xf32>
    %39 = arith.truncf %29 : vector<128x128xf32> to vector<128x128xbf16>
    %c0_21 = arith.constant 0 : index
    %c0_22 = arith.constant 0 : index
    %40 = vector.load %arg5[%c0_21, %c0_22] : memref<128x128xbf16, #tpu.memory_space<vmem>>, vector<128x128xbf16>
    %cst_23 = arith.constant dense<0.000000e+00> : vector<128x128xf32>
    %41 = tpu.matmul %39, %40, %cst_23 {dimension_numbers = #tpu.dot_dimension_numbers<[1], [0], [0], [1], [0, 0, 1, 1], [], []>} : vector<128x128xbf16>, vector<128x128xbf16>, vector<128x128xf32> -> vector<128x128xf32>
    %42 = arith.addf %38, %41 : vector<128x128xf32>
    %c0_24 = arith.constant 0 : index
    %c0_25 = arith.constant 0 : index
    %43 = vector.load %arg9[%c0_24, %c0_25] : memref<128x128xf32, #tpu.memory_space<vmem>>, vector<128x128xf32>
    tpu.vector_store %arg9[%c0_24, %c0_25], %42 {strides = array<i32>} : memref<128x128xf32, #tpu.memory_space<vmem>>, vector<128x128xf32>,
    %c0_26 = arith.constant 0 : index
    %c0_27 = arith.constant 0 : index
    %44 = vector.load %arg7[%c0_26, %c0_27] : memref<128x1xf32, #tpu.memory_space<vmem>>, vector<128x1xf32>
    tpu.vector_store %arg7[%c0_26, %c0_27], %21 {strides = array<i32>} : memref<128x1xf32, #tpu.memory_space<vmem>>, vector<128x1xf32>,
    %c0_i32_28 = arith.constant 0 : i32
    %45 = arith.cmpi eq, %arg1, %c0_i32_28 : i32
    %46 = arith.extui %45 : i1 to i32
    %c0_i32_29 = arith.constant 0 : i32
    %47 = arith.cmpi ne, %46, %c0_i32_29 : i32
    scf.if %47 {
      %c0_30 = arith.constant 0 : index
      %c0_31 = arith.constant 0 : index
      %48 = vector.load %arg8[%c0_30, %c0_31] : memref<128x1xf32, #tpu.memory_space<vmem>>, vector<128x1xf32>
      %cst_32 = arith.constant 1.000000e-30 : f32
      %49 = vector.broadcast %cst_32 : f32 to vector<128x1xf32>
      %50 = arith.maximumf %48, %49 : vector<128x1xf32>
      %51 = tpu.reciprocal %50 {approx = true} : vector<128x1xf32> -> vector<128x1xf32>
      %c0_33 = arith.constant 0 : index
      %c0_34 = arith.constant 0 : index
      %52 = vector.load %arg9[%c0_33, %c0_34] : memref<128x128xf32, #tpu.memory_space<vmem>>, vector<128x128xf32>
      %53 = vector.broadcast %51 : vector<128x1xf32> to vector<128x128xf32>
      %54 = arith.mulf %52, %53 : vector<128x128xf32>
      %55 = tpu.iota {dimensions = array<i32: 1>} : vector<128x128xi32>
      %c8_i32 = arith.constant 8 : i32
      %56 = vector.broadcast %c8_i32 : i32 to vector<128x128xi32>
      %57 = arith.cmpi slt, %55, %56 : vector<128x128xi32>
      %cst_35 = arith.constant -1.000000e+30 : f32
      %58 = vector.broadcast %cst_35 : f32 to vector<128x128xf32>
      %59 = arith.select %57, %54, %58 : vector<128x128xi1>, vector<128x128xf32>
      %cst_36 = arith.constant dense<0xFF800000> : vector<128xf32>
      %60 = vector.multi_reduction <maximumf>, %59, %cst_36 [1] : vector<128x128xf32> to vector<128xf32>
      %61 = vector.shape_cast %60 : vector<128xf32> to vector<128x1xf32>
      %62 = vector.broadcast %61 : vector<128x1xf32> to vector<128x128xf32>
      %63 = arith.subf %54, %62 : vector<128x128xf32>
      %64 = math.exp %63 : vector<128x128xf32>
      %cst_37 = arith.constant 0.000000e+00 : f32
      %65 = vector.broadcast %cst_37 : f32 to vector<128x128xf32>
      %66 = arith.select %57, %64, %65 : vector<128x128xi1>, vector<128x128xf32>
      %cst_38 = arith.constant dense<0.000000e+00> : vector<128xf32>
      %67 = vector.multi_reduction <add>, %66, %cst_38 [1] : vector<128x128xf32> to vector<128xf32>
      %68 = vector.shape_cast %67 : vector<128xf32> to vector<128x1xf32>
      %69 = math.log %68 : vector<128x1xf32>
      %70 = vector.broadcast %69 : vector<128x1xf32> to vector<128x128xf32>
      %71 = arith.subf %63, %70 : vector<128x128xf32>
      %cst_39 = arith.constant 0.000000e+00 : f32
      %72 = vector.broadcast %cst_39 : f32 to vector<128x128xf32>
      %73 = arith.select %57, %71, %72 : vector<128x128xi1>, vector<128x128xf32>
      %c0_40 = arith.constant 0 : index
      %c0_41 = arith.constant 0 : index
      %74 = vector.load %arg6[%c0_40, %c0_41] : memref<128x128xf32, #tpu.memory_space<vmem>>, vector<128x128xf32>
      tpu.vector_store %arg6[%c0_40, %c0_41], %73 {strides = array<i32>} : memref<128x128xf32, #tpu.memory_space<vmem>>, vector<128x128xf32>,
    } else {
    }
    return
  }
  func.func @transform_0(%arg0: i32, %arg1: i32) -> (i32, i32) {
    %c0_i32 = arith.constant 0 : i32
    %c0_i32_0 = arith.constant 0 : i32
    return %arg0, %c0_i32 : i32, i32
  }
  func.func @transform_1(%arg0: i32, %arg1: i32) -> (i32, i32) {
    %c0_i32 = arith.constant 0 : i32
    %c0_i32_0 = arith.constant 0 : i32
    return %c0_i32, %arg1 : i32, i32
  }
  func.func @transform_2(%arg0: i32, %arg1: i32) -> (i32, i32) {
    %c0_i32 = arith.constant 0 : i32
    return %arg0, %arg1 : i32, i32
  }
  func.func @transform_3(%arg0: i32, %arg1: i32) -> (i32, i32) {
    %c0_i32 = arith.constant 0 : i32
    %c0_i32_0 = arith.constant 0 : i32
    return %arg1, %c0_i32 : i32, i32
  }
  func.func @transform_4(%arg0: i32, %arg1: i32) -> (i32, i32) {
    %c0_i32 = arith.constant 0 : i32
    %c0_i32_0 = arith.constant 0 : i32
    return %arg0, %c0_i32 : i32, i32
  }
}

module attributes {stable_mosaic.version = 11 : i64} {
  func.func @_attn_layer1_kernel(%arg0: i32, %arg1: i32, %arg2: memref<128x1xf32, #tpu.memory_space<vmem>>, %arg3: memref<1x128xf32, #tpu.memory_space<vmem>>, %arg4: memref<128x128xi8, #tpu.memory_space<vmem>>, %arg5: memref<128x128xbf16, #tpu.memory_space<vmem>>, %arg6: memref<128x128xbf16, #tpu.memory_space<vmem>>, %arg7: memref<128x2xf32, #tpu.memory_space<vmem>>, %arg8: memref<128x128xbf16, #tpu.memory_space<vmem>>, %arg9: memref<128x2xf32, #tpu.memory_space<vmem>>, %arg10: memref<128x1xf32, #tpu.memory_space<vmem>>, %arg11: memref<128x1xf32, #tpu.memory_space<vmem>>, %arg12: memref<128x128xf32, #tpu.memory_space<vmem>>) attributes {dimension_semantics = [#tpu.dimension_semantics<parallel>, #tpu.dimension_semantics<arbitrary>], iteration_bounds = array<i64: 1, 1>, scalar_prefetch = 0 : i64, scratch_operands = 3 : i64, tpu.core_type = #tpu.core_type<tc>, window_params = [{transform_indices = @transform_0, window_bounds = array<i64: 128, 1>}, {transform_indices = @transform_1, window_bounds = array<i64: 1, 128>}, {transform_indices = @transform_2, window_bounds = array<i64: 128, 128>}, {transform_indices = @transform_3, window_bounds = array<i64: 128, 128>}, {pipeline_mode = #tpu.pipeline_mode<synchronous>, transform_indices = @transform_4, window_bounds = array<i64: 128, 128>}, {pipeline_mode = #tpu.pipeline_mode<synchronous>, transform_indices = @transform_5, window_bounds = array<i64: 128, 2>}, {transform_indices = @transform_6, window_bounds = array<i64: 128, 128>}, {transform_indices = @transform_7, window_bounds = array<i64: 128, 2>}]} {
    %c0_i32 = arith.constant 0 : i32
    %0 = arith.cmpi eq, %arg1, %c0_i32 : i32
    %1 = arith.extui %0 : i1 to i32
    %c0_i32_0 = arith.constant 0 : i32
    %2 = arith.cmpi ne, %1, %c0_i32_0 : i32
    scf.if %2 {
      %cst_30 = arith.constant -1.000000e+30 : f32
      %48 = vector.broadcast %cst_30 : f32 to vector<128x1xf32>
      %c0_31 = arith.constant 0 : index
      %c0_32 = arith.constant 0 : index
      %49 = vector.load %arg10[%c0_31, %c0_32] : memref<128x1xf32, #tpu.memory_space<vmem>>, vector<128x1xf32>
      tpu.vector_store %arg10[%c0_31, %c0_32], %48 {strides = array<i32>} : memref<128x1xf32, #tpu.memory_space<vmem>>, vector<128x1xf32>,
      %cst_33 = arith.constant 0.000000e+00 : f32
      %50 = vector.broadcast %cst_33 : f32 to vector<128x1xf32>
      %c0_34 = arith.constant 0 : index
      %c0_35 = arith.constant 0 : index
      %51 = vector.load %arg11[%c0_34, %c0_35] : memref<128x1xf32, #tpu.memory_space<vmem>>, vector<128x1xf32>
      tpu.vector_store %arg11[%c0_34, %c0_35], %50 {strides = array<i32>} : memref<128x1xf32, #tpu.memory_space<vmem>>, vector<128x1xf32>,
      %cst_36 = arith.constant 0.000000e+00 : f32
      %52 = vector.broadcast %cst_36 : f32 to vector<128x128xf32>
      %c0_37 = arith.constant 0 : index
      %c0_38 = arith.constant 0 : index
      %53 = vector.load %arg12[%c0_37, %c0_38] : memref<128x128xf32, #tpu.memory_space<vmem>>, vector<128x128xf32>
      tpu.vector_store %arg12[%c0_37, %c0_38], %52 {strides = array<i32>} : memref<128x128xf32, #tpu.memory_space<vmem>>, vector<128x128xf32>,
    } else {
    }
    %c0 = arith.constant 0 : index
    %c0_1 = arith.constant 0 : index
    %3 = vector.load %arg2[%c0, %c0_1] : memref<128x1xf32, #tpu.memory_space<vmem>>, vector<128x1xf32>
    %c0_2 = arith.constant 0 : index
    %c0_3 = arith.constant 0 : index
    %4 = vector.load %arg3[%c0_2, %c0_3] : memref<1x128xf32, #tpu.memory_space<vmem>>, vector<1x128xf32>
    %5 = vector.broadcast %3 : vector<128x1xf32> to vector<128x128xf32>
    %6 = vector.broadcast %4 : vector<1x128xf32> to vector<128x128xf32>
    %7 = arith.addf %5, %6 : vector<128x128xf32>
    %cst = arith.constant 0.000000e+00 : f32
    %8 = vector.broadcast %cst : f32 to vector<128x128xf32>
    %9 = arith.cmpf oge, %7, %8 : vector<128x128xf32>
    %cst_4 = arith.constant 0.00999999977 : f32
    %10 = vector.broadcast %cst_4 : f32 to vector<128x128xf32>
    %11 = arith.mulf %10, %7 : vector<128x128xf32>
    %12 = arith.select %9, %7, %11 : vector<128x128xi1>, vector<128x128xf32>
    %c0_5 = arith.constant 0 : index
    %c0_6 = arith.constant 0 : index
    %13 = vector.load %arg4[%c0_5, %c0_6] : memref<128x128xi8, #tpu.memory_space<vmem>>, vector<128x128xi8>
    %c0_i8 = arith.constant 0 : i8
    %14 = vector.broadcast %c0_i8 : i8 to vector<128x128xi8>
    %15 = arith.cmpi ne, %13, %14 : vector<128x128xi8>
    %cst_7 = arith.constant -1.000000e+30 : f32
    %16 = vector.broadcast %cst_7 : f32 to vector<128x128xf32>
    %17 = arith.select %15, %12, %16 : vector<128x128xi1>, vector<128x128xf32>
    %c0_8 = arith.constant 0 : index
    %c0_9 = arith.constant 0 : index
    %18 = vector.load %arg10[%c0_8, %c0_9] : memref<128x1xf32, #tpu.memory_space<vmem>>, vector<128x1xf32>
    %cst_10 = arith.constant dense<0xFF800000> : vector<128xf32>
    %19 = vector.multi_reduction <maximumf>, %17, %cst_10 [1] : vector<128x128xf32> to vector<128xf32>
    %20 = vector.shape_cast %19 : vector<128xf32> to vector<128x1xf32>
    %21 = arith.maximumf %18, %20 : vector<128x1xf32>
    %c0_11 = arith.constant 0 : index
    %c0_12 = arith.constant 0 : index
    %22 = vector.load %arg10[%c0_11, %c0_12] : memref<128x1xf32, #tpu.memory_space<vmem>>, vector<128x1xf32>
    %23 = arith.subf %22, %21 : vector<128x1xf32>
    %24 = math.exp %23 : vector<128x1xf32>
    %25 = vector.broadcast %21 : vector<128x1xf32> to vector<128x128xf32>
    %26 = arith.subf %17, %25 : vector<128x128xf32>
    %27 = math.exp %26 : vector<128x128xf32>
    %cst_13 = arith.constant 0.000000e+00 : f32
    %28 = vector.broadcast %cst_13 : f32 to vector<128x128xf32>
    %29 = arith.select %15, %27, %28 : vector<128x128xi1>, vector<128x128xf32>
    %c0_14 = arith.constant 0 : index
    %c0_15 = arith.constant 0 : index
    %30 = vector.load %arg11[%c0_14, %c0_15] : memref<128x1xf32, #tpu.memory_space<vmem>>, vector<128x1xf32>
    %31 = arith.mulf %24, %30 : vector<128x1xf32>
    %cst_16 = arith.constant dense<0.000000e+00> : vector<128xf32>
    %32 = vector.multi_reduction <add>, %29, %cst_16 [1] : vector<128x128xf32> to vector<128xf32>
    %33 = vector.shape_cast %32 : vector<128xf32> to vector<128x1xf32>
    %34 = arith.addf %31, %33 : vector<128x1xf32>
    %c0_17 = arith.constant 0 : index
    %c0_18 = arith.constant 0 : index
    %35 = vector.load %arg11[%c0_17, %c0_18] : memref<128x1xf32, #tpu.memory_space<vmem>>, vector<128x1xf32>
    tpu.vector_store %arg11[%c0_17, %c0_18], %34 {strides = array<i32>} : memref<128x1xf32, #tpu.memory_space<vmem>>, vector<128x1xf32>,
    %c0_19 = arith.constant 0 : index
    %c0_20 = arith.constant 0 : index
    %36 = vector.load %arg12[%c0_19, %c0_20] : memref<128x128xf32, #tpu.memory_space<vmem>>, vector<128x128xf32>
    %37 = vector.broadcast %24 : vector<128x1xf32> to vector<128x128xf32>
    %38 = arith.mulf %37, %36 : vector<128x128xf32>
    %39 = arith.truncf %29 : vector<128x128xf32> to vector<128x128xbf16>
    %c0_21 = arith.constant 0 : index
    %c0_22 = arith.constant 0 : index
    %40 = vector.load %arg5[%c0_21, %c0_22] : memref<128x128xbf16, #tpu.memory_space<vmem>>, vector<128x128xbf16>
    %cst_23 = arith.constant dense<0.000000e+00> : vector<128x128xf32>
    %41 = tpu.matmul %39, %40, %cst_23 {dimension_numbers = #tpu.dot_dimension_numbers<[1], [0], [0], [1], [0, 0, 1, 1], [], []>} : vector<128x128xbf16>, vector<128x128xbf16>, vector<128x128xf32> -> vector<128x128xf32>
    %42 = arith.addf %38, %41 : vector<128x128xf32>
    %c0_24 = arith.constant 0 : index
    %c0_25 = arith.constant 0 : index
    %43 = vector.load %arg12[%c0_24, %c0_25] : memref<128x128xf32, #tpu.memory_space<vmem>>, vector<128x128xf32>
    tpu.vector_store %arg12[%c0_24, %c0_25], %42 {strides = array<i32>} : memref<128x128xf32, #tpu.memory_space<vmem>>, vector<128x128xf32>,
    %c0_26 = arith.constant 0 : index
    %c0_27 = arith.constant 0 : index
    %44 = vector.load %arg10[%c0_26, %c0_27] : memref<128x1xf32, #tpu.memory_space<vmem>>, vector<128x1xf32>
    tpu.vector_store %arg10[%c0_26, %c0_27], %21 {strides = array<i32>} : memref<128x1xf32, #tpu.memory_space<vmem>>, vector<128x1xf32>,
    %c0_i32_28 = arith.constant 0 : i32
    %45 = arith.cmpi eq, %arg1, %c0_i32_28 : i32
    %46 = arith.extui %45 : i1 to i32
    %c0_i32_29 = arith.constant 0 : i32
    %47 = arith.cmpi ne, %46, %c0_i32_29 : i32
    scf.if %47 {
      %c0_30 = arith.constant 0 : index
      %c0_31 = arith.constant 0 : index
      %48 = vector.load %arg11[%c0_30, %c0_31] : memref<128x1xf32, #tpu.memory_space<vmem>>, vector<128x1xf32>
      %cst_32 = arith.constant 1.000000e-30 : f32
      %49 = vector.broadcast %cst_32 : f32 to vector<128x1xf32>
      %50 = arith.maximumf %48, %49 : vector<128x1xf32>
      %51 = tpu.reciprocal %50 {approx = true} : vector<128x1xf32> -> vector<128x1xf32>
      %c0_33 = arith.constant 0 : index
      %c0_34 = arith.constant 0 : index
      %52 = vector.load %arg12[%c0_33, %c0_34] : memref<128x128xf32, #tpu.memory_space<vmem>>, vector<128x128xf32>
      %53 = vector.broadcast %51 : vector<128x1xf32> to vector<128x128xf32>
      %54 = arith.mulf %52, %53 : vector<128x128xf32>
      %cst_35 = arith.constant 0.000000e+00 : f32
      %55 = vector.broadcast %cst_35 : f32 to vector<128x128xf32>
      %56 = arith.cmpf ogt, %54, %55 : vector<128x128xf32>
      %57 = math.exp %54 : vector<128x128xf32>
      %cst_36 = arith.constant 1.000000e+00 : f32
      %58 = vector.broadcast %cst_36 : f32 to vector<128x128xf32>
      %59 = arith.subf %57, %58 : vector<128x128xf32>
      %60 = arith.select %56, %54, %59 : vector<128x128xi1>, vector<128x128xf32>
      %61 = arith.truncf %60 : vector<128x128xf32> to vector<128x128xbf16>
      %c0_37 = arith.constant 0 : index
      %c0_38 = arith.constant 0 : index
      %62 = vector.load %arg6[%c0_37, %c0_38] : memref<128x128xbf16, #tpu.memory_space<vmem>>, vector<128x128xbf16>
      %cst_39 = arith.constant dense<0.000000e+00> : vector<128x128xf32>
      %63 = tpu.matmul %61, %62, %cst_39 {dimension_numbers = #tpu.dot_dimension_numbers<[1], [0], [0], [1], [0, 0, 1, 1], [], []>} : vector<128x128xbf16>, vector<128x128xbf16>, vector<128x128xf32> -> vector<128x128xf32>
      %64 = arith.truncf %63 : vector<128x128xf32> to vector<128x128xbf16>
      %c0_40 = arith.constant 0 : index
      %c0_41 = arith.constant 0 : index
      %65 = vector.load %arg8[%c0_40, %c0_41] : memref<128x128xbf16, #tpu.memory_space<vmem>>, vector<128x128xbf16>
      tpu.vector_store %arg8[%c0_40, %c0_41], %64 {strides = array<i32>} : memref<128x128xbf16, #tpu.memory_space<vmem>>, vector<128x128xbf16>,
      %c0_42 = arith.constant 0 : index
      %c0_43 = arith.constant 0 : index
      %66 = vector.load %arg7[%c0_42, %c0_43] : memref<128x2xf32, #tpu.memory_space<vmem>>, vector<128x2xf32>
      %cst_44 = arith.constant dense<0.000000e+00> : vector<128x2xf32>
      %67 = tpu.matmul %63, %66, %cst_44 {dimension_numbers = #tpu.dot_dimension_numbers<[1], [0], [0], [1], [0, 0, 1, 1], [], []>} : vector<128x128xf32>, vector<128x2xf32>, vector<128x2xf32> -> vector<128x2xf32>
      %c0_45 = arith.constant 0 : index
      %c0_46 = arith.constant 0 : index
      %68 = vector.load %arg9[%c0_45, %c0_46] : memref<128x2xf32, #tpu.memory_space<vmem>>, vector<128x2xf32>
      tpu.vector_store %arg9[%c0_45, %c0_46], %67 {strides = array<i32>} : memref<128x2xf32, #tpu.memory_space<vmem>>, vector<128x2xf32>,
    } else {
    }
    return
  }
  func.func @transform_0(%arg0: i32, %arg1: i32) -> (i32, i32) {
    %c0_i32 = arith.constant 0 : i32
    %c0_i32_0 = arith.constant 0 : i32
    return %arg0, %c0_i32 : i32, i32
  }
  func.func @transform_1(%arg0: i32, %arg1: i32) -> (i32, i32) {
    %c0_i32 = arith.constant 0 : i32
    %c0_i32_0 = arith.constant 0 : i32
    return %c0_i32, %arg1 : i32, i32
  }
  func.func @transform_2(%arg0: i32, %arg1: i32) -> (i32, i32) {
    %c0_i32 = arith.constant 0 : i32
    return %arg0, %arg1 : i32, i32
  }
  func.func @transform_3(%arg0: i32, %arg1: i32) -> (i32, i32) {
    %c0_i32 = arith.constant 0 : i32
    %c0_i32_0 = arith.constant 0 : i32
    return %arg1, %c0_i32 : i32, i32
  }
  func.func @transform_4(%arg0: i32, %arg1: i32) -> (i32, i32) {
    %c0_i32 = arith.constant 0 : i32
    %c0_i32_0 = arith.constant 0 : i32
    %c0_i32_1 = arith.constant 0 : i32
    return %c0_i32, %c0_i32_0 : i32, i32
  }
  func.func @transform_5(%arg0: i32, %arg1: i32) -> (i32, i32) {
    %c0_i32 = arith.constant 0 : i32
    %c0_i32_0 = arith.constant 0 : i32
    %c0_i32_1 = arith.constant 0 : i32
    return %c0_i32, %c0_i32_0 : i32, i32
  }
  func.func @transform_6(%arg0: i32, %arg1: i32) -> (i32, i32) {
    %c0_i32 = arith.constant 0 : i32
    %c0_i32_0 = arith.constant 0 : i32
    return %arg0, %c0_i32 : i32, i32
  }
  func.func @transform_7(%arg0: i32, %arg1: i32) -> (i32, i32) {
    %c0_i32 = arith.constant 0 : i32
    %c0_i32_0 = arith.constant 0 : i32
    return %arg0, %c0_i32 : i32, i32
  }
}

</mosaic_0001>

<llo_original>
// kernel: gat_forward.3
$region0: #{gat_forward.3}
  #allocation0 [shape = 'u32[]', space=smem, size = 0x4, offset = 0x4, fixed_abs, tag = 'smem constant byte address 0x4 - core index']
  #allocation1 [shape = 'u32[144,128]{1,0:T(1,128)}', space=vmem, size = 0x12000, scoped, tag = 'internal scratch']
  %s0 = inlined_call_operand.vmem [shape: bf16[128,32], index: 0, kind: input, shape index: {}]
  %s1 = inlined_call_operand.vmem [shape: bf16[32,128], index: 1, kind: input, shape index: {}]
  %s2 = inlined_call_operand.vmem [shape: f32[128,2], index: 2, kind: input, shape index: {}]
  %s3 = inlined_call_operand.vmem [shape: bf16[128,128], index: 3, kind: output, shape index: {0}]
  %s4 = inlined_call_operand.vmem [shape: f32[128,2], index: 4, kind: output, shape index: {1}]
  %5 = xla_tuple %s3, %s4
  %s6 = sld [smem:[#allocation0]]
  $region30: #{gat_forward.3} parent=0
    _
  %s8 = ssub.s32 1, %s6
  %s9 = scalar_select 0, %s8, %s6
  // Predicated region
  $region2: #{gat_forward.3} parent=0 // pred_check
    _
  $region3: #{gat_forward.3} parent=0 // pred_check_branch
    %11 = sbr.rel (0) target = $region5
  $region4: #{gat_forward.3} parent=0 // pred_region
    _
  $region5: #{gat_forward.3} parent=0 // pred_fallthru
    _
  // Predicated region
  $region6: #{gat_forward.3} parent=0 // pred_check
    _
  $region7: #{gat_forward.3} parent=0 // pred_check_branch
    %13 = sbr.rel (0) target = $region9
  $region8: #{gat_forward.3} parent=0 // pred_region
    _
  $region9: #{gat_forward.3} parent=0 // pred_fallthru
    _
  // Predicated region
  $region10: #{gat_forward.3} parent=0 // pred_check
    _
  $region11: #{gat_forward.3} parent=0 // pred_check_branch
    %15 = sbr.rel (0) target = $region13
  $region12: #{gat_forward.3} parent=0 // pred_region
    _
  $region13: #{gat_forward.3} parent=0 // pred_fallthru
    _
  %v17 = vld [vmem:[%s0] sm:$0xf]
  %v18 = vld [vmem:[%s0 + $0x4] sm:$0xf]
  %v19 = vld [vmem:[%s0 + $0x8] sm:$0xf]
  %v20 = vld [vmem:[%s0 + $0xc] sm:$0xf]
  %v21 = vld [vmem:[%s0 + $0x10] sm:$0xf]
  %v22 = vld [vmem:[%s0 + $0x14] sm:$0xf]
  %v23 = vld [vmem:[%s0 + $0x18] sm:$0xf]
  %v24 = vld [vmem:[%s0 + $0x1c] sm:$0xf]
  %v25 = vld [vmem:[%s0 + $0x20] sm:$0xf]
  %v26 = vld [vmem:[%s0 + $0x24] sm:$0xf]
  %v27 = vld [vmem:[%s0 + $0x28] sm:$0xf]
  %v28 = vld [vmem:[%s0 + $0x2c] sm:$0xf]
  %v29 = vld [vmem:[%s0 + $0x30] sm:$0xf]
  %v30 = vld [vmem:[%s0 + $0x34] sm:$0xf]
  %v31 = vld [vmem:[%s0 + $0x38] sm:$0xf]
  %v32 = vld [vmem:[%s0 + $0x3c] sm:$0xf]
  %v33 = vld [vmem:[%s1] sm:$0xf]
  %v34 = vld [vmem:[%s1 + $0x4] sm:$0xf]
  %v35 = vld [vmem:[%s1 + $0x8] sm:$0xf]
  %v36 = vld [vmem:[%s1 + $0xc] sm:$0xf]
  %v53 = vunpack.c.l.b16 %v17
  %v54 = vunpack.c.l.b16 %v18
  %v55 = vunpack.c.l.b16 %v19
  %v56 = vunpack.c.l.b16 %v20
  %v57 = vunpack.c.l.b16 %v21
  %v58 = vunpack.c.l.b16 %v22
  %v59 = vunpack.c.l.b16 %v23
  %v60 = vunpack.c.l.b16 %v24
  %v61 = vunpack.c.l.b16 %v25
  %v62 = vunpack.c.l.b16 %v26
  %v63 = vunpack.c.l.b16 %v27
  %v64 = vunpack.c.l.b16 %v28
  %v65 = vunpack.c.l.b16 %v29
  %v66 = vunpack.c.l.b16 %v30
  %v67 = vunpack.c.l.b16 %v31
  %v68 = vunpack.c.l.b16 %v32
  %v69 = vpack.c.b16 %v54, %v53
  %v70 = vpack.c.b16 %v56, %v55
  %v71 = vpack.c.b16 %v58, %v57
  %v72 = vpack.c.b16 %v60, %v59
  %v73 = vpack.c.b16 %v62, %v61
  %v74 = vpack.c.b16 %v64, %v63
  %v75 = vpack.c.b16 %v66, %v65
  %v76 = vpack.c.b16 %v68, %v67
  %v81 = vunpack.c.l.b16 %v33
  %v82 = vunpack.c.l.b16 %v34
  %v83 = vunpack.c.l.b16 %v35
  %v84 = vunpack.c.l.b16 %v36
  %v85 = vpack.c.b16 %v82, %v81
  %v86 = vpack.c.b16 %v84, %v83
  %vm89 = vcmask 261120
  %v91 = vsel %vm89, %v69, 0
  %v94 = vsel %vm89, %v70, 0
  %v97 = vsel %vm89, %v71, 0
  %v100 = vsel %vm89, %v72, 0
  %v103 = vsel %vm89, %v73, 0
  %v106 = vsel %vm89, %v74, 0
  %v109 = vsel %vm89, %v75, 0
  %v112 = vsel %vm89, %v76, 0
  %114 = vmatprep.subr.bf16.mxu0 0
  %115 = vmatpush1.bf16.msra.mxu0 %v85
  %116 = vmatprep.subr.bf16.mxu0 0
  %117 = vmatpush1.bf16.msra.mxu0 %v86
  %118 = vmatprep.subr.bf16.mxu0 0
  %119 = vmatpush1.bf16.msra.mxu0 0
  %120 = vmatprep.subr.bf16.mxu0 0
  %121 = vmatpush1.bf16.msra.mxu0 0
  %122 = vmatprep.subr.bf16.mxu0 0
  %123 = vmatpush1.bf16.msra.mxu0 0
  %124 = vmatprep.subr.bf16.mxu0 0
  %125 = vmatpush1.bf16.msra.mxu0 0
  %126 = vmatprep.subr.bf16.mxu0 0
  %127 = vmatpush1.bf16.msra.mxu0 0
  %128 = vmatprep.subr.bf16.mxu0 0
  %129 = vmatpush1.bf16.msra.mxu0 0
  %130 = vmatprep.subr.bf16.mxu0 0
  %131 = vmatpush1.bf16.msra.mxu0 0
  %132 = vmatprep.subr.bf16.mxu0 0
  %133 = vmatpush1.bf16.msra.mxu0 0
  %134 = vmatprep.subr.bf16.mxu0 0
  %135 = vmatpush1.bf16.msra.mxu0 0
  %136 = vmatprep.subr.bf16.mxu0 0
  %137 = vmatpush1.bf16.msra.mxu0 0
  %138 = vmatprep.subr.bf16.mxu0 0
  %139 = vmatpush1.bf16.msra.mxu0 0
  %140 = vmatprep.subr.bf16.mxu0 0
  %141 = vmatpush1.bf16.msra.mxu0 0
  %142 = vmatprep.subr.bf16.mxu0 0
  %143 = vmatpush1.bf16.msra.mxu0 0
  %144 = vmatprep.subr.bf16.mxu0 0
  %145 = vmatpush1.bf16.msra.mxu0 0
  %146 = vmatprep.mubr.bf16.mxu0 0
  %147 = vmatmul.mubr.bf16.gmra.mrb[0].mxu0 %v91
  %v148 = vpop.f32.mrb[0].mxu0
  %v149 = vadd.f32 0.0, %v148
  %v150 = vpop.f32.mrb[0].mxu0
  %v151 = vpop.f32.mrb[0].mxu0
  %v152 = vadd.f32 0.0, %v151
  %v153 = vpop.f32.mrb[0].mxu0
  %154 = vmatprep.mubr.bf16.mxu0 0
  %155 = vmatmul.mubr.bf16.gmra.mrb[0].mxu0 %v94
  %v156 = vpop.f32.mrb[0].mxu0
  %v157 = vadd.f32 0.0, %v156
  %v158 = vpop.f32.mrb[0].mxu0
  %v159 = vpop.f32.mrb[0].mxu0
  %v160 = vadd.f32 0.0, %v159
  %v161 = vpop.f32.mrb[0].mxu0
  %162 = vmatprep.mubr.bf16.mxu0 0
  %163 = vmatmul.mubr.bf16.gmra.mrb[0].mxu0 %v97
  %v164 = vpop.f32.mrb[0].mxu0
  %v165 = vadd.f32 0.0, %v164
  %v166 = vpop.f32.mrb[0].mxu0
  %v167 = vpop.f32.mrb[0].mxu0
  %v168 = vadd.f32 0.0, %v167
  %v169 = vpop.f32.mrb[0].mxu0
  %170 = vmatprep.mubr.bf16.mxu0 0
  %171 = vmatmul.mubr.bf16.gmra.mrb[0].mxu0 %v100
  %v172 = vpop.f32.mrb[0].mxu0
  %v173 = vadd.f32 0.0, %v172
  %v174 = vpop.f32.mrb[0].mxu0
  %v175 = vpop.f32.mrb[0].mxu0
  %v176 = vadd.f32 0.0, %v175
  %v177 = vpop.f32.mrb[0].mxu0
  %178 = vmatprep.mubr.bf16.mxu0 0
  %179 = vmatmul.mubr.bf16.gmra.mrb[0].mxu0 %v103
  %v180 = vpop.f32.mrb[0].mxu0
  %v181 = vadd.f32 0.0, %v180
  %v182 = vpop.f32.mrb[0].mxu0
  %v183 = vpop.f32.mrb[0].mxu0
  %v184 = vadd.f32 0.0, %v183
  %v185 = vpop.f32.mrb[0].mxu0
  %186 = vmatprep.mubr.bf16.mxu0 0
  %187 = vmatmul.mubr.bf16.gmra.mrb[0].mxu0 %v106
  %v188 = vpop.f32.mrb[0].mxu0
  %v189 = vadd.f32 0.0, %v188
  %v190 = vpop.f32.mrb[0].mxu0
  %v191 = vpop.f32.mrb[0].mxu0
  %v192 = vadd.f32 0.0, %v191
  %v193 = vpop.f32.mrb[0].mxu0
  %194 = vmatprep.mubr.bf16.mxu0 0
  %195 = vmatmul.mubr.bf16.gmra.mrb[0].mxu0 %v109
  %v196 = vpop.f32.mrb[0].mxu0
  %v197 = vadd.f32 0.0, %v196
  %v198 = vpop.f32.mrb[0].mxu0
  %v199 = vpop.f32.mrb[0].mxu0
  %v200 = vadd.f32 0.0, %v199
  %v201 = vpop.f32.mrb[0].mxu0
  %202 = vmatprep.mubr.bf16.mxu0 0
  %203 = vmatmul.mubr.bf16.gmra.mrb[0].mxu0 %v112
  %v204 = vpop.f32.mrb[0].mxu0
  %v205 = vadd.f32 0.0, %v204
  %v206 = vpop.f32.mrb[0].mxu0
  %v207 = vpop.f32.mrb[0].mxu0
  %v208 = vadd.f32 0.0, %v207
  %v209 = vpop.f32.mrb[0].mxu0
  %210 = vdwg.mxu0
  %v211 = vpack.c.bf16 %v152, %v149
  %v212 = vpack.c.bf16 %v160, %v157
  %v213 = vpack.c.bf16 %v168, %v165
  %v214 = vpack.c.bf16 %v176, %v173
  %v215 = vpack.c.bf16 %v184, %v181
  %v216 = vpack.c.bf16 %v192, %v189
  %v217 = vpack.c.bf16 %v200, %v197
  %v218 = vpack.c.bf16 %v208, %v205
  %v227 = vunpack.c.l.b16 %v211
  %v228 = vunpack.c.h.b16 %v211
  %v229 = vunpack.c.l.b16 %v212
  %v230 = vunpack.c.h.b16 %v212
  %v231 = vunpack.c.l.b16 %v213
  %v232 = vunpack.c.h.b16 %v213
  %v233 = vunpack.c.l.b16 %v214
  %v234 = vunpack.c.h.b16 %v214
  %v235 = vunpack.c.l.b16 %v215
  %v236 = vunpack.c.h.b16 %v215
  %v237 = vunpack.c.l.b16 %v216
  %v238 = vunpack.c.h.b16 %v216
  %v239 = vunpack.c.l.b16 %v217
  %v240 = vunpack.c.h.b16 %v217
  %v241 = vunpack.c.l.b16 %v218
  %v242 = vunpack.c.h.b16 %v218
  %v243 = vpack.c.b16 %v227, %v227
  %v244 = vpack.c.b16 %v228, %v228
  %v245 = vpack.c.b16 %v229, %v229
  %v246 = vpack.c.b16 %v230, %v230
  %v247 = vpack.c.b16 %v231, %v231
  %v248 = vpack.c.b16 %v232, %v232
  %v249 = vpack.c.b16 %v233, %v233
  %v250 = vpack.c.b16 %v234, %v234
  %v251 = vpack.c.b16 %v235, %v235
  %v252 = vpack.c.b16 %v236, %v236
  %v253 = vpack.c.b16 %v237, %v237
  %v254 = vpack.c.b16 %v238, %v238
  %v255 = vpack.c.b16 %v239, %v239
  %v256 = vpack.c.b16 %v240, %v240
  %v257 = vpack.c.b16 %v241, %v241
  %v258 = vpack.c.b16 %v242, %v242
  %275 = vst [vmem:[%s3] sm:$0xf] %v243
  %276 = vst [vmem:[%s3 + $0x4] sm:$0xf] %v244
  %277 = vst [vmem:[%s3 + $0x8] sm:$0xf] %v245
  %278 = vst [vmem:[%s3 + $0xc] sm:$0xf] %v246
  %279 = vst [vmem:[%s3 + $0x10] sm:$0xf] %v247
  %280 = vst [vmem:[%s3 + $0x14] sm:$0xf] %v248
  %281 = vst [vmem:[%s3 + $0x18] sm:$0xf] %v249
  %282 = vst [vmem:[%s3 + $0x1c] sm:$0xf] %v250
  %283 = vst [vmem:[%s3 + $0x20] sm:$0xf] %v251
  %284 = vst [vmem:[%s3 + $0x24] sm:$0xf] %v252
  %285 = vst [vmem:[%s3 + $0x28] sm:$0xf] %v253
  %286 = vst [vmem:[%s3 + $0x2c] sm:$0xf] %v254
  %287 = vst [vmem:[%s3 + $0x30] sm:$0xf] %v255
  %288 = vst [vmem:[%s3 + $0x34] sm:$0xf] %v256
  %289 = vst [vmem:[%s3 + $0x38] sm:$0xf] %v257
  %290 = vst [vmem:[%s3 + $0x3c] sm:$0xf] %v258
  %v291 = vld [vmem:[%s2] sm:$0xff]
  %v292 = vld [vmem:[%s2 + $0x8] sm:$0xff]
  %v293 = vld [vmem:[%s2 + $0x10] sm:$0xff]
  %v294 = vld [vmem:[%s2 + $0x18] sm:$0xff]
  %v295 = vld [vmem:[%s2 + $0x20] sm:$0xff]
  %v296 = vld [vmem:[%s2 + $0x28] sm:$0xff]
  %v297 = vld [vmem:[%s2 + $0x30] sm:$0xff]
  %v298 = vld [vmem:[%s2 + $0x38] sm:$0xff]
  %v299 = vld [vmem:[%s2 + $0x40] sm:$0xff]
  %v300 = vld [vmem:[%s2 + $0x48] sm:$0xff]
  %v301 = vld [vmem:[%s2 + $0x50] sm:$0xff]
  %v302 = vld [vmem:[%s2 + $0x58] sm:$0xff]
  %v303 = vld [vmem:[%s2 + $0x60] sm:$0xff]
  %v304 = vld [vmem:[%s2 + $0x68] sm:$0xff]
  %v305 = vld [vmem:[%s2 + $0x70] sm:$0xff]
  %v306 = vld [vmem:[%s2 + $0x78] sm:$0xff]
  %307 = vmatprep.subr.mxu0 0.0
  %308 = vmatpush1.msra.mxu0 %v291
  %309 = vmatprep.subr.mxu0 0.0
  %310 = vmatpush1.msra.mxu0 %v292
  %311 = vmatprep.subr.mxu0 0.0
  %312 = vmatpush1.msra.mxu0 %v293
  %313 = vmatprep.subr.mxu0 0.0
  %314 = vmatpush1.msra.mxu0 %v294
  %315 = vmatprep.subr.mxu0 0.0
  %316 = vmatpush1.msra.mxu0 %v295
  %317 = vmatprep.subr.mxu0 0.0
  %318 = vmatpush1.msra.mxu0 %v296
  %319 = vmatprep.subr.mxu0 0.0
  %320 = vmatpush1.msra.mxu0 %v297
  %321 = vmatprep.subr.mxu0 0.0
  %322 = vmatpush1.msra.mxu0 %v298
  %323 = vmatprep.subr.mxu0 0.0
  %324 = vmatpush1.msra.mxu0 %v299
  %325 = vmatprep.subr.mxu0 0.0
  %326 = vmatpush1.msra.mxu0 %v300
  %327 = vmatprep.subr.mxu0 0.0
  %328 = vmatpush1.msra.mxu0 %v301
  %329 = vmatprep.subr.mxu0 0.0
  %330 = vmatpush1.msra.mxu0 %v302
  %331 = vmatprep.subr.mxu0 0.0
  %332 = vmatpush1.msra.mxu0 %v303
  %333 = vmatprep.subr.mxu0 0.0
  %334 = vmatpush1.msra.mxu0 %v304
  %335 = vmatprep.subr.mxu0 0.0
  %336 = vmatpush1.msra.mxu0 %v305
  %337 = vmatprep.subr.mxu0 0.0
  %338 = vmatpush1.msra.mxu0 %v306
  %339 = vmatprep.subr.mxu0 0.0
  %340 = vmatpush1.msra.mxu0 0.0
  %341 = vmatprep.subr.mxu0 0.0
  %342 = vmatpush1.msra.mxu0 0.0
  %343 = vmatprep.subr.mxu0 0.0
  %344 = vmatpush1.msra.mxu0 0.0
  %345 = vmatprep.subr.mxu0 0.0
  %346 = vmatpush1.msra.mxu0 0.0
  %347 = vmatprep.subr.mxu0 0.0
  %348 = vmatpush1.msra.mxu0 0.0
  %349 = vmatprep.subr.mxu0 0.0
  %350 = vmatpush1.msra.mxu0 0.0
  %351 = vmatprep.subr.mxu0 0.0
  %352 = vmatpush1.msra.mxu0 0.0
  %353 = vmatprep.subr.mxu0 0.0
  %354 = vmatpush1.msra.mxu0 0.0
  %355 = vmatprep.subr.mxu0 0.0
  %356 = vmatpush1.msra.mxu0 0.0
  %357 = vmatprep.subr.mxu0 0.0
  %358 = vmatpush1.msra.mxu0 0.0
  %359 = vmatprep.subr.mxu0 0.0
  %360 = vmatpush1.msra.mxu0 0.0
  %361 = vmatprep.subr.mxu0 0.0
  %362 = vmatpush1.msra.mxu0 0.0
  %363 = vmatprep.subr.mxu0 0.0
  %364 = vmatpush1.msra.mxu0 0.0
  %365 = vmatprep.subr.mxu0 0.0
  %366 = vmatpush1.msra.mxu0 0.0
  %367 = vmatprep.subr.mxu0 0.0
  %368 = vmatpush1.msra.mxu0 0.0
  %369 = vmatprep.subr.mxu0 0.0
  %370 = vmatpush1.msra.mxu0 0.0
  %371 = vmatprep.mubr.f32.mxu0 0.0
  %372 = vmatmul.mubr.f32.gmra.mrb[0].mxu0 %v149
  %v373 = vpop.f32.mrb[0].mxu0
  %v374 = vadd.f32 0.0, %v373
  %v375 = vpop.f32.mrb[0].mxu0
  %376 = vmatprep.mubr.f32.mxu0 0.0
  %377 = vmatmul.mubr.f32.gmra.mrb[0].mxu0 %v152
  %v378 = vpop.f32.mrb[0].mxu0
  %v379 = vadd.f32 0.0, %v378
  %v380 = vpop.f32.mrb[0].mxu0
  %381 = vmatprep.mubr.f32.mxu0 0.0
  %382 = vmatmul.mubr.f32.gmra.mrb[0].mxu0 %v157
  %v383 = vpop.f32.mrb[0].mxu0
  %v384 = vadd.f32 0.0, %v383
  %v385 = vpop.f32.mrb[0].mxu0
  %386 = vmatprep.mubr.f32.mxu0 0.0
  %387 = vmatmul.mubr.f32.gmra.mrb[0].mxu0 %v160
  %v388 = vpop.f32.mrb[0].mxu0
  %v389 = vadd.f32 0.0, %v388
  %v390 = vpop.f32.mrb[0].mxu0
  %391 = vmatprep.mubr.f32.mxu0 0.0
  %392 = vmatmul.mubr.f32.gmra.mrb[0].mxu0 %v165
  %v393 = vpop.f32.mrb[0].mxu0
  %v394 = vadd.f32 0.0, %v393
  %v395 = vpop.f32.mrb[0].mxu0
  %396 = vmatprep.mubr.f32.mxu0 0.0
  %397 = vmatmul.mubr.f32.gmra.mrb[0].mxu0 %v168
  %v398 = vpop.f32.mrb[0].mxu0
  %v399 = vadd.f32 0.0, %v398
  %v400 = vpop.f32.mrb[0].mxu0
  %401 = vmatprep.mubr.f32.mxu0 0.0
  %402 = vmatmul.mubr.f32.gmra.mrb[0].mxu0 %v173
  %v403 = vpop.f32.mrb[0].mxu0
  %v404 = vadd.f32 0.0, %v403
  %v405 = vpop.f32.mrb[0].mxu0
  %406 = vmatprep.mubr.f32.mxu0 0.0
  %407 = vmatmul.mubr.f32.gmra.mrb[0].mxu0 %v176
  %v408 = vpop.f32.mrb[0].mxu0
  %v409 = vadd.f32 0.0, %v408
  %v410 = vpop.f32.mrb[0].mxu0
  %411 = vmatprep.mubr.f32.mxu0 0.0
  %412 = vmatmul.mubr.f32.gmra.mrb[0].mxu0 %v181
  %v413 = vpop.f32.mrb[0].mxu0
  %v414 = vadd.f32 0.0, %v413
  %v415 = vpop.f32.mrb[0].mxu0
  %416 = vmatprep.mubr.f32.mxu0 0.0
  %417 = vmatmul.mubr.f32.gmra.mrb[0].mxu0 %v184
  %v418 = vpop.f32.mrb[0].mxu0
  %v419 = vadd.f32 0.0, %v418
  %v420 = vpop.f32.mrb[0].mxu0
  %421 = vmatprep.mubr.f32.mxu0 0.0
  %422 = vmatmul.mubr.f32.gmra.mrb[0].mxu0 %v189
  %v423 = vpop.f32.mrb[0].mxu0
  %v424 = vadd.f32 0.0, %v423
  %v425 = vpop.f32.mrb[0].mxu0
  %426 = vmatprep.mubr.f32.mxu0 0.0
  %427 = vmatmul.mubr.f32.gmra.mrb[0].mxu0 %v192
  %v428 = vpop.f32.mrb[0].mxu0
  %v429 = vadd.f32 0.0, %v428
  %v430 = vpop.f32.mrb[0].mxu0
  %431 = vmatprep.mubr.f32.mxu0 0.0
  %432 = vmatmul.mubr.f32.gmra.mrb[0].mxu0 %v197
  %v433 = vpop.f32.mrb[0].mxu0
  %v434 = vadd.f32 0.0, %v433
  %v435 = vpop.f32.mrb[0].mxu0
  %436 = vmatprep.mubr.f32.mxu0 0.0
  %437 = vmatmul.mubr.f32.gmra.mrb[0].mxu0 %v200
  %v438 = vpop.f32.mrb[0].mxu0
  %v439 = vadd.f32 0.0, %v438
  %v440 = vpop.f32.mrb[0].mxu0
  %441 = vmatprep.mubr.f32.mxu0 0.0
  %442 = vmatmul.mubr.f32.gmra.mrb[0].mxu0 %v205
  %v443 = vpop.f32.mrb[0].mxu0
  %v444 = vadd.f32 0.0, %v443
  %v445 = vpop.f32.mrb[0].mxu0
  %446 = vmatprep.mubr.f32.mxu0 0.0
  %447 = vmatmul.mubr.f32.gmra.mrb[0].mxu0 %v208
  %v448 = vpop.f32.mrb[0].mxu0
  %v449 = vadd.f32 0.0, %v448
  %v450 = vpop.f32.mrb[0].mxu0
  %451 = vdwg.mxu0
  %vm452 = vcmask 15360
  %453 = vst.msk [vmem:[%s4] sm:$0xff] %vm452, %v374
  %454 = vst.msk [vmem:[%s4 + $0x8] sm:$0xff] %vm452, %v379
  %455 = vst.msk [vmem:[%s4 + $0x10] sm:$0xff] %vm452, %v384
  %456 = vst.msk [vmem:[%s4 + $0x18] sm:$0xff] %vm452, %v389
  %457 = vst.msk [vmem:[%s4 + $0x20] sm:$0xff] %vm452, %v394
  %458 = vst.msk [vmem:[%s4 + $0x28] sm:$0xff] %vm452, %v399
  %459 = vst.msk [vmem:[%s4 + $0x30] sm:$0xff] %vm452, %v404
  %460 = vst.msk [vmem:[%s4 + $0x38] sm:$0xff] %vm452, %v409
  %461 = vst.msk [vmem:[%s4 + $0x40] sm:$0xff] %vm452, %v414
  %462 = vst.msk [vmem:[%s4 + $0x48] sm:$0xff] %vm452, %v419
  %463 = vst.msk [vmem:[%s4 + $0x50] sm:$0xff] %vm452, %v424
  %464 = vst.msk [vmem:[%s4 + $0x58] sm:$0xff] %vm452, %v429
  %465 = vst.msk [vmem:[%s4 + $0x60] sm:$0xff] %vm452, %v434
  %466 = vst.msk [vmem:[%s4 + $0x68] sm:$0xff] %vm452, %v439
  %467 = vst.msk [vmem:[%s4 + $0x70] sm:$0xff] %vm452, %v444
  %468 = vst.msk [vmem:[%s4 + $0x78] sm:$0xff] %vm452, %v449
  // Predicated region
  $region14: #{gat_forward.3} parent=0 // pred_check
    _
  $region15: #{gat_forward.3} parent=0 // pred_check_branch
    %470 = sbr.rel (0) target = $region17
  $region16: #{gat_forward.3} parent=0 // pred_region
    _
  $region17: #{gat_forward.3} parent=0 // pred_fallthru
    _
  // Predicated region
  $region18: #{gat_forward.3} parent=0 // pred_check
    _
  $region19: #{gat_forward.3} parent=0 // pred_check_branch
    %472 = sbr.rel (0) target = $region21
  $region20: #{gat_forward.3} parent=0 // pred_region
    _
  $region21: #{gat_forward.3} parent=0 // pred_fallthru
    _
  // Predicated region
  $region22: #{gat_forward.3} parent=0 // pred_check
    _
  $region23: #{gat_forward.3} parent=0 // pred_check_branch
    %474 = sbr.rel (0) target = $region25
  $region24: #{gat_forward.3} parent=0 // pred_region
    _
  $region25: #{gat_forward.3} parent=0 // pred_fallthru
    _
  // Predicated region
  $region26: #{gat_forward.3} parent=0 // pred_check
    _
  $region27: #{gat_forward.3} parent=0 // pred_check_branch
    %476 = sbr.rel (0) target = $region29
  $region28: #{gat_forward.3} parent=0 // pred_region
    _
  $region29: #{gat_forward.3} parent=0 // pred_fallthru
    _

// kernel: gat_forward.5
$region0: #{gat_forward.5}
  #allocation0 [shape = 'u32[]', space=smem, size = 0x4, offset = 0x4, fixed_abs, tag = 'smem constant byte address 0x4 - core index']
  #allocation1 [shape = 'u32[144,128]{1,0:T(1,128)}', space=vmem, size = 0x12000, scoped, tag = 'internal scratch']
  #allocation2 [shape = 'f32[128,1]{1,0:T(8,128)}', space=vmem, size = 0x10000, scoped, tag = 'scratch operand']
  #allocation3 [shape = 'f32[128,1]{1,0:T(8,128)}', space=vmem, size = 0x10000, scoped, tag = 'scratch operand']
  #allocation4 [shape = 'f32[128,128]{1,0:T(8,128)}', space=vmem, size = 0x10000, scoped, tag = 'scratch operand']
  %s0 = inlined_call_operand.vmem [shape: f32[128,1], index: 0, kind: input, shape index: {}]
  %s1 = inlined_call_operand.vmem [shape: f32[1,128], index: 1, kind: input, shape index: {}]
  %s2 = inlined_call_operand.vmem [shape: s8[128,128], index: 2, kind: input, shape index: {}]
  %s3 = inlined_call_operand.vmem [shape: bf16[128,128], index: 3, kind: input, shape index: {}]
  %s4 = inlined_call_operand.vmem [shape: f32[128,128], index: 4, kind: output, shape index: {}]
  %s5 = sld [smem:[#allocation0]]
  $region34: #{gat_forward.5} parent=0
    _
  %s7 = ssub.s32 1, %s5
  %s8 = scalar_select 0, %s7, %s5
  // Predicated region
  $region2: #{gat_forward.5} parent=0 // pred_check
    _
  $region3: #{gat_forward.5} parent=0 // pred_check_branch
    %10 = sbr.rel (0) target = $region5
  $region4: #{gat_forward.5} parent=0 // pred_region
    _
  $region5: #{gat_forward.5} parent=0 // pred_fallthru
    _
  // Predicated region
  $region6: #{gat_forward.5} parent=0 // pred_check
    _
  $region7: #{gat_forward.5} parent=0 // pred_check_branch
    %12 = sbr.rel (0) target = $region9
  $region8: #{gat_forward.5} parent=0 // pred_region
    _
  $region9: #{gat_forward.5} parent=0 // pred_fallthru
    _
  // Predicated region
  $region10: #{gat_forward.5} parent=0 // pred_check
    _
  $region11: #{gat_forward.5} parent=0 // pred_check_branch
    %14 = sbr.rel (0) target = $region13
  $region12: #{gat_forward.5} parent=0 // pred_region
    _
  $region13: #{gat_forward.5} parent=0 // pred_fallthru
    _
  // Predicated region
  $region14: #{gat_forward.5} parent=0 // pred_check
    _
  $region15: #{gat_forward.5} parent=0 // pred_check_branch
    %16 = sbr.rel (0) target = $region17
  $region16: #{gat_forward.5} parent=0 // pred_region
    _
  $region17: #{gat_forward.5} parent=0 // pred_fallthru
    _
  %p20 = scmp.eq.s32.totalorder 0, 0
  // Predicated region
  $region18: #{gat_forward.5} parent=0 // pred_check
    %p21 = pneg %p20
  $region19: #{gat_forward.5} parent=0 // pred_check_branch
    %23 = sbr.rel (%p21) target = $region21
  $region20: #{gat_forward.5} parent=0 // pred_region
    %vm24 = vcmask 7168
    %25 = vst.msk [vmem:[#allocation2] sm:$0xff] %vm24, -1e+30
    %26 = vst.msk [vmem:[#allocation2 + $0x8] sm:$0xff] %vm24, -1e+30
    %27 = vst.msk [vmem:[#allocation2 + $0x10] sm:$0xff] %vm24, -1e+30
    %28 = vst.msk [vmem:[#allocation2 + $0x18] sm:$0xff] %vm24, -1e+30
    %29 = vst.msk [vmem:[#allocation2 + $0x20] sm:$0xff] %vm24, -1e+30
    %30 = vst.msk [vmem:[#allocation2 + $0x28] sm:$0xff] %vm24, -1e+30
    %31 = vst.msk [vmem:[#allocation2 + $0x30] sm:$0xff] %vm24, -1e+30
    %32 = vst.msk [vmem:[#allocation2 + $0x38] sm:$0xff] %vm24, -1e+30
    %33 = vst.msk [vmem:[#allocation2 + $0x40] sm:$0xff] %vm24, -1e+30
    %34 = vst.msk [vmem:[#allocation2 + $0x48] sm:$0xff] %vm24, -1e+30
    %35 = vst.msk [vmem:[#allocation2 + $0x50] sm:$0xff] %vm24, -1e+30
    %36 = vst.msk [vmem:[#allocation2 + $0x58] sm:$0xff] %vm24, -1e+30
    %37 = vst.msk [vmem:[#allocation2 + $0x60] sm:$0xff] %vm24, -1e+30
    %38 = vst.msk [vmem:[#allocation2 + $0x68] sm:$0xff] %vm24, -1e+30
    %39 = vst.msk [vmem:[#allocation2 + $0x70] sm:$0xff] %vm24, -1e+30
    %40 = vst.msk [vmem:[#allocation2 + $0x78] sm:$0xff] %vm24, -1e+30
    %41 = vst.msk [vmem:[#allocation3] sm:$0xff] %vm24, 0.0
    %42 = vst.msk [vmem:[#allocation3 + $0x8] sm:$0xff] %vm24, 0.0
    %43 = vst.msk [vmem:[#allocation3 + $0x10] sm:$0xff] %vm24, 0.0
    %44 = vst.msk [vmem:[#allocation3 + $0x18] sm:$0xff] %vm24, 0.0
    %45 = vst.msk [vmem:[#allocation3 + $0x20] sm:$0xff] %vm24, 0.0
    %46 = vst.msk [vmem:[#allocation3 + $0x28] sm:$0xff] %vm24, 0.0
    %47 = vst.msk [vmem:[#allocation3 + $0x30] sm:$0xff] %vm24, 0.0
    %48 = vst.msk [vmem:[#allocation3 + $0x38] sm:$0xff] %vm24, 0.0
    %49 = vst.msk [vmem:[#allocation3 + $0x40] sm:$0xff] %vm24, 0.0
    %50 = vst.msk [vmem:[#allocation3 + $0x48] sm:$0xff] %vm24, 0.0
    %51 = vst.msk [vmem:[#allocation3 + $0x50] sm:$0xff] %vm24, 0.0
    %52 = vst.msk [vmem:[#allocation3 + $0x58] sm:$0xff] %vm24, 0.0
    %53 = vst.msk [vmem:[#allocation3 + $0x60] sm:$0xff] %vm24, 0.0
    %54 = vst.msk [vmem:[#allocation3 + $0x68] sm:$0xff] %vm24, 0.0
    %55 = vst.msk [vmem:[#allocation3 + $0x70] sm:$0xff] %vm24, 0.0
    %56 = vst.msk [vmem:[#allocation3 + $0x78] sm:$0xff] %vm24, 0.0
    %57 = vst [vmem:[#allocation4] sm:$0xff] 0.0
    %58 = vst [vmem:[#allocation4 + $0x8] sm:$0xff] 0.0
    %59 = vst [vmem:[#allocation4 + $0x10] sm:$0xff] 0.0
    %60 = vst [vmem:[#allocation4 + $0x18] sm:$0xff] 0.0
    %61 = vst [vmem:[#allocation4 + $0x20] sm:$0xff] 0.0
    %62 = vst [vmem:[#allocation4 + $0x28] sm:$0xff] 0.0
    %63 = vst [vmem:[#allocation4 + $0x30] sm:$0xff] 0.0
    %64 = vst [vmem:[#allocation4 + $0x38] sm:$0xff] 0.0
    %65 = vst [vmem:[#allocation4 + $0x40] sm:$0xff] 0.0
    %66 = vst [vmem:[#allocation4 + $0x48] sm:$0xff] 0.0
    %67 = vst [vmem:[#allocation4 + $0x50] sm:$0xff] 0.0
    %68 = vst [vmem:[#allocation4 + $0x58] sm:$0xff] 0.0
    %69 = vst [vmem:[#allocation4 + $0x60] sm:$0xff] 0.0
    %70 = vst [vmem:[#allocation4 + $0x68] sm:$0xff] 0.0
    %71 = vst [vmem:[#allocation4 + $0x70] sm:$0xff] 0.0
    %72 = vst [vmem:[#allocation4 + $0x78] sm:$0xff] 0.0
  $region21: #{gat_forward.5} parent=0 // pred_fallthru
    _
  %v73 = vld [vmem:[%s0] sm:$0xff]
  %v74 = vld [vmem:[%s0 + $0x8] sm:$0xff]
  %v75 = vld [vmem:[%s0 + $0x10] sm:$0xff]
  %v76 = vld [vmem:[%s0 + $0x18] sm:$0xff]
  %v77 = vld [vmem:[%s0 + $0x20] sm:$0xff]
  %v78 = vld [vmem:[%s0 + $0x28] sm:$0xff]
  %v79 = vld [vmem:[%s0 + $0x30] sm:$0xff]
  %v80 = vld [vmem:[%s0 + $0x38] sm:$0xff]
  %v81 = vld [vmem:[%s0 + $0x40] sm:$0xff]
  %v82 = vld [vmem:[%s0 + $0x48] sm:$0xff]
  %v83 = vld [vmem:[%s0 + $0x50] sm:$0xff]
  %v84 = vld [vmem:[%s0 + $0x58] sm:$0xff]
  %v85 = vld [vmem:[%s0 + $0x60] sm:$0xff]
  %v86 = vld [vmem:[%s0 + $0x68] sm:$0xff]
  %v87 = vld [vmem:[%s0 + $0x70] sm:$0xff]
  %v88 = vld [vmem:[%s0 + $0x78] sm:$0xff]
  %v89 = vld [vmem:[%s1] sm:$0x1]
  %91 = vset.pattern.permute.xlu0 0
  %92 = vperm.xlu0 %91, %v73
  %v93 = vpop.permute.xlu0 %92
  %96 = vset.pattern.permute.xlu0 0
  %97 = vperm.xlu0 %96, %v74
  %v98 = vpop.permute.xlu0 %97
  %101 = vset.pattern.permute.xlu0 0
  %102 = vperm.xlu0 %101, %v75
  %v103 = vpop.permute.xlu0 %102
  %106 = vset.pattern.permute.xlu0 0
  %107 = vperm.xlu0 %106, %v76
  %v108 = vpop.permute.xlu0 %107
  %111 = vset.pattern.permute.xlu0 0
  %112 = vperm.xlu0 %111, %v77
  %v113 = vpop.permute.xlu0 %112
  %116 = vset.pattern.permute.xlu0 0
  %117 = vperm.xlu0 %116, %v78
  %v118 = vpop.permute.xlu0 %117
  %121 = vset.pattern.permute.xlu0 0
  %122 = vperm.xlu0 %121, %v79
  %v123 = vpop.permute.xlu0 %122
  %126 = vset.pattern.permute.xlu0 0
  %127 = vperm.xlu0 %126, %v80
  %v128 = vpop.permute.xlu0 %127
  %131 = vset.pattern.permute.xlu0 0
  %132 = vperm.xlu0 %131, %v81
  %v133 = vpop.permute.xlu0 %132
  %136 = vset.pattern.permute.xlu0 0
  %137 = vperm.xlu0 %136, %v82
  %v138 = vpop.permute.xlu0 %137
  %141 = vset.pattern.permute.xlu0 0
  %142 = vperm.xlu0 %141, %v83
  %v143 = vpop.permute.xlu0 %142
  %146 = vset.pattern.permute.xlu0 0
  %147 = vperm.xlu0 %146, %v84
  %v148 = vpop.permute.xlu0 %147
  %151 = vset.pattern.permute.xlu0 0
  %152 = vperm.xlu0 %151, %v85
  %v153 = vpop.permute.xlu0 %152
  %156 = vset.pattern.permute.xlu0 0
  %157 = vperm.xlu0 %156, %v86
  %v158 = vpop.permute.xlu0 %157
  %161 = vset.pattern.permute.xlu0 0
  %162 = vperm.xlu0 %161, %v87
  %v163 = vpop.permute.xlu0 %162
  %166 = vset.pattern.permute.xlu0 0
  %167 = vperm.xlu0 %166, %v88
  %v168 = vpop.permute.xlu0 %167
  %v171 = vlaneseq
  %v172 = vshrl.u32 %v171, 7
  %v173 = vsub.s32 0, %v172
  %v174 = vrot.slane %v89, %v173
  %v176 = vadd.f32 %v93, %v174
  %v177 = vadd.f32 %v98, %v174
  %v178 = vadd.f32 %v103, %v174
  %v179 = vadd.f32 %v108, %v174
  %v180 = vadd.f32 %v113, %v174
  %v181 = vadd.f32 %v118, %v174
  %v182 = vadd.f32 %v123, %v174
  %v183 = vadd.f32 %v128, %v174
  %v184 = vadd.f32 %v133, %v174
  %v185 = vadd.f32 %v138, %v174
  %v186 = vadd.f32 %v143, %v174
  %v187 = vadd.f32 %v148, %v174
  %v188 = vadd.f32 %v153, %v174
  %v189 = vadd.f32 %v158, %v174
  %v190 = vadd.f32 %v163, %v174
  %v191 = vadd.f32 %v168, %v174
  %vm192 = vcmp.ge.f32.partialorder %v176, 0.0
  %vm193 = vcmp.ge.f32.partialorder %v177, 0.0
  %vm194 = vcmp.ge.f32.partialorder %v178, 0.0
  %vm195 = vcmp.ge.f32.partialorder %v179, 0.0
  %vm196 = vcmp.ge.f32.partialorder %v180, 0.0
  %vm197 = vcmp.ge.f32.partialorder %v181, 0.0
  %vm198 = vcmp.ge.f32.partialorder %v182, 0.0
  %vm199 = vcmp.ge.f32.partialorder %v183, 0.0
  %vm200 = vcmp.ge.f32.partialorder %v184, 0.0
  %vm201 = vcmp.ge.f32.partialorder %v185, 0.0
  %vm202 = vcmp.ge.f32.partialorder %v186, 0.0
  %vm203 = vcmp.ge.f32.partialorder %v187, 0.0
  %vm204 = vcmp.ge.f32.partialorder %v188, 0.0
  %vm205 = vcmp.ge.f32.partialorder %v189, 0.0
  %vm206 = vcmp.ge.f32.partialorder %v190, 0.0
  %vm207 = vcmp.ge.f32.partialorder %v191, 0.0
  %v208 = vmul.f32 %v176, 0.01
  %v209 = vmul.f32 %v177, 0.01
  %v210 = vmul.f32 %v178, 0.01
  %v211 = vmul.f32 %v179, 0.01
  %v212 = vmul.f32 %v180, 0.01
  %v213 = vmul.f32 %v181, 0.01
  %v214 = vmul.f32 %v182, 0.01
  %v215 = vmul.f32 %v183, 0.01
  %v216 = vmul.f32 %v184, 0.01
  %v217 = vmul.f32 %v185, 0.01
  %v218 = vmul.f32 %v186, 0.01
  %v219 = vmul.f32 %v187, 0.01
  %v220 = vmul.f32 %v188, 0.01
  %v221 = vmul.f32 %v189, 0.01
  %v222 = vmul.f32 %v190, 0.01
  %v223 = vmul.f32 %v191, 0.01
  %v224 = vsel %vm192, %v176, %v208
  %v225 = vsel %vm193, %v177, %v209
  %v226 = vsel %vm194, %v178, %v210
  %v227 = vsel %vm195, %v179, %v211
  %v228 = vsel %vm196, %v180, %v212
  %v229 = vsel %vm197, %v181, %v213
  %v230 = vsel %vm198, %v182, %v214
  %v231 = vsel %vm199, %v183, %v215
  %v232 = vsel %vm200, %v184, %v216
  %v233 = vsel %vm201, %v185, %v217
  %v234 = vsel %vm202, %v186, %v218
  %v235 = vsel %vm203, %v187, %v219
  %v236 = vsel %vm204, %v188, %v220
  %v237 = vsel %vm205, %v189, %v221
  %v238 = vsel %vm206, %v190, %v222
  %v239 = vsel %vm207, %v191, %v223
  %v240 = vld [vmem:[%s2] sm:$0xff]
  %v241 = vld [vmem:[%s2 + $0x8] sm:$0xff]
  %v242 = vld [vmem:[%s2 + $0x10] sm:$0xff]
  %v243 = vld [vmem:[%s2 + $0x18] sm:$0xff]
  %vm244 = vnez %v240
  %vm245 = vnez %v241
  %vm246 = vnez %v242
  %vm247 = vnez %v243
  %v248 = vsel %vm244, 16843009, 0
  %v249 = vsel %vm245, 16843009, 0
  %v250 = vsel %vm246, 16843009, 0
  %v251 = vsel %vm247, 16843009, 0
  %v252 = vunpack.c.0.s8 %v248
  %v253 = vunpack.c.1.s8 %v248
  %v254 = vunpack.c.2.s8 %v248
  %v255 = vunpack.c.3.s8 %v248
  %v256 = vunpack.c.0.s8 %v249
  %v257 = vunpack.c.1.s8 %v249
  %v258 = vunpack.c.2.s8 %v249
  %v259 = vunpack.c.3.s8 %v249
  %v260 = vunpack.c.0.s8 %v250
  %v261 = vunpack.c.1.s8 %v250
  %v262 = vunpack.c.2.s8 %v250
  %v263 = vunpack.c.3.s8 %v250
  %v264 = vunpack.c.0.s8 %v251
  %v265 = vunpack.c.1.s8 %v251
  %v266 = vunpack.c.2.s8 %v251
  %v267 = vunpack.c.3.s8 %v251
  %v268 = vpack.c.b16 %v252, %v252
  %v269 = vpack.c.b8 %v268, %v268
  %v270 = vpack.c.b16 %v253, %v253
  %v271 = vpack.c.b8 %v270, %v270
  %v272 = vpack.c.b16 %v254, %v254
  %v273 = vpack.c.b8 %v272, %v272
  %v274 = vpack.c.b16 %v255, %v255
  %v275 = vpack.c.b8 %v274, %v274
  %v276 = vpack.c.b16 %v256, %v256
  %v277 = vpack.c.b8 %v276, %v276
  %v278 = vpack.c.b16 %v257, %v257
  %v279 = vpack.c.b8 %v278, %v278
  %v280 = vpack.c.b16 %v258, %v258
  %v281 = vpack.c.b8 %v280, %v280
  %v282 = vpack.c.b16 %v259, %v259
  %v283 = vpack.c.b8 %v282, %v282
  %v284 = vpack.c.b16 %v260, %v260
  %v285 = vpack.c.b8 %v284, %v284
  %v286 = vpack.c.b16 %v261, %v261
  %v287 = vpack.c.b8 %v286, %v286
  %v288 = vpack.c.b16 %v262, %v262
  %v289 = vpack.c.b8 %v288, %v288
  %v290 = vpack.c.b16 %v263, %v263
  %v291 = vpack.c.b8 %v290, %v290
  %v292 = vpack.c.b16 %v264, %v264
  %v293 = vpack.c.b8 %v292, %v292
  %v294 = vpack.c.b16 %v265, %v265
  %v295 = vpack.c.b8 %v294, %v294
  %v296 = vpack.c.b16 %v266, %v266
  %v297 = vpack.c.b8 %v296, %v296
  %v298 = vpack.c.b16 %v267, %v267
  %v299 = vpack.c.b8 %v298, %v298
  %vm300 = vnez %v269
  %vm301 = vnez %v271
  %vm302 = vnez %v273
  %vm303 = vnez %v275
  %vm304 = vnez %v277
  %vm305 = vnez %v279
  %vm306 = vnez %v281
  %vm307 = vnez %v283
  %vm308 = vnez %v285
  %vm309 = vnez %v287
  %vm310 = vnez %v289
  %vm311 = vnez %v291
  %vm312 = vnez %v293
  %vm313 = vnez %v295
  %vm314 = vnez %v297
  %vm315 = vnez %v299
  %v316 = vsel %vm300, 16843009, 0
  %v317 = vsel %vm301, 16843009, 0
  %v318 = vsel %vm302, 16843009, 0
  %v319 = vsel %vm303, 16843009, 0
  %v320 = vsel %vm304, 16843009, 0
  %v321 = vsel %vm305, 16843009, 0
  %v322 = vsel %vm306, 16843009, 0
  %v323 = vsel %vm307, 16843009, 0
  %v324 = vsel %vm308, 16843009, 0
  %v325 = vsel %vm309, 16843009, 0
  %v326 = vsel %vm310, 16843009, 0
  %v327 = vsel %vm311, 16843009, 0
  %v328 = vsel %vm312, 16843009, 0
  %v329 = vsel %vm313, 16843009, 0
  %v330 = vsel %vm314, 16843009, 0
  %v331 = vsel %vm315, 16843009, 0
  %v332 = vunpack.c.0.s8 %v316
  %v333 = vunpack.c.0.s8 %v317
  %v334 = vunpack.c.0.s8 %v318
  %v335 = vunpack.c.0.s8 %v319
  %v336 = vunpack.c.0.s8 %v320
  %v337 = vunpack.c.0.s8 %v321
  %v338 = vunpack.c.0.s8 %v322
  %v339 = vunpack.c.0.s8 %v323
  %v340 = vunpack.c.0.s8 %v324
  %v341 = vunpack.c.0.s8 %v325
  %v342 = vunpack.c.0.s8 %v326
  %v343 = vunpack.c.0.s8 %v327
  %v344 = vunpack.c.0.s8 %v328
  %v345 = vunpack.c.0.s8 %v329
  %v346 = vunpack.c.0.s8 %v330
  %v347 = vunpack.c.0.s8 %v331
  %vm348 = vcmp.ne.s32.totalorder %v332, 0
  %vm349 = vcmp.ne.s32.totalorder %v333, 0
  %vm350 = vcmp.ne.s32.totalorder %v334, 0
  %vm351 = vcmp.ne.s32.totalorder %v335, 0
  %vm352 = vcmp.ne.s32.totalorder %v336, 0
  %vm353 = vcmp.ne.s32.totalorder %v337, 0
  %vm354 = vcmp.ne.s32.totalorder %v338, 0
  %vm355 = vcmp.ne.s32.totalorder %v339, 0
  %vm356 = vcmp.ne.s32.totalorder %v340, 0
  %vm357 = vcmp.ne.s32.totalorder %v341, 0
  %vm358 = vcmp.ne.s32.totalorder %v342, 0
  %vm359 = vcmp.ne.s32.totalorder %v343, 0
  %vm360 = vcmp.ne.s32.totalorder %v344, 0
  %vm361 = vcmp.ne.s32.totalorder %v345, 0
  %vm362 = vcmp.ne.s32.totalorder %v346, 0
  %vm363 = vcmp.ne.s32.totalorder %v347, 0
  %v364 = vsel %vm348, %v224, -1e+30
  %v365 = vsel %vm349, %v225, -1e+30
  %v366 = vsel %vm350, %v226, -1e+30
  %v367 = vsel %vm351, %v227, -1e+30
  %v368 = vsel %vm352, %v228, -1e+30
  %v369 = vsel %vm353, %v229, -1e+30
  %v370 = vsel %vm354, %v230, -1e+30
  %v371 = vsel %vm355, %v231, -1e+30
  %v372 = vsel %vm356, %v232, -1e+30
  %v373 = vsel %vm357, %v233, -1e+30
  %v374 = vsel %vm358, %v234, -1e+30
  %v375 = vsel %vm359, %v235, -1e+30
  %v376 = vsel %vm360, %v236, -1e+30
  %v377 = vsel %vm361, %v237, -1e+30
  %v378 = vsel %vm362, %v238, -1e+30
  %v379 = vsel %vm363, %v239, -1e+30
  %v380 = vld [vmem:[#allocation2] sm:$0xff]
  %v381 = vld [vmem:[#allocation2 + $0x8] sm:$0xff]
  %v382 = vld [vmem:[#allocation2 + $0x10] sm:$0xff]
  %v383 = vld [vmem:[#allocation2 + $0x18] sm:$0xff]
  %v384 = vld [vmem:[#allocation2 + $0x20] sm:$0xff]
  %v385 = vld [vmem:[#allocation2 + $0x28] sm:$0xff]
  %v386 = vld [vmem:[#allocation2 + $0x30] sm:$0xff]
  %v387 = vld [vmem:[#allocation2 + $0x38] sm:$0xff]
  %v388 = vld [vmem:[#allocation2 + $0x40] sm:$0xff]
  %v389 = vld [vmem:[#allocation2 + $0x48] sm:$0xff]
  %v390 = vld [vmem:[#allocation2 + $0x50] sm:$0xff]
  %v391 = vld [vmem:[#allocation2 + $0x58] sm:$0xff]
  %v392 = vld [vmem:[#allocation2 + $0x60] sm:$0xff]
  %v393 = vld [vmem:[#allocation2 + $0x68] sm:$0xff]
  %v394 = vld [vmem:[#allocation2 + $0x70] sm:$0xff]
  %v395 = vld [vmem:[#allocation2 + $0x78] sm:$0xff]
  %396 = vmax.xlane.f32.xlu0 %v364
  %v397 = vpop.xlane.xlu0 %396
  %398 = vmax.xlane.f32.xlu0 %v365
  %v399 = vpop.xlane.xlu0 %398
  %400 = vmax.xlane.f32.xlu0 %v366
  %v401 = vpop.xlane.xlu0 %400
  %402 = vmax.xlane.f32.xlu0 %v367
  %v403 = vpop.xlane.xlu0 %402
  %404 = vmax.xlane.f32.xlu0 %v368
  %v405 = vpop.xlane.xlu0 %404
  %406 = vmax.xlane.f32.xlu0 %v369
  %v407 = vpop.xlane.xlu0 %406
  %408 = vmax.xlane.f32.xlu0 %v370
  %v409 = vpop.xlane.xlu0 %408
  %410 = vmax.xlane.f32.xlu0 %v371
  %v411 = vpop.xlane.xlu0 %410
  %412 = vmax.xlane.f32.xlu0 %v372
  %v413 = vpop.xlane.xlu0 %412
  %414 = vmax.xlane.f32.xlu0 %v373
  %v415 = vpop.xlane.xlu0 %414
  %416 = vmax.xlane.f32.xlu0 %v374
  %v417 = vpop.xlane.xlu0 %416
  %418 = vmax.xlane.f32.xlu0 %v375
  %v419 = vpop.xlane.xlu0 %418
  %420 = vmax.xlane.f32.xlu0 %v376
  %v421 = vpop.xlane.xlu0 %420
  %422 = vmax.xlane.f32.xlu0 %v377
  %v423 = vpop.xlane.xlu0 %422
  %424 = vmax.xlane.f32.xlu0 %v378
  %v425 = vpop.xlane.xlu0 %424
  %426 = vmax.xlane.f32.xlu0 %v379
  %v427 = vpop.xlane.xlu0 %426
  %v428 = vmax.f32 %v380, %v397
  %v429 = vmax.f32 %v381, %v399
  %v430 = vmax.f32 %v382, %v401
  %v431 = vmax.f32 %v383, %v403
  %v432 = vmax.f32 %v384, %v405
  %v433 = vmax.f32 %v385, %v407
  %v434 = vmax.f32 %v386, %v409
  %v435 = vmax.f32 %v387, %v411
  %v436 = vmax.f32 %v388, %v413
  %v437 = vmax.f32 %v389, %v415
  %v438 = vmax.f32 %v390, %v417
  %v439 = vmax.f32 %v391, %v419
  %v440 = vmax.f32 %v392, %v421
  %v441 = vmax.f32 %v393, %v423
  %v442 = vmax.f32 %v394, %v425
  %v443 = vmax.f32 %v395, %v427
  %v444 = vsub.f32 %v380, %v428
  %v445 = vsub.f32 %v381, %v429
  %v446 = vsub.f32 %v382, %v430
  %v447 = vsub.f32 %v383, %v431
  %v448 = vsub.f32 %v384, %v432
  %v449 = vsub.f32 %v385, %v433
  %v450 = vsub.f32 %v386, %v434
  %v451 = vsub.f32 %v387, %v435
  %v452 = vsub.f32 %v388, %v436
  %v453 = vsub.f32 %v389, %v437
  %v454 = vsub.f32 %v390, %v438
  %v455 = vsub.f32 %v391, %v439
  %v456 = vsub.f32 %v392, %v440
  %v457 = vsub.f32 %v393, %v441
  %v458 = vsub.f32 %v394, %v442
  %v459 = vsub.f32 %v395, %v443
  %v460 = vmul.f32 %v444, 1.442695
  %v461 = vpow.pop %v460
  %v462 = vmul.f32 %v445, 1.442695
  %v463 = vpow.pop %v462
  %v464 = vmul.f32 %v446, 1.442695
  %v465 = vpow.pop %v464
  %v466 = vmul.f32 %v447, 1.442695
  %v467 = vpow.pop %v466
  %v468 = vmul.f32 %v448, 1.442695
  %v469 = vpow.pop %v468
  %v470 = vmul.f32 %v449, 1.442695
  %v471 = vpow.pop %v470
  %v472 = vmul.f32 %v450, 1.442695
  %v473 = vpow.pop %v472
  %v474 = vmul.f32 %v451, 1.442695
  %v475 = vpow.pop %v474
  %v476 = vmul.f32 %v452, 1.442695
  %v477 = vpow.pop %v476
  %v478 = vmul.f32 %v453, 1.442695
  %v479 = vpow.pop %v478
  %v480 = vmul.f32 %v454, 1.442695
  %v481 = vpow.pop %v480
  %v482 = vmul.f32 %v455, 1.442695
  %v483 = vpow.pop %v482
  %v484 = vmul.f32 %v456, 1.442695
  %v485 = vpow.pop %v484
  %v486 = vmul.f32 %v457, 1.442695
  %v487 = vpow.pop %v486
  %v488 = vmul.f32 %v458, 1.442695
  %v489 = vpow.pop %v488
  %v490 = vmul.f32 %v459, 1.442695
  %v491 = vpow.pop %v490
  %493 = vset.pattern.permute.xlu0 0
  %494 = vperm.xlu0 %493, %v428
  %v495 = vpop.permute.xlu0 %494
  %498 = vset.pattern.permute.xlu0 0
  %499 = vperm.xlu0 %498, %v429
  %v500 = vpop.permute.xlu0 %499
  %503 = vset.pattern.permute.xlu0 0
  %504 = vperm.xlu0 %503, %v430
  %v505 = vpop.permute.xlu0 %504
  %508 = vset.pattern.permute.xlu0 0
  %509 = vperm.xlu0 %508, %v431
  %v510 = vpop.permute.xlu0 %509
  %513 = vset.pattern.permute.xlu0 0
  %514 = vperm.xlu0 %513, %v432
  %v515 = vpop.permute.xlu0 %514
  %518 = vset.pattern.permute.xlu0 0
  %519 = vperm.xlu0 %518, %v433
  %v520 = vpop.permute.xlu0 %519
  %523 = vset.pattern.permute.xlu0 0
  %524 = vperm.xlu0 %523, %v434
  %v525 = vpop.permute.xlu0 %524
  %528 = vset.pattern.permute.xlu0 0
  %529 = vperm.xlu0 %528, %v435
  %v530 = vpop.permute.xlu0 %529
  %533 = vset.pattern.permute.xlu0 0
  %534 = vperm.xlu0 %533, %v436
  %v535 = vpop.permute.xlu0 %534
  %538 = vset.pattern.permute.xlu0 0
  %539 = vperm.xlu0 %538, %v437
  %v540 = vpop.permute.xlu0 %539
  %543 = vset.pattern.permute.xlu0 0
  %544 = vperm.xlu0 %543, %v438
  %v545 = vpop.permute.xlu0 %544
  %548 = vset.pattern.permute.xlu0 0
  %549 = vperm.xlu0 %548, %v439
  %v550 = vpop.permute.xlu0 %549
  %553 = vset.pattern.permute.xlu0 0
  %554 = vperm.xlu0 %553, %v440
  %v555 = vpop.permute.xlu0 %554
  %558 = vset.pattern.permute.xlu0 0
  %559 = vperm.xlu0 %558, %v441
  %v560 = vpop.permute.xlu0 %559
  %563 = vset.pattern.permute.xlu0 0
  %564 = vperm.xlu0 %563, %v442
  %v565 = vpop.permute.xlu0 %564
  %568 = vset.pattern.permute.xlu0 0
  %569 = vperm.xlu0 %568, %v443
  %v570 = vpop.permute.xlu0 %569
  %v572 = vsub.f32 %v364, %v495
  %v573 = vsub.f32 %v365, %v500
  %v574 = vsub.f32 %v366, %v505
  %v575 = vsub.f32 %v367, %v510
  %v576 = vsub.f32 %v368, %v515
  %v577 = vsub.f32 %v369, %v520
  %v578 = vsub.f32 %v370, %v525
  %v579 = vsub.f32 %v371, %v530
  %v580 = vsub.f32 %v372, %v535
  %v581 = vsub.f32 %v373, %v540
  %v582 = vsub.f32 %v374, %v545
  %v583 = vsub.f32 %v375, %v550
  %v584 = vsub.f32 %v376, %v555
  %v585 = vsub.f32 %v377, %v560
  %v586 = vsub.f32 %v378, %v565
  %v587 = vsub.f32 %v379, %v570
  %v588 = vmul.f32 %v572, 1.442695
  %v589 = vpow.pop %v588
  %v590 = vmul.f32 %v573, 1.442695
  %v591 = vpow.pop %v590
  %v592 = vmul.f32 %v574, 1.442695
  %v593 = vpow.pop %v592
  %v594 = vmul.f32 %v575, 1.442695
  %v595 = vpow.pop %v594
  %v596 = vmul.f32 %v576, 1.442695
  %v597 = vpow.pop %v596
  %v598 = vmul.f32 %v577, 1.442695
  %v599 = vpow.pop %v598
  %v600 = vmul.f32 %v578, 1.442695
  %v601 = vpow.pop %v600
  %v602 = vmul.f32 %v579, 1.442695
  %v603 = vpow.pop %v602
  %v604 = vmul.f32 %v580, 1.442695
  %v605 = vpow.pop %v604
  %v606 = vmul.f32 %v581, 1.442695
  %v607 = vpow.pop %v606
  %v608 = vmul.f32 %v582, 1.442695
  %v609 = vpow.pop %v608
  %v610 = vmul.f32 %v583, 1.442695
  %v611 = vpow.pop %v610
  %v612 = vmul.f32 %v584, 1.442695
  %v613 = vpow.pop %v612
  %v614 = vmul.f32 %v585, 1.442695
  %v615 = vpow.pop %v614
  %v616 = vmul.f32 %v586, 1.442695
  %v617 = vpow.pop %v616
  %v618 = vmul.f32 %v587, 1.442695
  %v619 = vpow.pop %v618
  %v620 = vsel %vm348, %v589, 0.0
  %v621 = vsel %vm349, %v591, 0.0
  %v622 = vsel %vm350, %v593, 0.0
  %v623 = vsel %vm351, %v595, 0.0
  %v624 = vsel %vm352, %v597, 0.0
  %v625 = vsel %vm353, %v599, 0.0
  %v626 = vsel %vm354, %v601, 0.0
  %v627 = vsel %vm355, %v603, 0.0
  %v628 = vsel %vm356, %v605, 0.0
  %v629 = vsel %vm357, %v607, 0.0
  %v630 = vsel %vm358, %v609, 0.0
  %v631 = vsel %vm359, %v611, 0.0
  %v632 = vsel %vm360, %v613, 0.0
  %v633 = vsel %vm361, %v615, 0.0
  %v634 = vsel %vm362, %v617, 0.0
  %v635 = vsel %vm363, %v619, 0.0
  %v636 = vld [vmem:[#allocation3] sm:$0xff]
  %v637 = vld [vmem:[#allocation3 + $0x8] sm:$0xff]
  %v638 = vld [vmem:[#allocation3 + $0x10] sm:$0xff]
  %v639 = vld [vmem:[#allocation3 + $0x18] sm:$0xff]
  %v640 = vld [vmem:[#allocation3 + $0x20] sm:$0xff]
  %v641 = vld [vmem:[#allocation3 + $0x28] sm:$0xff]
  %v642 = vld [vmem:[#allocation3 + $0x30] sm:$0xff]
  %v643 = vld [vmem:[#allocation3 + $0x38] sm:$0xff]
  %v644 = vld [vmem:[#allocation3 + $0x40] sm:$0xff]
  %v645 = vld [vmem:[#allocation3 + $0x48] sm:$0xff]
  %v646 = vld [vmem:[#allocation3 + $0x50] sm:$0xff]
  %v647 = vld [vmem:[#allocation3 + $0x58] sm:$0xff]
  %v648 = vld [vmem:[#allocation3 + $0x60] sm:$0xff]
  %v649 = vld [vmem:[#allocation3 + $0x68] sm:$0xff]
  %v650 = vld [vmem:[#allocation3 + $0x70] sm:$0xff]
  %v651 = vld [vmem:[#allocation3 + $0x78] sm:$0xff]
  %v652 = vmul.f32 %v461, %v636
  %v653 = vmul.f32 %v463, %v637
  %v654 = vmul.f32 %v465, %v638
  %v655 = vmul.f32 %v467, %v639
  %v656 = vmul.f32 %v469, %v640
  %v657 = vmul.f32 %v471, %v641
  %v658 = vmul.f32 %v473, %v642
  %v659 = vmul.f32 %v475, %v643
  %v660 = vmul.f32 %v477, %v644
  %v661 = vmul.f32 %v479, %v645
  %v662 = vmul.f32 %v481, %v646
  %v663 = vmul.f32 %v483, %v647
  %v664 = vmul.f32 %v485, %v648
  %v665 = vmul.f32 %v487, %v649
  %v666 = vmul.f32 %v489, %v650
  %v667 = vmul.f32 %v491, %v651
  %668 = vadd.xlane.f32.xlu0 %v620
  %v669 = vpop.xlane.xlu0 %668
  %670 = vadd.xlane.f32.xlu0 %v621
  %v671 = vpop.xlane.xlu0 %670
  %672 = vadd.xlane.f32.xlu0 %v622
  %v673 = vpop.xlane.xlu0 %672
  %674 = vadd.xlane.f32.xlu0 %v623
  %v675 = vpop.xlane.xlu0 %674
  %676 = vadd.xlane.f32.xlu0 %v624
  %v677 = vpop.xlane.xlu0 %676
  %678 = vadd.xlane.f32.xlu0 %v625
  %v679 = vpop.xlane.xlu0 %678
  %680 = vadd.xlane.f32.xlu0 %v626
  %v681 = vpop.xlane.xlu0 %680
  %682 = vadd.xlane.f32.xlu0 %v627
  %v683 = vpop.xlane.xlu0 %682
  %684 = vadd.xlane.f32.xlu0 %v628
  %v685 = vpop.xlane.xlu0 %684
  %686 = vadd.xlane.f32.xlu0 %v629
  %v687 = vpop.xlane.xlu0 %686
  %688 = vadd.xlane.f32.xlu0 %v630
  %v689 = vpop.xlane.xlu0 %688
  %690 = vadd.xlane.f32.xlu0 %v631
  %v691 = vpop.xlane.xlu0 %690
  %692 = vadd.xlane.f32.xlu0 %v632
  %v693 = vpop.xlane.xlu0 %692
  %694 = vadd.xlane.f32.xlu0 %v633
  %v695 = vpop.xlane.xlu0 %694
  %696 = vadd.xlane.f32.xlu0 %v634
  %v697 = vpop.xlane.xlu0 %696
  %698 = vadd.xlane.f32.xlu0 %v635
  %v699 = vpop.xlane.xlu0 %698
  %v700 = vadd.f32 %v652, %v669
  %v701 = vadd.f32 %v653, %v671
  %v702 = vadd.f32 %v654, %v673
  %v703 = vadd.f32 %v655, %v675
  %v704 = vadd.f32 %v656, %v677
  %v705 = vadd.f32 %v657, %v679
  %v706 = vadd.f32 %v658, %v681
  %v707 = vadd.f32 %v659, %v683
  %v708 = vadd.f32 %v660, %v685
  %v709 = vadd.f32 %v661, %v687
  %v710 = vadd.f32 %v662, %v689
  %v711 = vadd.f32 %v663, %v691
  %v712 = vadd.f32 %v664, %v693
  %v713 = vadd.f32 %v665, %v695
  %v714 = vadd.f32 %v666, %v697
  %v715 = vadd.f32 %v667, %v699
  %vm716 = vcmask 7168
  %717 = vst.msk [vmem:[#allocation3] sm:$0xff] %vm716, %v700
  %718 = vst.msk [vmem:[#allocation3 + $0x8] sm:$0xff] %vm716, %v701
  %719 = vst.msk [vmem:[#allocation3 + $0x10] sm:$0xff] %vm716, %v702
  %720 = vst.msk [vmem:[#allocation3 + $0x18] sm:$0xff] %vm716, %v703
  %721 = vst.msk [vmem:[#allocation3 + $0x20] sm:$0xff] %vm716, %v704
  %722 = vst.msk [vmem:[#allocation3 + $0x28] sm:$0xff] %vm716, %v705
  %723 = vst.msk [vmem:[#allocation3 + $0x30] sm:$0xff] %vm716, %v706
  %724 = vst.msk [vmem:[#allocation3 + $0x38] sm:$0xff] %vm716, %v707
  %725 = vst.msk [vmem:[#allocation3 + $0x40] sm:$0xff] %vm716, %v708
  %726 = vst.msk [vmem:[#allocation3 + $0x48] sm:$0xff] %vm716, %v709
  %727 = vst.msk [vmem:[#allocation3 + $0x50] sm:$0xff] %vm716, %v710
  %728 = vst.msk [vmem:[#allocation3 + $0x58] sm:$0xff] %vm716, %v711
  %729 = vst.msk [vmem:[#allocation3 + $0x60] sm:$0xff] %vm716, %v712
  %730 = vst.msk [vmem:[#allocation3 + $0x68] sm:$0xff] %vm716, %v713
  %731 = vst.msk [vmem:[#allocation3 + $0x70] sm:$0xff] %vm716, %v714
  %732 = vst.msk [vmem:[#allocation3 + $0x78] sm:$0xff] %vm716, %v715
  %v733 = vld [vmem:[#allocation4] sm:$0xff]
  %v734 = vld [vmem:[#allocation4 + $0x8] sm:$0xff]
  %v735 = vld [vmem:[#allocation4 + $0x10] sm:$0xff]
  %v736 = vld [vmem:[#allocation4 + $0x18] sm:$0xff]
  %v737 = vld [vmem:[#allocation4 + $0x20] sm:$0xff]
  %v738 = vld [vmem:[#allocation4 + $0x28] sm:$0xff]
  %v739 = vld [vmem:[#allocation4 + $0x30] sm:$0xff]
  %v740 = vld [vmem:[#allocation4 + $0x38] sm:$0xff]
  %v741 = vld [vmem:[#allocation4 + $0x40] sm:$0xff]
  %v742 = vld [vmem:[#allocation4 + $0x48] sm:$0xff]
  %v743 = vld [vmem:[#allocation4 + $0x50] sm:$0xff]
  %v744 = vld [vmem:[#allocation4 + $0x58] sm:$0xff]
  %v745 = vld [vmem:[#allocation4 + $0x60] sm:$0xff]
  %v746 = vld [vmem:[#allocation4 + $0x68] sm:$0xff]
  %v747 = vld [vmem:[#allocation4 + $0x70] sm:$0xff]
  %v748 = vld [vmem:[#allocation4 + $0x78] sm:$0xff]
  %750 = vset.pattern.permute.xlu0 0
  %751 = vperm.xlu0 %750, %v461
  %v752 = vpop.permute.xlu0 %751
  %755 = vset.pattern.permute.xlu0 0
  %756 = vperm.xlu0 %755, %v463
  %v757 = vpop.permute.xlu0 %756
  %760 = vset.pattern.permute.xlu0 0
  %761 = vperm.xlu0 %760, %v465
  %v762 = vpop.permute.xlu0 %761
  %765 = vset.pattern.permute.xlu0 0
  %766 = vperm.xlu0 %765, %v467
  %v767 = vpop.permute.xlu0 %766
  %770 = vset.pattern.permute.xlu0 0
  %771 = vperm.xlu0 %770, %v469
  %v772 = vpop.permute.xlu0 %771
  %775 = vset.pattern.permute.xlu0 0
  %776 = vperm.xlu0 %775, %v471
  %v777 = vpop.permute.xlu0 %776
  %780 = vset.pattern.permute.xlu0 0
  %781 = vperm.xlu0 %780, %v473
  %v782 = vpop.permute.xlu0 %781
  %785 = vset.pattern.permute.xlu0 0
  %786 = vperm.xlu0 %785, %v475
  %v787 = vpop.permute.xlu0 %786
  %790 = vset.pattern.permute.xlu0 0
  %791 = vperm.xlu0 %790, %v477
  %v792 = vpop.permute.xlu0 %791
  %795 = vset.pattern.permute.xlu0 0
  %796 = vperm.xlu0 %795, %v479
  %v797 = vpop.permute.xlu0 %796
  %800 = vset.pattern.permute.xlu0 0
  %801 = vperm.xlu0 %800, %v481
  %v802 = vpop.permute.xlu0 %801
  %805 = vset.pattern.permute.xlu0 0
  %806 = vperm.xlu0 %805, %v483
  %v807 = vpop.permute.xlu0 %806
  %810 = vset.pattern.permute.xlu0 0
  %811 = vperm.xlu0 %810, %v485
  %v812 = vpop.permute.xlu0 %811
  %815 = vset.pattern.permute.xlu0 0
  %816 = vperm.xlu0 %815, %v487
  %v817 = vpop.permute.xlu0 %816
  %820 = vset.pattern.permute.xlu0 0
  %821 = vperm.xlu0 %820, %v489
  %v822 = vpop.permute.xlu0 %821
  %825 = vset.pattern.permute.xlu0 0
  %826 = vperm.xlu0 %825, %v491
  %v827 = vpop.permute.xlu0 %826
  %v829 = vmul.f32 %v752, %v733
  %v830 = vmul.f32 %v757, %v734
  %v831 = vmul.f32 %v762, %v735
  %v832 = vmul.f32 %v767, %v736
  %v833 = vmul.f32 %v772, %v737
  %v834 = vmul.f32 %v777, %v738
  %v835 = vmul.f32 %v782, %v739
  %v836 = vmul.f32 %v787, %v740
  %v837 = vmul.f32 %v792, %v741
  %v838 = vmul.f32 %v797, %v742
  %v839 = vmul.f32 %v802, %v743
  %v840 = vmul.f32 %v807, %v744
  %v841 = vmul.f32 %v812, %v745
  %v842 = vmul.f32 %v817, %v746
  %v843 = vmul.f32 %v822, %v747
  %v844 = vmul.f32 %v827, %v748
  %v845 = vpack.c.bf16 %v621, %v620
  %v846 = vpack.c.bf16 %v623, %v622
  %v847 = vpack.c.bf16 %v625, %v624
  %v848 = vpack.c.bf16 %v627, %v626
  %v849 = vpack.c.bf16 %v629, %v628
  %v850 = vpack.c.bf16 %v631, %v630
  %v851 = vpack.c.bf16 %v633, %v632
  %v852 = vpack.c.bf16 %v635, %v634
  %v853 = vld [vmem:[%s3] sm:$0xf]
  %v854 = vld [vmem:[%s3 + $0x4] sm:$0xf]
  %v855 = vld [vmem:[%s3 + $0x8] sm:$0xf]
  %v856 = vld [vmem:[%s3 + $0xc] sm:$0xf]
  %v857 = vld [vmem:[%s3 + $0x10] sm:$0xf]
  %v858 = vld [vmem:[%s3 + $0x14] sm:$0xf]
  %v859 = vld [vmem:[%s3 + $0x18] sm:$0xf]
  %v860 = vld [vmem:[%s3 + $0x1c] sm:$0xf]
  %v861 = vld [vmem:[%s3 + $0x20] sm:$0xf]
  %v862 = vld [vmem:[%s3 + $0x24] sm:$0xf]
  %v863 = vld [vmem:[%s3 + $0x28] sm:$0xf]
  %v864 = vld [vmem:[%s3 + $0x2c] sm:$0xf]
  %v865 = vld [vmem:[%s3 + $0x30] sm:$0xf]
  %v866 = vld [vmem:[%s3 + $0x34] sm:$0xf]
  %v867 = vld [vmem:[%s3 + $0x38] sm:$0xf]
  %v868 = vld [vmem:[%s3 + $0x3c] sm:$0xf]
  %v885 = vunpack.c.l.b16 %v853
  %v886 = vunpack.c.l.b16 %v854
  %v887 = vunpack.c.l.b16 %v855
  %v888 = vunpack.c.l.b16 %v856
  %v889 = vunpack.c.l.b16 %v857
  %v890 = vunpack.c.l.b16 %v858
  %v891 = vunpack.c.l.b16 %v859
  %v892 = vunpack.c.l.b16 %v860
  %v893 = vunpack.c.l.b16 %v861
  %v894 = vunpack.c.l.b16 %v862
  %v895 = vunpack.c.l.b16 %v863
  %v896 = vunpack.c.l.b16 %v864
  %v897 = vunpack.c.l.b16 %v865
  %v898 = vunpack.c.l.b16 %v866
  %v899 = vunpack.c.l.b16 %v867
  %v900 = vunpack.c.l.b16 %v868
  %v901 = vpack.c.b16 %v886, %v885
  %v902 = vpack.c.b16 %v888, %v887
  %v903 = vpack.c.b16 %v890, %v889
  %v904 = vpack.c.b16 %v892, %v891
  %v905 = vpack.c.b16 %v894, %v893
  %v906 = vpack.c.b16 %v896, %v895
  %v907 = vpack.c.b16 %v898, %v897
  %v908 = vpack.c.b16 %v900, %v899
  %917 = vmatprep.subr.bf16.mxu0 0
  %918 = vmatpush1.bf16.msra.mxu0 %v901
  %919 = vmatprep.subr.bf16.mxu0 0
  %920 = vmatpush1.bf16.msra.mxu0 %v902
  %921 = vmatprep.subr.bf16.mxu0 0
  %922 = vmatpush1.bf16.msra.mxu0 %v903
  %923 = vmatprep.subr.bf16.mxu0 0
  %924 = vmatpush1.bf16.msra.mxu0 %v904
  %925 = vmatprep.subr.bf16.mxu0 0
  %926 = vmatpush1.bf16.msra.mxu0 %v905
  %927 = vmatprep.subr.bf16.mxu0 0
  %928 = vmatpush1.bf16.msra.mxu0 %v906
  %929 = vmatprep.subr.bf16.mxu0 0
  %930 = vmatpush1.bf16.msra.mxu0 %v907
  %931 = vmatprep.subr.bf16.mxu0 0
  %932 = vmatpush1.bf16.msra.mxu0 %v908
  %933 = vmatprep.subr.bf16.mxu0 0
  %934 = vmatpush1.bf16.msra.mxu0 0
  %935 = vmatprep.subr.bf16.mxu0 0
  %936 = vmatpush1.bf16.msra.mxu0 0
  %937 = vmatprep.subr.bf16.mxu0 0
  %938 = vmatpush1.bf16.msra.mxu0 0
  %939 = vmatprep.subr.bf16.mxu0 0
  %940 = vmatpush1.bf16.msra.mxu0 0
  %941 = vmatprep.subr.bf16.mxu0 0
  %942 = vmatpush1.bf16.msra.mxu0 0
  %943 = vmatprep.subr.bf16.mxu0 0
  %944 = vmatpush1.bf16.msra.mxu0 0
  %945 = vmatprep.subr.bf16.mxu0 0
  %946 = vmatpush1.bf16.msra.mxu0 0
  %947 = vmatprep.subr.bf16.mxu0 0
  %948 = vmatpush1.bf16.msra.mxu0 0
  %949 = vmatprep.mubr.bf16.mxu0 0
  %950 = vmatmul.mubr.bf16.gmra.mrb[0].mxu0 %v845
  %v951 = vpop.f32.mrb[0].mxu0
  %v952 = vadd.f32 0.0, %v951
  %v953 = vpop.f32.mrb[0].mxu0
  %v954 = vpop.f32.mrb[0].mxu0
  %v955 = vadd.f32 0.0, %v954
  %v956 = vpop.f32.mrb[0].mxu0
  %957 = vmatprep.mubr.bf16.mxu0 0
  %958 = vmatmul.mubr.bf16.gmra.mrb[0].mxu0 %v846
  %v959 = vpop.f32.mrb[0].mxu0
  %v960 = vadd.f32 0.0, %v959
  %v961 = vpop.f32.mrb[0].mxu0
  %v962 = vpop.f32.mrb[0].mxu0
  %v963 = vadd.f32 0.0, %v962
  %v964 = vpop.f32.mrb[0].mxu0
  %965 = vmatprep.mubr.bf16.mxu0 0
  %966 = vmatmul.mubr.bf16.gmra.mrb[0].mxu0 %v847
  %v967 = vpop.f32.mrb[0].mxu0
  %v968 = vadd.f32 0.0, %v967
  %v969 = vpop.f32.mrb[0].mxu0
  %v970 = vpop.f32.mrb[0].mxu0
  %v971 = vadd.f32 0.0, %v970
  %v972 = vpop.f32.mrb[0].mxu0
  %973 = vmatprep.mubr.bf16.mxu0 0
  %974 = vmatmul.mubr.bf16.gmra.mrb[0].mxu0 %v848
  %v975 = vpop.f32.mrb[0].mxu0
  %v976 = vadd.f32 0.0, %v975
  %v977 = vpop.f32.mrb[0].mxu0
  %v978 = vpop.f32.mrb[0].mxu0
  %v979 = vadd.f32 0.0, %v978
  %v980 = vpop.f32.mrb[0].mxu0
  %981 = vmatprep.mubr.bf16.mxu0 0
  %982 = vmatmul.mubr.bf16.gmra.mrb[0].mxu0 %v849
  %v983 = vpop.f32.mrb[0].mxu0
  %v984 = vadd.f32 0.0, %v983
  %v985 = vpop.f32.mrb[0].mxu0
  %v986 = vpop.f32.mrb[0].mxu0
  %v987 = vadd.f32 0.0, %v986
  %v988 = vpop.f32.mrb[0].mxu0
  %989 = vmatprep.mubr.bf16.mxu0 0
  %990 = vmatmul.mubr.bf16.gmra.mrb[0].mxu0 %v850
  %v991 = vpop.f32.mrb[0].mxu0
  %v992 = vadd.f32 0.0, %v991
  %v993 = vpop.f32.mrb[0].mxu0
  %v994 = vpop.f32.mrb[0].mxu0
  %v995 = vadd.f32 0.0, %v994
  %v996 = vpop.f32.mrb[0].mxu0
  %997 = vmatprep.mubr.bf16.mxu0 0
  %998 = vmatmul.mubr.bf16.gmra.mrb[0].mxu0 %v851
  %v999 = vpop.f32.mrb[0].mxu0
  %v1000 = vadd.f32 0.0, %v999
  %v1001 = vpop.f32.mrb[0].mxu0
  %v1002 = vpop.f32.mrb[0].mxu0
  %v1003 = vadd.f32 0.0, %v1002
  %v1004 = vpop.f32.mrb[0].mxu0
  %1005 = vmatprep.mubr.bf16.mxu0 0
  %1006 = vmatmul.mubr.bf16.gmra.mrb[0].mxu0 %v852
  %v1007 = vpop.f32.mrb[0].mxu0
  %v1008 = vadd.f32 0.0, %v1007
  %v1009 = vpop.f32.mrb[0].mxu0
  %v1010 = vpop.f32.mrb[0].mxu0
  %v1011 = vadd.f32 0.0, %v1010
  %v1012 = vpop.f32.mrb[0].mxu0
  %1013 = vdwg.mxu0
  %v1014 = vadd.f32 %v829, %v952
  %v1015 = vadd.f32 %v830, %v955
  %v1016 = vadd.f32 %v831, %v960
  %v1017 = vadd.f32 %v832, %v963
  %v1018 = vadd.f32 %v833, %v968
  %v1019 = vadd.f32 %v834, %v971
  %v1020 = vadd.f32 %v835, %v976
  %v1021 = vadd.f32 %v836, %v979
  %v1022 = vadd.f32 %v837, %v984
  %v1023 = vadd.f32 %v838, %v987
  %v1024 = vadd.f32 %v839, %v992
  %v1025 = vadd.f32 %v840, %v995
  %v1026 = vadd.f32 %v841, %v1000
  %v1027 = vadd.f32 %v842, %v1003
  %v1028 = vadd.f32 %v843, %v1008
  %v1029 = vadd.f32 %v844, %v1011
  %1030 = vst [vmem:[#allocation4] sm:$0xff] %v1014
  %1031 = vst [vmem:[#allocation4 + $0x8] sm:$0xff] %v1015
  %1032 = vst [vmem:[#allocation4 + $0x10] sm:$0xff] %v1016
  %1033 = vst [vmem:[#allocation4 + $0x18] sm:$0xff] %v1017
  %1034 = vst [vmem:[#allocation4 + $0x20] sm:$0xff] %v1018
  %1035 = vst [vmem:[#allocation4 + $0x28] sm:$0xff] %v1019
  %1036 = vst [vmem:[#allocation4 + $0x30] sm:$0xff] %v1020
  %1037 = vst [vmem:[#allocation4 + $0x38] sm:$0xff] %v1021
  %1038 = vst [vmem:[#allocation4 + $0x40] sm:$0xff] %v1022
  %1039 = vst [vmem:[#allocation4 + $0x48] sm:$0xff] %v1023
  %1040 = vst [vmem:[#allocation4 + $0x50] sm:$0xff] %v1024
  %1041 = vst [vmem:[#allocation4 + $0x58] sm:$0xff] %v1025
  %1042 = vst [vmem:[#allocation4 + $0x60] sm:$0xff] %v1026
  %1043 = vst [vmem:[#allocation4 + $0x68] sm:$0xff] %v1027
  %1044 = vst [vmem:[#allocation4 + $0x70] sm:$0xff] %v1028
  %1045 = vst [vmem:[#allocation4 + $0x78] sm:$0xff] %v1029
  %1046 = vst.msk [vmem:[#allocation2] sm:$0xff] %vm716, %v428
  %1047 = vst.msk [vmem:[#allocation2 + $0x8] sm:$0xff] %vm716, %v429
  %1048 = vst.msk [vmem:[#allocation2 + $0x10] sm:$0xff] %vm716, %v430
  %1049 = vst.msk [vmem:[#allocation2 + $0x18] sm:$0xff] %vm716, %v431
  %1050 = vst.msk [vmem:[#allocation2 + $0x20] sm:$0xff] %vm716, %v432
  %1051 = vst.msk [vmem:[#allocation2 + $0x28] sm:$0xff] %vm716, %v433
  %1052 = vst.msk [vmem:[#allocation2 + $0x30] sm:$0xff] %vm716, %v434
  %1053 = vst.msk [vmem:[#allocation2 + $0x38] sm:$0xff] %vm716, %v435
  %1054 = vst.msk [vmem:[#allocation2 + $0x40] sm:$0xff] %vm716, %v436
  %1055 = vst.msk [vmem:[#allocation2 + $0x48] sm:$0xff] %vm716, %v437
  %1056 = vst.msk [vmem:[#allocation2 + $0x50] sm:$0xff] %vm716, %v438
  %1057 = vst.msk [vmem:[#allocation2 + $0x58] sm:$0xff] %vm716, %v439
  %1058 = vst.msk [vmem:[#allocation2 + $0x60] sm:$0xff] %vm716, %v440
  %1059 = vst.msk [vmem:[#allocation2 + $0x68] sm:$0xff] %vm716, %v441
  %1060 = vst.msk [vmem:[#allocation2 + $0x70] sm:$0xff] %vm716, %v442
  %1061 = vst.msk [vmem:[#allocation2 + $0x78] sm:$0xff] %vm716, %v443
  // Predicated region
  $region22: #{gat_forward.5} parent=0 // pred_check
    %p1062 = pneg %p20
  $region23: #{gat_forward.5} parent=0 // pred_check_branch
    %1064 = sbr.rel (%p1062) target = $region25
  $region24: #{gat_forward.5} parent=0 // pred_region
    %v1065 = vld [vmem:[#allocation3] sm:$0xff]
    %v1066 = vld [vmem:[#allocation3 + $0x8] sm:$0xff]
    %v1067 = vld [vmem:[#allocation3 + $0x10] sm:$0xff]
    %v1068 = vld [vmem:[#allocation3 + $0x18] sm:$0xff]
    %v1069 = vld [vmem:[#allocation3 + $0x20] sm:$0xff]
    %v1070 = vld [vmem:[#allocation3 + $0x28] sm:$0xff]
    %v1071 = vld [vmem:[#allocation3 + $0x30] sm:$0xff]
    %v1072 = vld [vmem:[#allocation3 + $0x38] sm:$0xff]
    %v1073 = vld [vmem:[#allocation3 + $0x40] sm:$0xff]
    %v1074 = vld [vmem:[#allocation3 + $0x48] sm:$0xff]
    %v1075 = vld [vmem:[#allocation3 + $0x50] sm:$0xff]
    %v1076 = vld [vmem:[#allocation3 + $0x58] sm:$0xff]
    %v1077 = vld [vmem:[#allocation3 + $0x60] sm:$0xff]
    %v1078 = vld [vmem:[#allocation3 + $0x68] sm:$0xff]
    %v1079 = vld [vmem:[#allocation3 + $0x70] sm:$0xff]
    %v1080 = vld [vmem:[#allocation3 + $0x78] sm:$0xff]
    %v1081 = vmax.f32 %v1065, 1e-30
    %v1082 = vmax.f32 %v1066, 1e-30
    %v1083 = vmax.f32 %v1067, 1e-30
    %v1084 = vmax.f32 %v1068, 1e-30
    %v1085 = vmax.f32 %v1069, 1e-30
    %v1086 = vmax.f32 %v1070, 1e-30
    %v1087 = vmax.f32 %v1071, 1e-30
    %v1088 = vmax.f32 %v1072, 1e-30
    %v1089 = vmax.f32 %v1073, 1e-30
    %v1090 = vmax.f32 %v1074, 1e-30
    %v1091 = vmax.f32 %v1075, 1e-30
    %v1092 = vmax.f32 %v1076, 1e-30
    %v1093 = vmax.f32 %v1077, 1e-30
    %v1094 = vmax.f32 %v1078, 1e-30
    %v1095 = vmax.f32 %v1079, 1e-30
    %v1096 = vmax.f32 %v1080, 1e-30
    %v1097 = vrcp.pop %v1081
    %v1098 = vrcp.pop %v1082
    %v1099 = vrcp.pop %v1083
    %v1100 = vrcp.pop %v1084
    %v1101 = vrcp.pop %v1085
    %v1102 = vrcp.pop %v1086
    %v1103 = vrcp.pop %v1087
    %v1104 = vrcp.pop %v1088
    %v1105 = vrcp.pop %v1089
    %v1106 = vrcp.pop %v1090
    %v1107 = vrcp.pop %v1091
    %v1108 = vrcp.pop %v1092
    %v1109 = vrcp.pop %v1093
    %v1110 = vrcp.pop %v1094
    %v1111 = vrcp.pop %v1095
    %v1112 = vrcp.pop %v1096
    %v1113 = vld [vmem:[#allocation4] sm:$0xff]
    %v1114 = vld [vmem:[#allocation4 + $0x8] sm:$0xff]
    %v1115 = vld [vmem:[#allocation4 + $0x10] sm:$0xff]
    %v1116 = vld [vmem:[#allocation4 + $0x18] sm:$0xff]
    %v1117 = vld [vmem:[#allocation4 + $0x20] sm:$0xff]
    %v1118 = vld [vmem:[#allocation4 + $0x28] sm:$0xff]
    %v1119 = vld [vmem:[#allocation4 + $0x30] sm:$0xff]
    %v1120 = vld [vmem:[#allocation4 + $0x38] sm:$0xff]
    %v1121 = vld [vmem:[#allocation4 + $0x40] sm:$0xff]
    %v1122 = vld [vmem:[#allocation4 + $0x48] sm:$0xff]
    %v1123 = vld [vmem:[#allocation4 + $0x50] sm:$0xff]
    %v1124 = vld [vmem:[#allocation4 + $0x58] sm:$0xff]
    %v1125 = vld [vmem:[#allocation4 + $0x60] sm:$0xff]
    %v1126 = vld [vmem:[#allocation4 + $0x68] sm:$0xff]
    %v1127 = vld [vmem:[#allocation4 + $0x70] sm:$0xff]
    %v1128 = vld [vmem:[#allocation4 + $0x78] sm:$0xff]
    %1130 = vset.pattern.permute.xlu0 0
    %1131 = vperm.xlu0 %1130, %v1097
    %v1132 = vpop.permute.xlu0 %1131
    %1135 = vset.pattern.permute.xlu0 0
    %1136 = vperm.xlu0 %1135, %v1098
    %v1137 = vpop.permute.xlu0 %1136
    %1140 = vset.pattern.permute.xlu0 0
    %1141 = vperm.xlu0 %1140, %v1099
    %v1142 = vpop.permute.xlu0 %1141
    %1145 = vset.pattern.permute.xlu0 0
    %1146 = vperm.xlu0 %1145, %v1100
    %v1147 = vpop.permute.xlu0 %1146
    %1150 = vset.pattern.permute.xlu0 0
    %1151 = vperm.xlu0 %1150, %v1101
    %v1152 = vpop.permute.xlu0 %1151
    %1155 = vset.pattern.permute.xlu0 0
    %1156 = vperm.xlu0 %1155, %v1102
    %v1157 = vpop.permute.xlu0 %1156
    %1160 = vset.pattern.permute.xlu0 0
    %1161 = vperm.xlu0 %1160, %v1103
    %v1162 = vpop.permute.xlu0 %1161
    %1165 = vset.pattern.permute.xlu0 0
    %1166 = vperm.xlu0 %1165, %v1104
    %v1167 = vpop.permute.xlu0 %1166
    %1170 = vset.pattern.permute.xlu0 0
    %1171 = vperm.xlu0 %1170, %v1105
    %v1172 = vpop.permute.xlu0 %1171
    %1175 = vset.pattern.permute.xlu0 0
    %1176 = vperm.xlu0 %1175, %v1106
    %v1177 = vpop.permute.xlu0 %1176
    %1180 = vset.pattern.permute.xlu0 0
    %1181 = vperm.xlu0 %1180, %v1107
    %v1182 = vpop.permute.xlu0 %1181
    %1185 = vset.pattern.permute.xlu0 0
    %1186 = vperm.xlu0 %1185, %v1108
    %v1187 = vpop.permute.xlu0 %1186
    %1190 = vset.pattern.permute.xlu0 0
    %1191 = vperm.xlu0 %1190, %v1109
    %v1192 = vpop.permute.xlu0 %1191
    %1195 = vset.pattern.permute.xlu0 0
    %1196 = vperm.xlu0 %1195, %v1110
    %v1197 = vpop.permute.xlu0 %1196
    %1200 = vset.pattern.permute.xlu0 0
    %1201 = vperm.xlu0 %1200, %v1111
    %v1202 = vpop.permute.xlu0 %1201
    %1205 = vset.pattern.permute.xlu0 0
    %1206 = vperm.xlu0 %1205, %v1112
    %v1207 = vpop.permute.xlu0 %1206
    %v1209 = vmul.f32 %v1113, %v1132
    %v1210 = vmul.f32 %v1114, %v1137
    %v1211 = vmul.f32 %v1115, %v1142
    %v1212 = vmul.f32 %v1116, %v1147
    %v1213 = vmul.f32 %v1117, %v1152
    %v1214 = vmul.f32 %v1118, %v1157
    %v1215 = vmul.f32 %v1119, %v1162
    %v1216 = vmul.f32 %v1120, %v1167
    %v1217 = vmul.f32 %v1121, %v1172
    %v1218 = vmul.f32 %v1122, %v1177
    %v1219 = vmul.f32 %v1123, %v1182
    %v1220 = vmul.f32 %v1124, %v1187
    %v1221 = vmul.f32 %v1125, %v1192
    %v1222 = vmul.f32 %v1126, %v1197
    %v1223 = vmul.f32 %v1127, %v1202
    %v1224 = vmul.f32 %v1128, %v1207
    %v1225 = vlaneseq
    %v1226 = vand.u32 %v1225, 127
    %vm1227 = vcmp.lt.s32.totalorder %v1226, 8
    %v1228 = vsel %vm1227, %v1209, -1e+30
    %v1229 = vsel %vm1227, %v1210, -1e+30
    %v1230 = vsel %vm1227, %v1211, -1e+30
    %v1231 = vsel %vm1227, %v1212, -1e+30
    %v1232 = vsel %vm1227, %v1213, -1e+30
    %v1233 = vsel %vm1227, %v1214, -1e+30
    %v1234 = vsel %vm1227, %v1215, -1e+30
    %v1235 = vsel %vm1227, %v1216, -1e+30
    %v1236 = vsel %vm1227, %v1217, -1e+30
    %v1237 = vsel %vm1227, %v1218, -1e+30
    %v1238 = vsel %vm1227, %v1219, -1e+30
    %v1239 = vsel %vm1227, %v1220, -1e+30
    %v1240 = vsel %vm1227, %v1221, -1e+30
    %v1241 = vsel %vm1227, %v1222, -1e+30
    %v1242 = vsel %vm1227, %v1223, -1e+30
    %v1243 = vsel %vm1227, %v1224, -1e+30
    %1244 = vmax.xlane.f32.xlu0 %v1228
    %v1245 = vpop.xlane.xlu0 %1244
    %1246 = vmax.xlane.f32.xlu0 %v1229
    %v1247 = vpop.xlane.xlu0 %1246
    %1248 = vmax.xlane.f32.xlu0 %v1230
    %v1249 = vpop.xlane.xlu0 %1248
    %1250 = vmax.xlane.f32.xlu0 %v1231
    %v1251 = vpop.xlane.xlu0 %1250
    %1252 = vmax.xlane.f32.xlu0 %v1232
    %v1253 = vpop.xlane.xlu0 %1252
    %1254 = vmax.xlane.f32.xlu0 %v1233
    %v1255 = vpop.xlane.xlu0 %1254
    %1256 = vmax.xlane.f32.xlu0 %v1234
    %v1257 = vpop.xlane.xlu0 %1256
    %1258 = vmax.xlane.f32.xlu0 %v1235
    %v1259 = vpop.xlane.xlu0 %1258
    %1260 = vmax.xlane.f32.xlu0 %v1236
    %v1261 = vpop.xlane.xlu0 %1260
    %1262 = vmax.xlane.f32.xlu0 %v1237
    %v1263 = vpop.xlane.xlu0 %1262
    %1264 = vmax.xlane.f32.xlu0 %v1238
    %v1265 = vpop.xlane.xlu0 %1264
    %1266 = vmax.xlane.f32.xlu0 %v1239
    %v1267 = vpop.xlane.xlu0 %1266
    %1268 = vmax.xlane.f32.xlu0 %v1240
    %v1269 = vpop.xlane.xlu0 %1268
    %1270 = vmax.xlane.f32.xlu0 %v1241
    %v1271 = vpop.xlane.xlu0 %1270
    %1272 = vmax.xlane.f32.xlu0 %v1242
    %v1273 = vpop.xlane.xlu0 %1272
    %1274 = vmax.xlane.f32.xlu0 %v1243
    %v1275 = vpop.xlane.xlu0 %1274
    %v1276 = vsub.f32 %v1209, %v1245
    %v1277 = vsub.f32 %v1210, %v1247
    %v1278 = vsub.f32 %v1211, %v1249
    %v1279 = vsub.f32 %v1212, %v1251
    %v1280 = vsub.f32 %v1213, %v1253
    %v1281 = vsub.f32 %v1214, %v1255
    %v1282 = vsub.f32 %v1215, %v1257
    %v1283 = vsub.f32 %v1216, %v1259
    %v1284 = vsub.f32 %v1217, %v1261
    %v1285 = vsub.f32 %v1218, %v1263
    %v1286 = vsub.f32 %v1219, %v1265
    %v1287 = vsub.f32 %v1220, %v1267
    %v1288 = vsub.f32 %v1221, %v1269
    %v1289 = vsub.f32 %v1222, %v1271
    %v1290 = vsub.f32 %v1223, %v1273
    %v1291 = vsub.f32 %v1224, %v1275
    %v1292 = vmul.f32 %v1276, 1.442695
    %v1293 = vpow.pop %v1292
    %v1294 = vmul.f32 %v1277, 1.442695
    %v1295 = vpow.pop %v1294
    %v1296 = vmul.f32 %v1278, 1.442695
    %v1297 = vpow.pop %v1296
    %v1298 = vmul.f32 %v1279, 1.442695
    %v1299 = vpow.pop %v1298
    %v1300 = vmul.f32 %v1280, 1.442695
    %v1301 = vpow.pop %v1300
    %v1302 = vmul.f32 %v1281, 1.442695
    %v1303 = vpow.pop %v1302
    %v1304 = vmul.f32 %v1282, 1.442695
    %v1305 = vpow.pop %v1304
    %v1306 = vmul.f32 %v1283, 1.442695
    %v1307 = vpow.pop %v1306
    %v1308 = vmul.f32 %v1284, 1.442695
    %v1309 = vpow.pop %v1308
    %v1310 = vmul.f32 %v1285, 1.442695
    %v1311 = vpow.pop %v1310
    %v1312 = vmul.f32 %v1286, 1.442695
    %v1313 = vpow.pop %v1312
    %v1314 = vmul.f32 %v1287, 1.442695
    %v1315 = vpow.pop %v1314
    %v1316 = vmul.f32 %v1288, 1.442695
    %v1317 = vpow.pop %v1316
    %v1318 = vmul.f32 %v1289, 1.442695
    %v1319 = vpow.pop %v1318
    %v1320 = vmul.f32 %v1290, 1.442695
    %v1321 = vpow.pop %v1320
    %v1322 = vmul.f32 %v1291, 1.442695
    %v1323 = vpow.pop %v1322
    %v1324 = vsel %vm1227, %v1293, 0.0
    %v1325 = vsel %vm1227, %v1295, 0.0
    %v1326 = vsel %vm1227, %v1297, 0.0
    %v1327 = vsel %vm1227, %v1299, 0.0
    %v1328 = vsel %vm1227, %v1301, 0.0
    %v1329 = vsel %vm1227, %v1303, 0.0
    %v1330 = vsel %vm1227, %v1305, 0.0
    %v1331 = vsel %vm1227, %v1307, 0.0
    %v1332 = vsel %vm1227, %v1309, 0.0
    %v1333 = vsel %vm1227, %v1311, 0.0
    %v1334 = vsel %vm1227, %v1313, 0.0
    %v1335 = vsel %vm1227, %v1315, 0.0
    %v1336 = vsel %vm1227, %v1317, 0.0
    %v1337 = vsel %vm1227, %v1319, 0.0
    %v1338 = vsel %vm1227, %v1321, 0.0
    %v1339 = vsel %vm1227, %v1323, 0.0
    %1340 = vadd.xlane.f32.xlu0 %v1324
    %v1341 = vpop.xlane.xlu0 %1340
    %1342 = vadd.xlane.f32.xlu0 %v1325
    %v1343 = vpop.xlane.xlu0 %1342
    %1344 = vadd.xlane.f32.xlu0 %v1326
    %v1345 = vpop.xlane.xlu0 %1344
    %1346 = vadd.xlane.f32.xlu0 %v1327
    %v1347 = vpop.xlane.xlu0 %1346
    %1348 = vadd.xlane.f32.xlu0 %v1328
    %v1349 = vpop.xlane.xlu0 %1348
    %1350 = vadd.xlane.f32.xlu0 %v1329
    %v1351 = vpop.xlane.xlu0 %1350
    %1352 = vadd.xlane.f32.xlu0 %v1330
    %v1353 = vpop.xlane.xlu0 %1352
    %1354 = vadd.xlane.f32.xlu0 %v1331
    %v1355 = vpop.xlane.xlu0 %1354
    %1356 = vadd.xlane.f32.xlu0 %v1332
    %v1357 = vpop.xlane.xlu0 %1356
    %1358 = vadd.xlane.f32.xlu0 %v1333
    %v1359 = vpop.xlane.xlu0 %1358
    %1360 = vadd.xlane.f32.xlu0 %v1334
    %v1361 = vpop.xlane.xlu0 %1360
    %1362 = vadd.xlane.f32.xlu0 %v1335
    %v1363 = vpop.xlane.xlu0 %1362
    %1364 = vadd.xlane.f32.xlu0 %v1336
    %v1365 = vpop.xlane.xlu0 %1364
    %1366 = vadd.xlane.f32.xlu0 %v1337
    %v1367 = vpop.xlane.xlu0 %1366
    %1368 = vadd.xlane.f32.xlu0 %v1338
    %v1369 = vpop.xlane.xlu0 %1368
    %1370 = vadd.xlane.f32.xlu0 %v1339
    %v1371 = vpop.xlane.xlu0 %1370
    %v1372 = vlog2.pop %v1341
    %v1373 = vmul.f32 %v1372, 0.6931472
    %v1374 = vlog2.pop %v1343
    %v1375 = vmul.f32 %v1374, 0.6931472
    %v1376 = vlog2.pop %v1345
    %v1377 = vmul.f32 %v1376, 0.6931472
    %v1378 = vlog2.pop %v1347
    %v1379 = vmul.f32 %v1378, 0.6931472
    %v1380 = vlog2.pop %v1349
    %v1381 = vmul.f32 %v1380, 0.6931472
    %v1382 = vlog2.pop %v1351
    %v1383 = vmul.f32 %v1382, 0.6931472
    %v1384 = vlog2.pop %v1353
    %v1385 = vmul.f32 %v1384, 0.6931472
    %v1386 = vlog2.pop %v1355
    %v1387 = vmul.f32 %v1386, 0.6931472
    %v1388 = vlog2.pop %v1357
    %v1389 = vmul.f32 %v1388, 0.6931472
    %v1390 = vlog2.pop %v1359
    %v1391 = vmul.f32 %v1390, 0.6931472
    %v1392 = vlog2.pop %v1361
    %v1393 = vmul.f32 %v1392, 0.6931472
    %v1394 = vlog2.pop %v1363
    %v1395 = vmul.f32 %v1394, 0.6931472
    %v1396 = vlog2.pop %v1365
    %v1397 = vmul.f32 %v1396, 0.6931472
    %v1398 = vlog2.pop %v1367
    %v1399 = vmul.f32 %v1398, 0.6931472
    %v1400 = vlog2.pop %v1369
    %v1401 = vmul.f32 %v1400, 0.6931472
    %v1402 = vlog2.pop %v1371
    %v1403 = vmul.f32 %v1402, 0.6931472
    %v1404 = vsub.f32 %v1276, %v1373
    %v1405 = vsub.f32 %v1277, %v1375
    %v1406 = vsub.f32 %v1278, %v1377
    %v1407 = vsub.f32 %v1279, %v1379
    %v1408 = vsub.f32 %v1280, %v1381
    %v1409 = vsub.f32 %v1281, %v1383
    %v1410 = vsub.f32 %v1282, %v1385
    %v1411 = vsub.f32 %v1283, %v1387
    %v1412 = vsub.f32 %v1284, %v1389
    %v1413 = vsub.f32 %v1285, %v1391
    %v1414 = vsub.f32 %v1286, %v1393
    %v1415 = vsub.f32 %v1287, %v1395
    %v1416 = vsub.f32 %v1288, %v1397
    %v1417 = vsub.f32 %v1289, %v1399
    %v1418 = vsub.f32 %v1290, %v1401
    %v1419 = vsub.f32 %v1291, %v1403
    %v1420 = vsel %vm1227, %v1404, 0.0
    %v1421 = vsel %vm1227, %v1405, 0.0
    %v1422 = vsel %vm1227, %v1406, 0.0
    %v1423 = vsel %vm1227, %v1407, 0.0
    %v1424 = vsel %vm1227, %v1408, 0.0
    %v1425 = vsel %vm1227, %v1409, 0.0
    %v1426 = vsel %vm1227, %v1410, 0.0
    %v1427 = vsel %vm1227, %v1411, 0.0
    %v1428 = vsel %vm1227, %v1412, 0.0
    %v1429 = vsel %vm1227, %v1413, 0.0
    %v1430 = vsel %vm1227, %v1414, 0.0
    %v1431 = vsel %vm1227, %v1415, 0.0
    %v1432 = vsel %vm1227, %v1416, 0.0
    %v1433 = vsel %vm1227, %v1417, 0.0
    %v1434 = vsel %vm1227, %v1418, 0.0
    %v1435 = vsel %vm1227, %v1419, 0.0
    %1436 = vst [vmem:[%s4] sm:$0xff] %v1420
    %1437 = vst [vmem:[%s4 + $0x8] sm:$0xff] %v1421
    %1438 = vst [vmem:[%s4 + $0x10] sm:$0xff] %v1422
    %1439 = vst [vmem:[%s4 + $0x18] sm:$0xff] %v1423
    %1440 = vst [vmem:[%s4 + $0x20] sm:$0xff] %v1424
    %1441 = vst [vmem:[%s4 + $0x28] sm:$0xff] %v1425
    %1442 = vst [vmem:[%s4 + $0x30] sm:$0xff] %v1426
    %1443 = vst [vmem:[%s4 + $0x38] sm:$0xff] %v1427
    %1444 = vst [vmem:[%s4 + $0x40] sm:$0xff] %v1428
    %1445 = vst [vmem:[%s4 + $0x48] sm:$0xff] %v1429
    %1446 = vst [vmem:[%s4 + $0x50] sm:$0xff] %v1430
    %1447 = vst [vmem:[%s4 + $0x58] sm:$0xff] %v1431
    %1448 = vst [vmem:[%s4 + $0x60] sm:$0xff] %v1432
    %1449 = vst [vmem:[%s4 + $0x68] sm:$0xff] %v1433
    %1450 = vst [vmem:[%s4 + $0x70] sm:$0xff] %v1434
    %1451 = vst [vmem:[%s4 + $0x78] sm:$0xff] %v1435
  $region25: #{gat_forward.5} parent=0 // pred_fallthru
    _
  // Predicated region
  $region26: #{gat_forward.5} parent=0 // pred_check
    _
  $region27: #{gat_forward.5} parent=0 // pred_check_branch
    %1453 = sbr.rel (0) target = $region29
  $region28: #{gat_forward.5} parent=0 // pred_region
    _
  $region29: #{gat_forward.5} parent=0 // pred_fallthru
    _
  // Predicated region
  $region30: #{gat_forward.5} parent=0 // pred_check
    _
  $region31: #{gat_forward.5} parent=0 // pred_check_branch
    %1455 = sbr.rel (0) target = $region33
  $region32: #{gat_forward.5} parent=0 // pred_region
    _
  $region33: #{gat_forward.5} parent=0 // pred_fallthru
    _

// kernel: gat_forward.4
$region0: #{gat_forward.4}
  #allocation0 [shape = 'u32[]', space=smem, size = 0x4, offset = 0x4, fixed_abs, tag = 'smem constant byte address 0x4 - core index']
  #allocation1 [shape = 'u32[144,128]{1,0:T(1,128)}', space=vmem, size = 0x12000, scoped, tag = 'internal scratch']
  #allocation2 [shape = 'f32[128,1]{1,0:T(8,128)}', space=vmem, size = 0x10000, scoped, tag = 'scratch operand']
  #allocation3 [shape = 'f32[128,1]{1,0:T(8,128)}', space=vmem, size = 0x10000, scoped, tag = 'scratch operand']
  #allocation4 [shape = 'f32[128,128]{1,0:T(8,128)}', space=vmem, size = 0x10000, scoped, tag = 'scratch operand']
  %s0 = inlined_call_operand.vmem [shape: f32[128,1], index: 0, kind: input, shape index: {}]
  %s1 = inlined_call_operand.vmem [shape: f32[1,128], index: 1, kind: input, shape index: {}]
  %s2 = inlined_call_operand.vmem [shape: s8[128,128], index: 2, kind: input, shape index: {}]
  %s3 = inlined_call_operand.vmem [shape: bf16[128,128], index: 3, kind: input, shape index: {}]
  %s4 = inlined_call_operand.vmem [shape: bf16[128,128], index: 4, kind: input, shape index: {}]
  %s5 = inlined_call_operand.vmem [shape: f32[128,2], index: 5, kind: input, shape index: {}]
  %s6 = inlined_call_operand.vmem [shape: bf16[128,128], index: 6, kind: output, shape index: {0}]
  %s7 = inlined_call_operand.vmem [shape: f32[128,2], index: 7, kind: output, shape index: {1}]
  %8 = xla_tuple %s6, %s7
  %s9 = sld [smem:[#allocation0]]
  $region50: #{gat_forward.4} parent=0
    _
  %s11 = ssub.s32 1, %s9
  %s12 = scalar_select 0, %s11, %s9
  // Predicated region
  $region2: #{gat_forward.4} parent=0 // pred_check
    _
  $region3: #{gat_forward.4} parent=0 // pred_check_branch
    %14 = sbr.rel (0) target = $region5
  $region4: #{gat_forward.4} parent=0 // pred_region
    _
  $region5: #{gat_forward.4} parent=0 // pred_fallthru
    _
  // Predicated region
  $region6: #{gat_forward.4} parent=0 // pred_check
    _
  $region7: #{gat_forward.4} parent=0 // pred_check_branch
    %16 = sbr.rel (0) target = $region9
  $region8: #{gat_forward.4} parent=0 // pred_region
    _
  $region9: #{gat_forward.4} parent=0 // pred_fallthru
    _
  // Predicated region
  $region10: #{gat_forward.4} parent=0 // pred_check
    _
  $region11: #{gat_forward.4} parent=0 // pred_check_branch
    %18 = sbr.rel (0) target = $region13
  $region12: #{gat_forward.4} parent=0 // pred_region
    _
  $region13: #{gat_forward.4} parent=0 // pred_fallthru
    _
  // Predicated region
  $region14: #{gat_forward.4} parent=0 // pred_check
    _
  $region15: #{gat_forward.4} parent=0 // pred_check_branch
    %20 = sbr.rel (0) target = $region17
  $region16: #{gat_forward.4} parent=0 // pred_region
    _
  $region17: #{gat_forward.4} parent=0 // pred_fallthru
    _
  // Predicated region
  $region18: #{gat_forward.4} parent=0 // pred_check
    _
  $region19: #{gat_forward.4} parent=0 // pred_check_branch
    %22 = sbr.rel (0) target = $region21
  $region20: #{gat_forward.4} parent=0 // pred_region
    _
  $region21: #{gat_forward.4} parent=0 // pred_fallthru
    _
  // Predicated region
  $region22: #{gat_forward.4} parent=0 // pred_check
    _
  $region23: #{gat_forward.4} parent=0 // pred_check_branch
    %24 = sbr.rel (0) target = $region25
  $region24: #{gat_forward.4} parent=0 // pred_region
    _
  $region25: #{gat_forward.4} parent=0 // pred_fallthru
    _
  %p28 = scmp.eq.s32.totalorder 0, 0
  // Predicated region
  $region26: #{gat_forward.4} parent=0 // pred_check
    %p29 = pneg %p28
  $region27: #{gat_forward.4} parent=0 // pred_check_branch
    %31 = sbr.rel (%p29) target = $region29
  $region28: #{gat_forward.4} parent=0 // pred_region
    %vm32 = vcmask 7168
    %33 = vst.msk [vmem:[#allocation2] sm:$0xff] %vm32, -1e+30
    %34 = vst.msk [vmem:[#allocation2 + $0x8] sm:$0xff] %vm32, -1e+30
    %35 = vst.msk [vmem:[#allocation2 + $0x10] sm:$0xff] %vm32, -1e+30
    %36 = vst.msk [vmem:[#allocation2 + $0x18] sm:$0xff] %vm32, -1e+30
    %37 = vst.msk [vmem:[#allocation2 + $0x20] sm:$0xff] %vm32, -1e+30
    %38 = vst.msk [vmem:[#allocation2 + $0x28] sm:$0xff] %vm32, -1e+30
    %39 = vst.msk [vmem:[#allocation2 + $0x30] sm:$0xff] %vm32, -1e+30
    %40 = vst.msk [vmem:[#allocation2 + $0x38] sm:$0xff] %vm32, -1e+30
    %41 = vst.msk [vmem:[#allocation2 + $0x40] sm:$0xff] %vm32, -1e+30
    %42 = vst.msk [vmem:[#allocation2 + $0x48] sm:$0xff] %vm32, -1e+30
    %43 = vst.msk [vmem:[#allocation2 + $0x50] sm:$0xff] %vm32, -1e+30
    %44 = vst.msk [vmem:[#allocation2 + $0x58] sm:$0xff] %vm32, -1e+30
    %45 = vst.msk [vmem:[#allocation2 + $0x60] sm:$0xff] %vm32, -1e+30
    %46 = vst.msk [vmem:[#allocation2 + $0x68] sm:$0xff] %vm32, -1e+30
    %47 = vst.msk [vmem:[#allocation2 + $0x70] sm:$0xff] %vm32, -1e+30
    %48 = vst.msk [vmem:[#allocation2 + $0x78] sm:$0xff] %vm32, -1e+30
    %49 = vst.msk [vmem:[#allocation3] sm:$0xff] %vm32, 0.0
    %50 = vst.msk [vmem:[#allocation3 + $0x8] sm:$0xff] %vm32, 0.0
    %51 = vst.msk [vmem:[#allocation3 + $0x10] sm:$0xff] %vm32, 0.0
    %52 = vst.msk [vmem:[#allocation3 + $0x18] sm:$0xff] %vm32, 0.0
    %53 = vst.msk [vmem:[#allocation3 + $0x20] sm:$0xff] %vm32, 0.0
    %54 = vst.msk [vmem:[#allocation3 + $0x28] sm:$0xff] %vm32, 0.0
    %55 = vst.msk [vmem:[#allocation3 + $0x30] sm:$0xff] %vm32, 0.0
    %56 = vst.msk [vmem:[#allocation3 + $0x38] sm:$0xff] %vm32, 0.0
    %57 = vst.msk [vmem:[#allocation3 + $0x40] sm:$0xff] %vm32, 0.0
    %58 = vst.msk [vmem:[#allocation3 + $0x48] sm:$0xff] %vm32, 0.0
    %59 = vst.msk [vmem:[#allocation3 + $0x50] sm:$0xff] %vm32, 0.0
    %60 = vst.msk [vmem:[#allocation3 + $0x58] sm:$0xff] %vm32, 0.0
    %61 = vst.msk [vmem:[#allocation3 + $0x60] sm:$0xff] %vm32, 0.0
    %62 = vst.msk [vmem:[#allocation3 + $0x68] sm:$0xff] %vm32, 0.0
    %63 = vst.msk [vmem:[#allocation3 + $0x70] sm:$0xff] %vm32, 0.0
    %64 = vst.msk [vmem:[#allocation3 + $0x78] sm:$0xff] %vm32, 0.0
    %65 = vst [vmem:[#allocation4] sm:$0xff] 0.0
    %66 = vst [vmem:[#allocation4 + $0x8] sm:$0xff] 0.0
    %67 = vst [vmem:[#allocation4 + $0x10] sm:$0xff] 0.0
    %68 = vst [vmem:[#allocation4 + $0x18] sm:$0xff] 0.0
    %69 = vst [vmem:[#allocation4 + $0x20] sm:$0xff] 0.0
    %70 = vst [vmem:[#allocation4 + $0x28] sm:$0xff] 0.0
    %71 = vst [vmem:[#allocation4 + $0x30] sm:$0xff] 0.0
    %72 = vst [vmem:[#allocation4 + $0x38] sm:$0xff] 0.0
    %73 = vst [vmem:[#allocation4 + $0x40] sm:$0xff] 0.0
    %74 = vst [vmem:[#allocation4 + $0x48] sm:$0xff] 0.0
    %75 = vst [vmem:[#allocation4 + $0x50] sm:$0xff] 0.0
    %76 = vst [vmem:[#allocation4 + $0x58] sm:$0xff] 0.0
    %77 = vst [vmem:[#allocation4 + $0x60] sm:$0xff] 0.0
    %78 = vst [vmem:[#allocation4 + $0x68] sm:$0xff] 0.0
    %79 = vst [vmem:[#allocation4 + $0x70] sm:$0xff] 0.0
    %80 = vst [vmem:[#allocation4 + $0x78] sm:$0xff] 0.0
  $region29: #{gat_forward.4} parent=0 // pred_fallthru
    _
  %v81 = vld [vmem:[%s0] sm:$0xff]
  %v82 = vld [vmem:[%s0 + $0x8] sm:$0xff]
  %v83 = vld [vmem:[%s0 + $0x10] sm:$0xff]
  %v84 = vld [vmem:[%s0 + $0x18] sm:$0xff]
  %v85 = vld [vmem:[%s0 + $0x20] sm:$0xff]
  %v86 = vld [vmem:[%s0 + $0x28] sm:$0xff]
  %v87 = vld [vmem:[%s0 + $0x30] sm:$0xff]
  %v88 = vld [vmem:[%s0 + $0x38] sm:$0xff]
  %v89 = vld [vmem:[%s0 + $0x40] sm:$0xff]
  %v90 = vld [vmem:[%s0 + $0x48] sm:$0xff]
  %v91 = vld [vmem:[%s0 + $0x50] sm:$0xff]
  %v92 = vld [vmem:[%s0 + $0x58] sm:$0xff]
  %v93 = vld [vmem:[%s0 + $0x60] sm:$0xff]
  %v94 = vld [vmem:[%s0 + $0x68] sm:$0xff]
  %v95 = vld [vmem:[%s0 + $0x70] sm:$0xff]
  %v96 = vld [vmem:[%s0 + $0x78] sm:$0xff]
  %v97 = vld [vmem:[%s1] sm:$0x1]
  %99 = vset.pattern.permute.xlu0 0
  %100 = vperm.xlu0 %99, %v81
  %v101 = vpop.permute.xlu0 %100
  %104 = vset.pattern.permute.xlu0 0
  %105 = vperm.xlu0 %104, %v82
  %v106 = vpop.permute.xlu0 %105
  %109 = vset.pattern.permute.xlu0 0
  %110 = vperm.xlu0 %109, %v83
  %v111 = vpop.permute.xlu0 %110
  %114 = vset.pattern.permute.xlu0 0
  %115 = vperm.xlu0 %114, %v84
  %v116 = vpop.permute.xlu0 %115
  %119 = vset.pattern.permute.xlu0 0
  %120 = vperm.xlu0 %119, %v85
  %v121 = vpop.permute.xlu0 %120
  %124 = vset.pattern.permute.xlu0 0
  %125 = vperm.xlu0 %124, %v86
  %v126 = vpop.permute.xlu0 %125
  %129 = vset.pattern.permute.xlu0 0
  %130 = vperm.xlu0 %129, %v87
  %v131 = vpop.permute.xlu0 %130
  %134 = vset.pattern.permute.xlu0 0
  %135 = vperm.xlu0 %134, %v88
  %v136 = vpop.permute.xlu0 %135
  %139 = vset.pattern.permute.xlu0 0
  %140 = vperm.xlu0 %139, %v89
  %v141 = vpop.permute.xlu0 %140
  %144 = vset.pattern.permute.xlu0 0
  %145 = vperm.xlu0 %144, %v90
  %v146 = vpop.permute.xlu0 %145
  %149 = vset.pattern.permute.xlu0 0
  %150 = vperm.xlu0 %149, %v91
  %v151 = vpop.permute.xlu0 %150
  %154 = vset.pattern.permute.xlu0 0
  %155 = vperm.xlu0 %154, %v92
  %v156 = vpop.permute.xlu0 %155
  %159 = vset.pattern.permute.xlu0 0
  %160 = vperm.xlu0 %159, %v93
  %v161 = vpop.permute.xlu0 %160
  %164 = vset.pattern.permute.xlu0 0
  %165 = vperm.xlu0 %164, %v94
  %v166 = vpop.permute.xlu0 %165
  %169 = vset.pattern.permute.xlu0 0
  %170 = vperm.xlu0 %169, %v95
  %v171 = vpop.permute.xlu0 %170
  %174 = vset.pattern.permute.xlu0 0
  %175 = vperm.xlu0 %174, %v96
  %v176 = vpop.permute.xlu0 %175
  %v179 = vlaneseq
  %v180 = vshrl.u32 %v179, 7
  %v181 = vsub.s32 0, %v180
  %v182 = vrot.slane %v97, %v181
  %v184 = vadd.f32 %v101, %v182
  %v185 = vadd.f32 %v106, %v182
  %v186 = vadd.f32 %v111, %v182
  %v187 = vadd.f32 %v116, %v182
  %v188 = vadd.f32 %v121, %v182
  %v189 = vadd.f32 %v126, %v182
  %v190 = vadd.f32 %v131, %v182
  %v191 = vadd.f32 %v136, %v182
  %v192 = vadd.f32 %v141, %v182
  %v193 = vadd.f32 %v146, %v182
  %v194 = vadd.f32 %v151, %v182
  %v195 = vadd.f32 %v156, %v182
  %v196 = vadd.f32 %v161, %v182
  %v197 = vadd.f32 %v166, %v182
  %v198 = vadd.f32 %v171, %v182
  %v199 = vadd.f32 %v176, %v182
  %vm200 = vcmp.ge.f32.partialorder %v184, 0.0
  %vm201 = vcmp.ge.f32.partialorder %v185, 0.0
  %vm202 = vcmp.ge.f32.partialorder %v186, 0.0
  %vm203 = vcmp.ge.f32.partialorder %v187, 0.0
  %vm204 = vcmp.ge.f32.partialorder %v188, 0.0
  %vm205 = vcmp.ge.f32.partialorder %v189, 0.0
  %vm206 = vcmp.ge.f32.partialorder %v190, 0.0
  %vm207 = vcmp.ge.f32.partialorder %v191, 0.0
  %vm208 = vcmp.ge.f32.partialorder %v192, 0.0
  %vm209 = vcmp.ge.f32.partialorder %v193, 0.0
  %vm210 = vcmp.ge.f32.partialorder %v194, 0.0
  %vm211 = vcmp.ge.f32.partialorder %v195, 0.0
  %vm212 = vcmp.ge.f32.partialorder %v196, 0.0
  %vm213 = vcmp.ge.f32.partialorder %v197, 0.0
  %vm214 = vcmp.ge.f32.partialorder %v198, 0.0
  %vm215 = vcmp.ge.f32.partialorder %v199, 0.0
  %v216 = vmul.f32 %v184, 0.01
  %v217 = vmul.f32 %v185, 0.01
  %v218 = vmul.f32 %v186, 0.01
  %v219 = vmul.f32 %v187, 0.01
  %v220 = vmul.f32 %v188, 0.01
  %v221 = vmul.f32 %v189, 0.01
  %v222 = vmul.f32 %v190, 0.01
  %v223 = vmul.f32 %v191, 0.01
  %v224 = vmul.f32 %v192, 0.01
  %v225 = vmul.f32 %v193, 0.01
  %v226 = vmul.f32 %v194, 0.01
  %v227 = vmul.f32 %v195, 0.01
  %v228 = vmul.f32 %v196, 0.01
  %v229 = vmul.f32 %v197, 0.01
  %v230 = vmul.f32 %v198, 0.01
  %v231 = vmul.f32 %v199, 0.01
  %v232 = vsel %vm200, %v184, %v216
  %v233 = vsel %vm201, %v185, %v217
  %v234 = vsel %vm202, %v186, %v218
  %v235 = vsel %vm203, %v187, %v219
  %v236 = vsel %vm204, %v188, %v220
  %v237 = vsel %vm205, %v189, %v221
  %v238 = vsel %vm206, %v190, %v222
  %v239 = vsel %vm207, %v191, %v223
  %v240 = vsel %vm208, %v192, %v224
  %v241 = vsel %vm209, %v193, %v225
  %v242 = vsel %vm210, %v194, %v226
  %v243 = vsel %vm211, %v195, %v227
  %v244 = vsel %vm212, %v196, %v228
  %v245 = vsel %vm213, %v197, %v229
  %v246 = vsel %vm214, %v198, %v230
  %v247 = vsel %vm215, %v199, %v231
  %v248 = vld [vmem:[%s2] sm:$0xff]
  %v249 = vld [vmem:[%s2 + $0x8] sm:$0xff]
  %v250 = vld [vmem:[%s2 + $0x10] sm:$0xff]
  %v251 = vld [vmem:[%s2 + $0x18] sm:$0xff]
  %vm252 = vnez %v248
  %vm253 = vnez %v249
  %vm254 = vnez %v250
  %vm255 = vnez %v251
  %v256 = vsel %vm252, 16843009, 0
  %v257 = vsel %vm253, 16843009, 0
  %v258 = vsel %vm254, 16843009, 0
  %v259 = vsel %vm255, 16843009, 0
  %v260 = vunpack.c.0.s8 %v256
  %v261 = vunpack.c.1.s8 %v256
  %v262 = vunpack.c.2.s8 %v256
  %v263 = vunpack.c.3.s8 %v256
  %v264 = vunpack.c.0.s8 %v257
  %v265 = vunpack.c.1.s8 %v257
  %v266 = vunpack.c.2.s8 %v257
  %v267 = vunpack.c.3.s8 %v257
  %v268 = vunpack.c.0.s8 %v258
  %v269 = vunpack.c.1.s8 %v258
  %v270 = vunpack.c.2.s8 %v258
  %v271 = vunpack.c.3.s8 %v258
  %v272 = vunpack.c.0.s8 %v259
  %v273 = vunpack.c.1.s8 %v259
  %v274 = vunpack.c.2.s8 %v259
  %v275 = vunpack.c.3.s8 %v259
  %v276 = vpack.c.b16 %v260, %v260
  %v277 = vpack.c.b8 %v276, %v276
  %v278 = vpack.c.b16 %v261, %v261
  %v279 = vpack.c.b8 %v278, %v278
  %v280 = vpack.c.b16 %v262, %v262
  %v281 = vpack.c.b8 %v280, %v280
  %v282 = vpack.c.b16 %v263, %v263
  %v283 = vpack.c.b8 %v282, %v282
  %v284 = vpack.c.b16 %v264, %v264
  %v285 = vpack.c.b8 %v284, %v284
  %v286 = vpack.c.b16 %v265, %v265
  %v287 = vpack.c.b8 %v286, %v286
  %v288 = vpack.c.b16 %v266, %v266
  %v289 = vpack.c.b8 %v288, %v288
  %v290 = vpack.c.b16 %v267, %v267
  %v291 = vpack.c.b8 %v290, %v290
  %v292 = vpack.c.b16 %v268, %v268
  %v293 = vpack.c.b8 %v292, %v292
  %v294 = vpack.c.b16 %v269, %v269
  %v295 = vpack.c.b8 %v294, %v294
  %v296 = vpack.c.b16 %v270, %v270
  %v297 = vpack.c.b8 %v296, %v296
  %v298 = vpack.c.b16 %v271, %v271
  %v299 = vpack.c.b8 %v298, %v298
  %v300 = vpack.c.b16 %v272, %v272
  %v301 = vpack.c.b8 %v300, %v300
  %v302 = vpack.c.b16 %v273, %v273
  %v303 = vpack.c.b8 %v302, %v302
  %v304 = vpack.c.b16 %v274, %v274
  %v305 = vpack.c.b8 %v304, %v304
  %v306 = vpack.c.b16 %v275, %v275
  %v307 = vpack.c.b8 %v306, %v306
  %vm308 = vnez %v277
  %vm309 = vnez %v279
  %vm310 = vnez %v281
  %vm311 = vnez %v283
  %vm312 = vnez %v285
  %vm313 = vnez %v287
  %vm314 = vnez %v289
  %vm315 = vnez %v291
  %vm316 = vnez %v293
  %vm317 = vnez %v295
  %vm318 = vnez %v297
  %vm319 = vnez %v299
  %vm320 = vnez %v301
  %vm321 = vnez %v303
  %vm322 = vnez %v305
  %vm323 = vnez %v307
  %v324 = vsel %vm308, 16843009, 0
  %v325 = vsel %vm309, 16843009, 0
  %v326 = vsel %vm310, 16843009, 0
  %v327 = vsel %vm311, 16843009, 0
  %v328 = vsel %vm312, 16843009, 0
  %v329 = vsel %vm313, 16843009, 0
  %v330 = vsel %vm314, 16843009, 0
  %v331 = vsel %vm315, 16843009, 0
  %v332 = vsel %vm316, 16843009, 0
  %v333 = vsel %vm317, 16843009, 0
  %v334 = vsel %vm318, 16843009, 0
  %v335 = vsel %vm319, 16843009, 0
  %v336 = vsel %vm320, 16843009, 0
  %v337 = vsel %vm321, 16843009, 0
  %v338 = vsel %vm322, 16843009, 0
  %v339 = vsel %vm323, 16843009, 0
  %v340 = vunpack.c.0.s8 %v324
  %v341 = vunpack.c.0.s8 %v325
  %v342 = vunpack.c.0.s8 %v326
  %v343 = vunpack.c.0.s8 %v327
  %v344 = vunpack.c.0.s8 %v328
  %v345 = vunpack.c.0.s8 %v329
  %v346 = vunpack.c.0.s8 %v330
  %v347 = vunpack.c.0.s8 %v331
  %v348 = vunpack.c.0.s8 %v332
  %v349 = vunpack.c.0.s8 %v333
  %v350 = vunpack.c.0.s8 %v334
  %v351 = vunpack.c.0.s8 %v335
  %v352 = vunpack.c.0.s8 %v336
  %v353 = vunpack.c.0.s8 %v337
  %v354 = vunpack.c.0.s8 %v338
  %v355 = vunpack.c.0.s8 %v339
  %vm356 = vcmp.ne.s32.totalorder %v340, 0
  %vm357 = vcmp.ne.s32.totalorder %v341, 0
  %vm358 = vcmp.ne.s32.totalorder %v342, 0
  %vm359 = vcmp.ne.s32.totalorder %v343, 0
  %vm360 = vcmp.ne.s32.totalorder %v344, 0
  %vm361 = vcmp.ne.s32.totalorder %v345, 0
  %vm362 = vcmp.ne.s32.totalorder %v346, 0
  %vm363 = vcmp.ne.s32.totalorder %v347, 0
  %vm364 = vcmp.ne.s32.totalorder %v348, 0
  %vm365 = vcmp.ne.s32.totalorder %v349, 0
  %vm366 = vcmp.ne.s32.totalorder %v350, 0
  %vm367 = vcmp.ne.s32.totalorder %v351, 0
  %vm368 = vcmp.ne.s32.totalorder %v352, 0
  %vm369 = vcmp.ne.s32.totalorder %v353, 0
  %vm370 = vcmp.ne.s32.totalorder %v354, 0
  %vm371 = vcmp.ne.s32.totalorder %v355, 0
  %v372 = vsel %vm356, %v232, -1e+30
  %v373 = vsel %vm357, %v233, -1e+30
  %v374 = vsel %vm358, %v234, -1e+30
  %v375 = vsel %vm359, %v235, -1e+30
  %v376 = vsel %vm360, %v236, -1e+30
  %v377 = vsel %vm361, %v237, -1e+30
  %v378 = vsel %vm362, %v238, -1e+30
  %v379 = vsel %vm363, %v239, -1e+30
  %v380 = vsel %vm364, %v240, -1e+30
  %v381 = vsel %vm365, %v241, -1e+30
  %v382 = vsel %vm366, %v242, -1e+30
  %v383 = vsel %vm367, %v243, -1e+30
  %v384 = vsel %vm368, %v244, -1e+30
  %v385 = vsel %vm369, %v245, -1e+30
  %v386 = vsel %vm370, %v246, -1e+30
  %v387 = vsel %vm371, %v247, -1e+30
  %v388 = vld [vmem:[#allocation2] sm:$0xff]
  %v389 = vld [vmem:[#allocation2 + $0x8] sm:$0xff]
  %v390 = vld [vmem:[#allocation2 + $0x10] sm:$0xff]
  %v391 = vld [vmem:[#allocation2 + $0x18] sm:$0xff]
  %v392 = vld [vmem:[#allocation2 + $0x20] sm:$0xff]
  %v393 = vld [vmem:[#allocation2 + $0x28] sm:$0xff]
  %v394 = vld [vmem:[#allocation2 + $0x30] sm:$0xff]
  %v395 = vld [vmem:[#allocation2 + $0x38] sm:$0xff]
  %v396 = vld [vmem:[#allocation2 + $0x40] sm:$0xff]
  %v397 = vld [vmem:[#allocation2 + $0x48] sm:$0xff]
  %v398 = vld [vmem:[#allocation2 + $0x50] sm:$0xff]
  %v399 = vld [vmem:[#allocation2 + $0x58] sm:$0xff]
  %v400 = vld [vmem:[#allocation2 + $0x60] sm:$0xff]
  %v401 = vld [vmem:[#allocation2 + $0x68] sm:$0xff]
  %v402 = vld [vmem:[#allocation2 + $0x70] sm:$0xff]
  %v403 = vld [vmem:[#allocation2 + $0x78] sm:$0xff]
  %404 = vmax.xlane.f32.xlu0 %v372
  %v405 = vpop.xlane.xlu0 %404
  %406 = vmax.xlane.f32.xlu0 %v373
  %v407 = vpop.xlane.xlu0 %406
  %408 = vmax.xlane.f32.xlu0 %v374
  %v409 = vpop.xlane.xlu0 %408
  %410 = vmax.xlane.f32.xlu0 %v375
  %v411 = vpop.xlane.xlu0 %410
  %412 = vmax.xlane.f32.xlu0 %v376
  %v413 = vpop.xlane.xlu0 %412
  %414 = vmax.xlane.f32.xlu0 %v377
  %v415 = vpop.xlane.xlu0 %414
  %416 = vmax.xlane.f32.xlu0 %v378
  %v417 = vpop.xlane.xlu0 %416
  %418 = vmax.xlane.f32.xlu0 %v379
  %v419 = vpop.xlane.xlu0 %418
  %420 = vmax.xlane.f32.xlu0 %v380
  %v421 = vpop.xlane.xlu0 %420
  %422 = vmax.xlane.f32.xlu0 %v381
  %v423 = vpop.xlane.xlu0 %422
  %424 = vmax.xlane.f32.xlu0 %v382
  %v425 = vpop.xlane.xlu0 %424
  %426 = vmax.xlane.f32.xlu0 %v383
  %v427 = vpop.xlane.xlu0 %426
  %428 = vmax.xlane.f32.xlu0 %v384
  %v429 = vpop.xlane.xlu0 %428
  %430 = vmax.xlane.f32.xlu0 %v385
  %v431 = vpop.xlane.xlu0 %430
  %432 = vmax.xlane.f32.xlu0 %v386
  %v433 = vpop.xlane.xlu0 %432
  %434 = vmax.xlane.f32.xlu0 %v387
  %v435 = vpop.xlane.xlu0 %434
  %v436 = vmax.f32 %v388, %v405
  %v437 = vmax.f32 %v389, %v407
  %v438 = vmax.f32 %v390, %v409
  %v439 = vmax.f32 %v391, %v411
  %v440 = vmax.f32 %v392, %v413
  %v441 = vmax.f32 %v393, %v415
  %v442 = vmax.f32 %v394, %v417
  %v443 = vmax.f32 %v395, %v419
  %v444 = vmax.f32 %v396, %v421
  %v445 = vmax.f32 %v397, %v423
  %v446 = vmax.f32 %v398, %v425
  %v447 = vmax.f32 %v399, %v427
  %v448 = vmax.f32 %v400, %v429
  %v449 = vmax.f32 %v401, %v431
  %v450 = vmax.f32 %v402, %v433
  %v451 = vmax.f32 %v403, %v435
  %v452 = vsub.f32 %v388, %v436
  %v453 = vsub.f32 %v389, %v437
  %v454 = vsub.f32 %v390, %v438
  %v455 = vsub.f32 %v391, %v439
  %v456 = vsub.f32 %v392, %v440
  %v457 = vsub.f32 %v393, %v441
  %v458 = vsub.f32 %v394, %v442
  %v459 = vsub.f32 %v395, %v443
  %v460 = vsub.f32 %v396, %v444
  %v461 = vsub.f32 %v397, %v445
  %v462 = vsub.f32 %v398, %v446
  %v463 = vsub.f32 %v399, %v447
  %v464 = vsub.f32 %v400, %v448
  %v465 = vsub.f32 %v401, %v449
  %v466 = vsub.f32 %v402, %v450
  %v467 = vsub.f32 %v403, %v451
  %v468 = vmul.f32 %v452, 1.442695
  %v469 = vpow.pop %v468
  %v470 = vmul.f32 %v453, 1.442695
  %v471 = vpow.pop %v470
  %v472 = vmul.f32 %v454, 1.442695
  %v473 = vpow.pop %v472
  %v474 = vmul.f32 %v455, 1.442695
  %v475 = vpow.pop %v474
  %v476 = vmul.f32 %v456, 1.442695
  %v477 = vpow.pop %v476
  %v478 = vmul.f32 %v457, 1.442695
  %v479 = vpow.pop %v478
  %v480 = vmul.f32 %v458, 1.442695
  %v481 = vpow.pop %v480
  %v482 = vmul.f32 %v459, 1.442695
  %v483 = vpow.pop %v482
  %v484 = vmul.f32 %v460, 1.442695
  %v485 = vpow.pop %v484
  %v486 = vmul.f32 %v461, 1.442695
  %v487 = vpow.pop %v486
  %v488 = vmul.f32 %v462, 1.442695
  %v489 = vpow.pop %v488
  %v490 = vmul.f32 %v463, 1.442695
  %v491 = vpow.pop %v490
  %v492 = vmul.f32 %v464, 1.442695
  %v493 = vpow.pop %v492
  %v494 = vmul.f32 %v465, 1.442695
  %v495 = vpow.pop %v494
  %v496 = vmul.f32 %v466, 1.442695
  %v497 = vpow.pop %v496
  %v498 = vmul.f32 %v467, 1.442695
  %v499 = vpow.pop %v498
  %501 = vset.pattern.permute.xlu0 0
  %502 = vperm.xlu0 %501, %v436
  %v503 = vpop.permute.xlu0 %502
  %506 = vset.pattern.permute.xlu0 0
  %507 = vperm.xlu0 %506, %v437
  %v508 = vpop.permute.xlu0 %507
  %511 = vset.pattern.permute.xlu0 0
  %512 = vperm.xlu0 %511, %v438
  %v513 = vpop.permute.xlu0 %512
  %516 = vset.pattern.permute.xlu0 0
  %517 = vperm.xlu0 %516, %v439
  %v518 = vpop.permute.xlu0 %517
  %521 = vset.pattern.permute.xlu0 0
  %522 = vperm.xlu0 %521, %v440
  %v523 = vpop.permute.xlu0 %522
  %526 = vset.pattern.permute.xlu0 0
  %527 = vperm.xlu0 %526, %v441
  %v528 = vpop.permute.xlu0 %527
  %531 = vset.pattern.permute.xlu0 0
  %532 = vperm.xlu0 %531, %v442
  %v533 = vpop.permute.xlu0 %532
  %536 = vset.pattern.permute.xlu0 0
  %537 = vperm.xlu0 %536, %v443
  %v538 = vpop.permute.xlu0 %537
  %541 = vset.pattern.permute.xlu0 0
  %542 = vperm.xlu0 %541, %v444
  %v543 = vpop.permute.xlu0 %542
  %546 = vset.pattern.permute.xlu0 0
  %547 = vperm.xlu0 %546, %v445
  %v548 = vpop.permute.xlu0 %547
  %551 = vset.pattern.permute.xlu0 0
  %552 = vperm.xlu0 %551, %v446
  %v553 = vpop.permute.xlu0 %552
  %556 = vset.pattern.permute.xlu0 0
  %557 = vperm.xlu0 %556, %v447
  %v558 = vpop.permute.xlu0 %557
  %561 = vset.pattern.permute.xlu0 0
  %562 = vperm.xlu0 %561, %v448
  %v563 = vpop.permute.xlu0 %562
  %566 = vset.pattern.permute.xlu0 0
  %567 = vperm.xlu0 %566, %v449
  %v568 = vpop.permute.xlu0 %567
  %571 = vset.pattern.permute.xlu0 0
  %572 = vperm.xlu0 %571, %v450
  %v573 = vpop.permute.xlu0 %572
  %576 = vset.pattern.permute.xlu0 0
  %577 = vperm.xlu0 %576, %v451
  %v578 = vpop.permute.xlu0 %577
  %v580 = vsub.f32 %v372, %v503
  %v581 = vsub.f32 %v373, %v508
  %v582 = vsub.f32 %v374, %v513
  %v583 = vsub.f32 %v375, %v518
  %v584 = vsub.f32 %v376, %v523
  %v585 = vsub.f32 %v377, %v528
  %v586 = vsub.f32 %v378, %v533
  %v587 = vsub.f32 %v379, %v538
  %v588 = vsub.f32 %v380, %v543
  %v589 = vsub.f32 %v381, %v548
  %v590 = vsub.f32 %v382, %v553
  %v591 = vsub.f32 %v383, %v558
  %v592 = vsub.f32 %v384, %v563
  %v593 = vsub.f32 %v385, %v568
  %v594 = vsub.f32 %v386, %v573
  %v595 = vsub.f32 %v387, %v578
  %v596 = vmul.f32 %v580, 1.442695
  %v597 = vpow.pop %v596
  %v598 = vmul.f32 %v581, 1.442695
  %v599 = vpow.pop %v598
  %v600 = vmul.f32 %v582, 1.442695
  %v601 = vpow.pop %v600
  %v602 = vmul.f32 %v583, 1.442695
  %v603 = vpow.pop %v602
  %v604 = vmul.f32 %v584, 1.442695
  %v605 = vpow.pop %v604
  %v606 = vmul.f32 %v585, 1.442695
  %v607 = vpow.pop %v606
  %v608 = vmul.f32 %v586, 1.442695
  %v609 = vpow.pop %v608
  %v610 = vmul.f32 %v587, 1.442695
  %v611 = vpow.pop %v610
  %v612 = vmul.f32 %v588, 1.442695
  %v613 = vpow.pop %v612
  %v614 = vmul.f32 %v589, 1.442695
  %v615 = vpow.pop %v614
  %v616 = vmul.f32 %v590, 1.442695
  %v617 = vpow.pop %v616
  %v618 = vmul.f32 %v591, 1.442695
  %v619 = vpow.pop %v618
  %v620 = vmul.f32 %v592, 1.442695
  %v621 = vpow.pop %v620
  %v622 = vmul.f32 %v593, 1.442695
  %v623 = vpow.pop %v622
  %v624 = vmul.f32 %v594, 1.442695
  %v625 = vpow.pop %v624
  %v626 = vmul.f32 %v595, 1.442695
  %v627 = vpow.pop %v626
  %v628 = vsel %vm356, %v597, 0.0
  %v629 = vsel %vm357, %v599, 0.0
  %v630 = vsel %vm358, %v601, 0.0
  %v631 = vsel %vm359, %v603, 0.0
  %v632 = vsel %vm360, %v605, 0.0
  %v633 = vsel %vm361, %v607, 0.0
  %v634 = vsel %vm362, %v609, 0.0
  %v635 = vsel %vm363, %v611, 0.0
  %v636 = vsel %vm364, %v613, 0.0
  %v637 = vsel %vm365, %v615, 0.0
  %v638 = vsel %vm366, %v617, 0.0
  %v639 = vsel %vm367, %v619, 0.0
  %v640 = vsel %vm368, %v621, 0.0
  %v641 = vsel %vm369, %v623, 0.0
  %v642 = vsel %vm370, %v625, 0.0
  %v643 = vsel %vm371, %v627, 0.0
  %v644 = vld [vmem:[#allocation3] sm:$0xff]
  %v645 = vld [vmem:[#allocation3 + $0x8] sm:$0xff]
  %v646 = vld [vmem:[#allocation3 + $0x10] sm:$0xff]
  %v647 = vld [vmem:[#allocation3 + $0x18] sm:$0xff]
  %v648 = vld [vmem:[#allocation3 + $0x20] sm:$0xff]
  %v649 = vld [vmem:[#allocation3 + $0x28] sm:$0xff]
  %v650 = vld [vmem:[#allocation3 + $0x30] sm:$0xff]
  %v651 = vld [vmem:[#allocation3 + $0x38] sm:$0xff]
  %v652 = vld [vmem:[#allocation3 + $0x40] sm:$0xff]
  %v653 = vld [vmem:[#allocation3 + $0x48] sm:$0xff]
  %v654 = vld [vmem:[#allocation3 + $0x50] sm:$0xff]
  %v655 = vld [vmem:[#allocation3 + $0x58] sm:$0xff]
  %v656 = vld [vmem:[#allocation3 + $0x60] sm:$0xff]
  %v657 = vld [vmem:[#allocation3 + $0x68] sm:$0xff]
  %v658 = vld [vmem:[#allocation3 + $0x70] sm:$0xff]
  %v659 = vld [vmem:[#allocation3 + $0x78] sm:$0xff]
  %v660 = vmul.f32 %v469, %v644
  %v661 = vmul.f32 %v471, %v645
  %v662 = vmul.f32 %v473, %v646
  %v663 = vmul.f32 %v475, %v647
  %v664 = vmul.f32 %v477, %v648
  %v665 = vmul.f32 %v479, %v649
  %v666 = vmul.f32 %v481, %v650
  %v667 = vmul.f32 %v483, %v651
  %v668 = vmul.f32 %v485, %v652
  %v669 = vmul.f32 %v487, %v653
  %v670 = vmul.f32 %v489, %v654
  %v671 = vmul.f32 %v491, %v655
  %v672 = vmul.f32 %v493, %v656
  %v673 = vmul.f32 %v495, %v657
  %v674 = vmul.f32 %v497, %v658
  %v675 = vmul.f32 %v499, %v659
  %676 = vadd.xlane.f32.xlu0 %v628
  %v677 = vpop.xlane.xlu0 %676
  %678 = vadd.xlane.f32.xlu0 %v629
  %v679 = vpop.xlane.xlu0 %678
  %680 = vadd.xlane.f32.xlu0 %v630
  %v681 = vpop.xlane.xlu0 %680
  %682 = vadd.xlane.f32.xlu0 %v631
  %v683 = vpop.xlane.xlu0 %682
  %684 = vadd.xlane.f32.xlu0 %v632
  %v685 = vpop.xlane.xlu0 %684
  %686 = vadd.xlane.f32.xlu0 %v633
  %v687 = vpop.xlane.xlu0 %686
  %688 = vadd.xlane.f32.xlu0 %v634
  %v689 = vpop.xlane.xlu0 %688
  %690 = vadd.xlane.f32.xlu0 %v635
  %v691 = vpop.xlane.xlu0 %690
  %692 = vadd.xlane.f32.xlu0 %v636
  %v693 = vpop.xlane.xlu0 %692
  %694 = vadd.xlane.f32.xlu0 %v637
  %v695 = vpop.xlane.xlu0 %694
  %696 = vadd.xlane.f32.xlu0 %v638
  %v697 = vpop.xlane.xlu0 %696
  %698 = vadd.xlane.f32.xlu0 %v639
  %v699 = vpop.xlane.xlu0 %698
  %700 = vadd.xlane.f32.xlu0 %v640
  %v701 = vpop.xlane.xlu0 %700
  %702 = vadd.xlane.f32.xlu0 %v641
  %v703 = vpop.xlane.xlu0 %702
  %704 = vadd.xlane.f32.xlu0 %v642
  %v705 = vpop.xlane.xlu0 %704
  %706 = vadd.xlane.f32.xlu0 %v643
  %v707 = vpop.xlane.xlu0 %706
  %v708 = vadd.f32 %v660, %v677
  %v709 = vadd.f32 %v661, %v679
  %v710 = vadd.f32 %v662, %v681
  %v711 = vadd.f32 %v663, %v683
  %v712 = vadd.f32 %v664, %v685
  %v713 = vadd.f32 %v665, %v687
  %v714 = vadd.f32 %v666, %v689
  %v715 = vadd.f32 %v667, %v691
  %v716 = vadd.f32 %v668, %v693
  %v717 = vadd.f32 %v669, %v695
  %v718 = vadd.f32 %v670, %v697
  %v719 = vadd.f32 %v671, %v699
  %v720 = vadd.f32 %v672, %v701
  %v721 = vadd.f32 %v673, %v703
  %v722 = vadd.f32 %v674, %v705
  %v723 = vadd.f32 %v675, %v707
  %vm724 = vcmask 7168
  %725 = vst.msk [vmem:[#allocation3] sm:$0xff] %vm724, %v708
  %726 = vst.msk [vmem:[#allocation3 + $0x8] sm:$0xff] %vm724, %v709
  %727 = vst.msk [vmem:[#allocation3 + $0x10] sm:$0xff] %vm724, %v710
  %728 = vst.msk [vmem:[#allocation3 + $0x18] sm:$0xff] %vm724, %v711
  %729 = vst.msk [vmem:[#allocation3 + $0x20] sm:$0xff] %vm724, %v712
  %730 = vst.msk [vmem:[#allocation3 + $0x28] sm:$0xff] %vm724, %v713
  %731 = vst.msk [vmem:[#allocation3 + $0x30] sm:$0xff] %vm724, %v714
  %732 = vst.msk [vmem:[#allocation3 + $0x38] sm:$0xff] %vm724, %v715
  %733 = vst.msk [vmem:[#allocation3 + $0x40] sm:$0xff] %vm724, %v716
  %734 = vst.msk [vmem:[#allocation3 + $0x48] sm:$0xff] %vm724, %v717
  %735 = vst.msk [vmem:[#allocation3 + $0x50] sm:$0xff] %vm724, %v718
  %736 = vst.msk [vmem:[#allocation3 + $0x58] sm:$0xff] %vm724, %v719
  %737 = vst.msk [vmem:[#allocation3 + $0x60] sm:$0xff] %vm724, %v720
  %738 = vst.msk [vmem:[#allocation3 + $0x68] sm:$0xff] %vm724, %v721
  %739 = vst.msk [vmem:[#allocation3 + $0x70] sm:$0xff] %vm724, %v722
  %740 = vst.msk [vmem:[#allocation3 + $0x78] sm:$0xff] %vm724, %v723
  %v741 = vld [vmem:[#allocation4] sm:$0xff]
  %v742 = vld [vmem:[#allocation4 + $0x8] sm:$0xff]
  %v743 = vld [vmem:[#allocation4 + $0x10] sm:$0xff]
  %v744 = vld [vmem:[#allocation4 + $0x18] sm:$0xff]
  %v745 = vld [vmem:[#allocation4 + $0x20] sm:$0xff]
  %v746 = vld [vmem:[#allocation4 + $0x28] sm:$0xff]
  %v747 = vld [vmem:[#allocation4 + $0x30] sm:$0xff]
  %v748 = vld [vmem:[#allocation4 + $0x38] sm:$0xff]
  %v749 = vld [vmem:[#allocation4 + $0x40] sm:$0xff]
  %v750 = vld [vmem:[#allocation4 + $0x48] sm:$0xff]
  %v751 = vld [vmem:[#allocation4 + $0x50] sm:$0xff]
  %v752 = vld [vmem:[#allocation4 + $0x58] sm:$0xff]
  %v753 = vld [vmem:[#allocation4 + $0x60] sm:$0xff]
  %v754 = vld [vmem:[#allocation4 + $0x68] sm:$0xff]
  %v755 = vld [vmem:[#allocation4 + $0x70] sm:$0xff]
  %v756 = vld [vmem:[#allocation4 + $0x78] sm:$0xff]
  %758 = vset.pattern.permute.xlu0 0
  %759 = vperm.xlu0 %758, %v469
  %v760 = vpop.permute.xlu0 %759
  %763 = vset.pattern.permute.xlu0 0
  %764 = vperm.xlu0 %763, %v471
  %v765 = vpop.permute.xlu0 %764
  %768 = vset.pattern.permute.xlu0 0
  %769 = vperm.xlu0 %768, %v473
  %v770 = vpop.permute.xlu0 %769
  %773 = vset.pattern.permute.xlu0 0
  %774 = vperm.xlu0 %773, %v475
  %v775 = vpop.permute.xlu0 %774
  %778 = vset.pattern.permute.xlu0 0
  %779 = vperm.xlu0 %778, %v477
  %v780 = vpop.permute.xlu0 %779
  %783 = vset.pattern.permute.xlu0 0
  %784 = vperm.xlu0 %783, %v479
  %v785 = vpop.permute.xlu0 %784
  %788 = vset.pattern.permute.xlu0 0
  %789 = vperm.xlu0 %788, %v481
  %v790 = vpop.permute.xlu0 %789
  %793 = vset.pattern.permute.xlu0 0
  %794 = vperm.xlu0 %793, %v483
  %v795 = vpop.permute.xlu0 %794
  %798 = vset.pattern.permute.xlu0 0
  %799 = vperm.xlu0 %798, %v485
  %v800 = vpop.permute.xlu0 %799
  %803 = vset.pattern.permute.xlu0 0
  %804 = vperm.xlu0 %803, %v487
  %v805 = vpop.permute.xlu0 %804
  %808 = vset.pattern.permute.xlu0 0
  %809 = vperm.xlu0 %808, %v489
  %v810 = vpop.permute.xlu0 %809
  %813 = vset.pattern.permute.xlu0 0
  %814 = vperm.xlu0 %813, %v491
  %v815 = vpop.permute.xlu0 %814
  %818 = vset.pattern.permute.xlu0 0
  %819 = vperm.xlu0 %818, %v493
  %v820 = vpop.permute.xlu0 %819
  %823 = vset.pattern.permute.xlu0 0
  %824 = vperm.xlu0 %823, %v495
  %v825 = vpop.permute.xlu0 %824
  %828 = vset.pattern.permute.xlu0 0
  %829 = vperm.xlu0 %828, %v497
  %v830 = vpop.permute.xlu0 %829
  %833 = vset.pattern.permute.xlu0 0
  %834 = vperm.xlu0 %833, %v499
  %v835 = vpop.permute.xlu0 %834
  %v837 = vmul.f32 %v760, %v741
  %v838 = vmul.f32 %v765, %v742
  %v839 = vmul.f32 %v770, %v743
  %v840 = vmul.f32 %v775, %v744
  %v841 = vmul.f32 %v780, %v745
  %v842 = vmul.f32 %v785, %v746
  %v843 = vmul.f32 %v790, %v747
  %v844 = vmul.f32 %v795, %v748
  %v845 = vmul.f32 %v800, %v749
  %v846 = vmul.f32 %v805, %v750
  %v847 = vmul.f32 %v810, %v751
  %v848 = vmul.f32 %v815, %v752
  %v849 = vmul.f32 %v820, %v753
  %v850 = vmul.f32 %v825, %v754
  %v851 = vmul.f32 %v830, %v755
  %v852 = vmul.f32 %v835, %v756
  %v853 = vpack.c.bf16 %v629, %v628
  %v854 = vpack.c.bf16 %v631, %v630
  %v855 = vpack.c.bf16 %v633, %v632
  %v856 = vpack.c.bf16 %v635, %v634
  %v857 = vpack.c.bf16 %v637, %v636
  %v858 = vpack.c.bf16 %v639, %v638
  %v859 = vpack.c.bf16 %v641, %v640
  %v860 = vpack.c.bf16 %v643, %v642
  %v861 = vld [vmem:[%s3] sm:$0xf]
  %v862 = vld [vmem:[%s3 + $0x4] sm:$0xf]
  %v863 = vld [vmem:[%s3 + $0x8] sm:$0xf]
  %v864 = vld [vmem:[%s3 + $0xc] sm:$0xf]
  %v865 = vld [vmem:[%s3 + $0x10] sm:$0xf]
  %v866 = vld [vmem:[%s3 + $0x14] sm:$0xf]
  %v867 = vld [vmem:[%s3 + $0x18] sm:$0xf]
  %v868 = vld [vmem:[%s3 + $0x1c] sm:$0xf]
  %v869 = vld [vmem:[%s3 + $0x20] sm:$0xf]
  %v870 = vld [vmem:[%s3 + $0x24] sm:$0xf]
  %v871 = vld [vmem:[%s3 + $0x28] sm:$0xf]
  %v872 = vld [vmem:[%s3 + $0x2c] sm:$0xf]
  %v873 = vld [vmem:[%s3 + $0x30] sm:$0xf]
  %v874 = vld [vmem:[%s3 + $0x34] sm:$0xf]
  %v875 = vld [vmem:[%s3 + $0x38] sm:$0xf]
  %v876 = vld [vmem:[%s3 + $0x3c] sm:$0xf]
  %v893 = vunpack.c.l.b16 %v861
  %v894 = vunpack.c.l.b16 %v862
  %v895 = vunpack.c.l.b16 %v863
  %v896 = vunpack.c.l.b16 %v864
  %v897 = vunpack.c.l.b16 %v865
  %v898 = vunpack.c.l.b16 %v866
  %v899 = vunpack.c.l.b16 %v867
  %v900 = vunpack.c.l.b16 %v868
  %v901 = vunpack.c.l.b16 %v869
  %v902 = vunpack.c.l.b16 %v870
  %v903 = vunpack.c.l.b16 %v871
  %v904 = vunpack.c.l.b16 %v872
  %v905 = vunpack.c.l.b16 %v873
  %v906 = vunpack.c.l.b16 %v874
  %v907 = vunpack.c.l.b16 %v875
  %v908 = vunpack.c.l.b16 %v876
  %v909 = vpack.c.b16 %v894, %v893
  %v910 = vpack.c.b16 %v896, %v895
  %v911 = vpack.c.b16 %v898, %v897
  %v912 = vpack.c.b16 %v900, %v899
  %v913 = vpack.c.b16 %v902, %v901
  %v914 = vpack.c.b16 %v904, %v903
  %v915 = vpack.c.b16 %v906, %v905
  %v916 = vpack.c.b16 %v908, %v907
  %925 = vmatprep.subr.bf16.mxu0 0
  %926 = vmatpush1.bf16.msra.mxu0 %v909
  %927 = vmatprep.subr.bf16.mxu0 0
  %928 = vmatpush1.bf16.msra.mxu0 %v910
  %929 = vmatprep.subr.bf16.mxu0 0
  %930 = vmatpush1.bf16.msra.mxu0 %v911
  %931 = vmatprep.subr.bf16.mxu0 0
  %932 = vmatpush1.bf16.msra.mxu0 %v912
  %933 = vmatprep.subr.bf16.mxu0 0
  %934 = vmatpush1.bf16.msra.mxu0 %v913
  %935 = vmatprep.subr.bf16.mxu0 0
  %936 = vmatpush1.bf16.msra.mxu0 %v914
  %937 = vmatprep.subr.bf16.mxu0 0
  %938 = vmatpush1.bf16.msra.mxu0 %v915
  %939 = vmatprep.subr.bf16.mxu0 0
  %940 = vmatpush1.bf16.msra.mxu0 %v916
  %941 = vmatprep.subr.bf16.mxu0 0
  %942 = vmatpush1.bf16.msra.mxu0 0
  %943 = vmatprep.subr.bf16.mxu0 0
  %944 = vmatpush1.bf16.msra.mxu0 0
  %945 = vmatprep.subr.bf16.mxu0 0
  %946 = vmatpush1.bf16.msra.mxu0 0
  %947 = vmatprep.subr.bf16.mxu0 0
  %948 = vmatpush1.bf16.msra.mxu0 0
  %949 = vmatprep.subr.bf16.mxu0 0
  %950 = vmatpush1.bf16.msra.mxu0 0
  %951 = vmatprep.subr.bf16.mxu0 0
  %952 = vmatpush1.bf16.msra.mxu0 0
  %953 = vmatprep.subr.bf16.mxu0 0
  %954 = vmatpush1.bf16.msra.mxu0 0
  %955 = vmatprep.subr.bf16.mxu0 0
  %956 = vmatpush1.bf16.msra.mxu0 0
  %957 = vmatprep.mubr.bf16.mxu0 0
  %958 = vmatmul.mubr.bf16.gmra.mrb[0].mxu0 %v853
  %v959 = vpop.f32.mrb[0].mxu0
  %v960 = vadd.f32 0.0, %v959
  %v961 = vpop.f32.mrb[0].mxu0
  %v962 = vpop.f32.mrb[0].mxu0
  %v963 = vadd.f32 0.0, %v962
  %v964 = vpop.f32.mrb[0].mxu0
  %965 = vmatprep.mubr.bf16.mxu0 0
  %966 = vmatmul.mubr.bf16.gmra.mrb[0].mxu0 %v854
  %v967 = vpop.f32.mrb[0].mxu0
  %v968 = vadd.f32 0.0, %v967
  %v969 = vpop.f32.mrb[0].mxu0
  %v970 = vpop.f32.mrb[0].mxu0
  %v971 = vadd.f32 0.0, %v970
  %v972 = vpop.f32.mrb[0].mxu0
  %973 = vmatprep.mubr.bf16.mxu0 0
  %974 = vmatmul.mubr.bf16.gmra.mrb[0].mxu0 %v855
  %v975 = vpop.f32.mrb[0].mxu0
  %v976 = vadd.f32 0.0, %v975
  %v977 = vpop.f32.mrb[0].mxu0
  %v978 = vpop.f32.mrb[0].mxu0
  %v979 = vadd.f32 0.0, %v978
  %v980 = vpop.f32.mrb[0].mxu0
  %981 = vmatprep.mubr.bf16.mxu0 0
  %982 = vmatmul.mubr.bf16.gmra.mrb[0].mxu0 %v856
  %v983 = vpop.f32.mrb[0].mxu0
  %v984 = vadd.f32 0.0, %v983
  %v985 = vpop.f32.mrb[0].mxu0
  %v986 = vpop.f32.mrb[0].mxu0
  %v987 = vadd.f32 0.0, %v986
  %v988 = vpop.f32.mrb[0].mxu0
  %989 = vmatprep.mubr.bf16.mxu0 0
  %990 = vmatmul.mubr.bf16.gmra.mrb[0].mxu0 %v857
  %v991 = vpop.f32.mrb[0].mxu0
  %v992 = vadd.f32 0.0, %v991
  %v993 = vpop.f32.mrb[0].mxu0
  %v994 = vpop.f32.mrb[0].mxu0
  %v995 = vadd.f32 0.0, %v994
  %v996 = vpop.f32.mrb[0].mxu0
  %997 = vmatprep.mubr.bf16.mxu0 0
  %998 = vmatmul.mubr.bf16.gmra.mrb[0].mxu0 %v858
  %v999 = vpop.f32.mrb[0].mxu0
  %v1000 = vadd.f32 0.0, %v999
  %v1001 = vpop.f32.mrb[0].mxu0
  %v1002 = vpop.f32.mrb[0].mxu0
  %v1003 = vadd.f32 0.0, %v1002
  %v1004 = vpop.f32.mrb[0].mxu0
  %1005 = vmatprep.mubr.bf16.mxu0 0
  %1006 = vmatmul.mubr.bf16.gmra.mrb[0].mxu0 %v859
  %v1007 = vpop.f32.mrb[0].mxu0
  %v1008 = vadd.f32 0.0, %v1007
  %v1009 = vpop.f32.mrb[0].mxu0
  %v1010 = vpop.f32.mrb[0].mxu0
  %v1011 = vadd.f32 0.0, %v1010
  %v1012 = vpop.f32.mrb[0].mxu0
  %1013 = vmatprep.mubr.bf16.mxu0 0
  %1014 = vmatmul.mubr.bf16.gmra.mrb[0].mxu0 %v860
  %v1015 = vpop.f32.mrb[0].mxu0
  %v1016 = vadd.f32 0.0, %v1015
  %v1017 = vpop.f32.mrb[0].mxu0
  %v1018 = vpop.f32.mrb[0].mxu0
  %v1019 = vadd.f32 0.0, %v1018
  %v1020 = vpop.f32.mrb[0].mxu0
  %1021 = vdwg.mxu0
  %v1022 = vadd.f32 %v837, %v960
  %v1023 = vadd.f32 %v838, %v963
  %v1024 = vadd.f32 %v839, %v968
  %v1025 = vadd.f32 %v840, %v971
  %v1026 = vadd.f32 %v841, %v976
  %v1027 = vadd.f32 %v842, %v979
  %v1028 = vadd.f32 %v843, %v984
  %v1029 = vadd.f32 %v844, %v987
  %v1030 = vadd.f32 %v845, %v992
  %v1031 = vadd.f32 %v846, %v995
  %v1032 = vadd.f32 %v847, %v1000
  %v1033 = vadd.f32 %v848, %v1003
  %v1034 = vadd.f32 %v849, %v1008
  %v1035 = vadd.f32 %v850, %v1011
  %v1036 = vadd.f32 %v851, %v1016
  %v1037 = vadd.f32 %v852, %v1019
  %1038 = vst [vmem:[#allocation4] sm:$0xff] %v1022
  %1039 = vst [vmem:[#allocation4 + $0x8] sm:$0xff] %v1023
  %1040 = vst [vmem:[#allocation4 + $0x10] sm:$0xff] %v1024
  %1041 = vst [vmem:[#allocation4 + $0x18] sm:$0xff] %v1025
  %1042 = vst [vmem:[#allocation4 + $0x20] sm:$0xff] %v1026
  %1043 = vst [vmem:[#allocation4 + $0x28] sm:$0xff] %v1027
  %1044 = vst [vmem:[#allocation4 + $0x30] sm:$0xff] %v1028
  %1045 = vst [vmem:[#allocation4 + $0x38] sm:$0xff] %v1029
  %1046 = vst [vmem:[#allocation4 + $0x40] sm:$0xff] %v1030
  %1047 = vst [vmem:[#allocation4 + $0x48] sm:$0xff] %v1031
  %1048 = vst [vmem:[#allocation4 + $0x50] sm:$0xff] %v1032
  %1049 = vst [vmem:[#allocation4 + $0x58] sm:$0xff] %v1033
  %1050 = vst [vmem:[#allocation4 + $0x60] sm:$0xff] %v1034
  %1051 = vst [vmem:[#allocation4 + $0x68] sm:$0xff] %v1035
  %1052 = vst [vmem:[#allocation4 + $0x70] sm:$0xff] %v1036
  %1053 = vst [vmem:[#allocation4 + $0x78] sm:$0xff] %v1037
  %1054 = vst.msk [vmem:[#allocation2] sm:$0xff] %vm724, %v436
  %1055 = vst.msk [vmem:[#allocation2 + $0x8] sm:$0xff] %vm724, %v437
  %1056 = vst.msk [vmem:[#allocation2 + $0x10] sm:$0xff] %vm724, %v438
  %1057 = vst.msk [vmem:[#allocation2 + $0x18] sm:$0xff] %vm724, %v439
  %1058 = vst.msk [vmem:[#allocation2 + $0x20] sm:$0xff] %vm724, %v440
  %1059 = vst.msk [vmem:[#allocation2 + $0x28] sm:$0xff] %vm724, %v441
  %1060 = vst.msk [vmem:[#allocation2 + $0x30] sm:$0xff] %vm724, %v442
  %1061 = vst.msk [vmem:[#allocation2 + $0x38] sm:$0xff] %vm724, %v443
  %1062 = vst.msk [vmem:[#allocation2 + $0x40] sm:$0xff] %vm724, %v444
  %1063 = vst.msk [vmem:[#allocation2 + $0x48] sm:$0xff] %vm724, %v445
  %1064 = vst.msk [vmem:[#allocation2 + $0x50] sm:$0xff] %vm724, %v446
  %1065 = vst.msk [vmem:[#allocation2 + $0x58] sm:$0xff] %vm724, %v447
  %1066 = vst.msk [vmem:[#allocation2 + $0x60] sm:$0xff] %vm724, %v448
  %1067 = vst.msk [vmem:[#allocation2 + $0x68] sm:$0xff] %vm724, %v449
  %1068 = vst.msk [vmem:[#allocation2 + $0x70] sm:$0xff] %vm724, %v450
  %1069 = vst.msk [vmem:[#allocation2 + $0x78] sm:$0xff] %vm724, %v451
  // Predicated region
  $region30: #{gat_forward.4} parent=0 // pred_check
    %p1070 = pneg %p28
  $region31: #{gat_forward.4} parent=0 // pred_check_branch
    %1072 = sbr.rel (%p1070) target = $region33
  $region32: #{gat_forward.4} parent=0 // pred_region
    %v1073 = vld [vmem:[#allocation3] sm:$0xff]
    %v1074 = vld [vmem:[#allocation3 + $0x8] sm:$0xff]
    %v1075 = vld [vmem:[#allocation3 + $0x10] sm:$0xff]
    %v1076 = vld [vmem:[#allocation3 + $0x18] sm:$0xff]
    %v1077 = vld [vmem:[#allocation3 + $0x20] sm:$0xff]
    %v1078 = vld [vmem:[#allocation3 + $0x28] sm:$0xff]
    %v1079 = vld [vmem:[#allocation3 + $0x30] sm:$0xff]
    %v1080 = vld [vmem:[#allocation3 + $0x38] sm:$0xff]
    %v1081 = vld [vmem:[#allocation3 + $0x40] sm:$0xff]
    %v1082 = vld [vmem:[#allocation3 + $0x48] sm:$0xff]
    %v1083 = vld [vmem:[#allocation3 + $0x50] sm:$0xff]
    %v1084 = vld [vmem:[#allocation3 + $0x58] sm:$0xff]
    %v1085 = vld [vmem:[#allocation3 + $0x60] sm:$0xff]
    %v1086 = vld [vmem:[#allocation3 + $0x68] sm:$0xff]
    %v1087 = vld [vmem:[#allocation3 + $0x70] sm:$0xff]
    %v1088 = vld [vmem:[#allocation3 + $0x78] sm:$0xff]
    %v1089 = vmax.f32 %v1073, 1e-30
    %v1090 = vmax.f32 %v1074, 1e-30
    %v1091 = vmax.f32 %v1075, 1e-30
    %v1092 = vmax.f32 %v1076, 1e-30
    %v1093 = vmax.f32 %v1077, 1e-30
    %v1094 = vmax.f32 %v1078, 1e-30
    %v1095 = vmax.f32 %v1079, 1e-30
    %v1096 = vmax.f32 %v1080, 1e-30
    %v1097 = vmax.f32 %v1081, 1e-30
    %v1098 = vmax.f32 %v1082, 1e-30
    %v1099 = vmax.f32 %v1083, 1e-30
    %v1100 = vmax.f32 %v1084, 1e-30
    %v1101 = vmax.f32 %v1085, 1e-30
    %v1102 = vmax.f32 %v1086, 1e-30
    %v1103 = vmax.f32 %v1087, 1e-30
    %v1104 = vmax.f32 %v1088, 1e-30
    %v1105 = vrcp.pop %v1089
    %v1106 = vrcp.pop %v1090
    %v1107 = vrcp.pop %v1091
    %v1108 = vrcp.pop %v1092
    %v1109 = vrcp.pop %v1093
    %v1110 = vrcp.pop %v1094
    %v1111 = vrcp.pop %v1095
    %v1112 = vrcp.pop %v1096
    %v1113 = vrcp.pop %v1097
    %v1114 = vrcp.pop %v1098
    %v1115 = vrcp.pop %v1099
    %v1116 = vrcp.pop %v1100
    %v1117 = vrcp.pop %v1101
    %v1118 = vrcp.pop %v1102
    %v1119 = vrcp.pop %v1103
    %v1120 = vrcp.pop %v1104
    %v1121 = vld [vmem:[#allocation4] sm:$0xff]
    %v1122 = vld [vmem:[#allocation4 + $0x8] sm:$0xff]
    %v1123 = vld [vmem:[#allocation4 + $0x10] sm:$0xff]
    %v1124 = vld [vmem:[#allocation4 + $0x18] sm:$0xff]
    %v1125 = vld [vmem:[#allocation4 + $0x20] sm:$0xff]
    %v1126 = vld [vmem:[#allocation4 + $0x28] sm:$0xff]
    %v1127 = vld [vmem:[#allocation4 + $0x30] sm:$0xff]
    %v1128 = vld [vmem:[#allocation4 + $0x38] sm:$0xff]
    %v1129 = vld [vmem:[#allocation4 + $0x40] sm:$0xff]
    %v1130 = vld [vmem:[#allocation4 + $0x48] sm:$0xff]
    %v1131 = vld [vmem:[#allocation4 + $0x50] sm:$0xff]
    %v1132 = vld [vmem:[#allocation4 + $0x58] sm:$0xff]
    %v1133 = vld [vmem:[#allocation4 + $0x60] sm:$0xff]
    %v1134 = vld [vmem:[#allocation4 + $0x68] sm:$0xff]
    %v1135 = vld [vmem:[#allocation4 + $0x70] sm:$0xff]
    %v1136 = vld [vmem:[#allocation4 + $0x78] sm:$0xff]
    %1138 = vset.pattern.permute.xlu0 0
    %1139 = vperm.xlu0 %1138, %v1105
    %v1140 = vpop.permute.xlu0 %1139
    %1143 = vset.pattern.permute.xlu0 0
    %1144 = vperm.xlu0 %1143, %v1106
    %v1145 = vpop.permute.xlu0 %1144
    %1148 = vset.pattern.permute.xlu0 0
    %1149 = vperm.xlu0 %1148, %v1107
    %v1150 = vpop.permute.xlu0 %1149
    %1153 = vset.pattern.permute.xlu0 0
    %1154 = vperm.xlu0 %1153, %v1108
    %v1155 = vpop.permute.xlu0 %1154
    %1158 = vset.pattern.permute.xlu0 0
    %1159 = vperm.xlu0 %1158, %v1109
    %v1160 = vpop.permute.xlu0 %1159
    %1163 = vset.pattern.permute.xlu0 0
    %1164 = vperm.xlu0 %1163, %v1110
    %v1165 = vpop.permute.xlu0 %1164
    %1168 = vset.pattern.permute.xlu0 0
    %1169 = vperm.xlu0 %1168, %v1111
    %v1170 = vpop.permute.xlu0 %1169
    %1173 = vset.pattern.permute.xlu0 0
    %1174 = vperm.xlu0 %1173, %v1112
    %v1175 = vpop.permute.xlu0 %1174
    %1178 = vset.pattern.permute.xlu0 0
    %1179 = vperm.xlu0 %1178, %v1113
    %v1180 = vpop.permute.xlu0 %1179
    %1183 = vset.pattern.permute.xlu0 0
    %1184 = vperm.xlu0 %1183, %v1114
    %v1185 = vpop.permute.xlu0 %1184
    %1188 = vset.pattern.permute.xlu0 0
    %1189 = vperm.xlu0 %1188, %v1115
    %v1190 = vpop.permute.xlu0 %1189
    %1193 = vset.pattern.permute.xlu0 0
    %1194 = vperm.xlu0 %1193, %v1116
    %v1195 = vpop.permute.xlu0 %1194
    %1198 = vset.pattern.permute.xlu0 0
    %1199 = vperm.xlu0 %1198, %v1117
    %v1200 = vpop.permute.xlu0 %1199
    %1203 = vset.pattern.permute.xlu0 0
    %1204 = vperm.xlu0 %1203, %v1118
    %v1205 = vpop.permute.xlu0 %1204
    %1208 = vset.pattern.permute.xlu0 0
    %1209 = vperm.xlu0 %1208, %v1119
    %v1210 = vpop.permute.xlu0 %1209
    %1213 = vset.pattern.permute.xlu0 0
    %1214 = vperm.xlu0 %1213, %v1120
    %v1215 = vpop.permute.xlu0 %1214
    %v1217 = vmul.f32 %v1121, %v1140
    %v1218 = vmul.f32 %v1122, %v1145
    %v1219 = vmul.f32 %v1123, %v1150
    %v1220 = vmul.f32 %v1124, %v1155
    %v1221 = vmul.f32 %v1125, %v1160
    %v1222 = vmul.f32 %v1126, %v1165
    %v1223 = vmul.f32 %v1127, %v1170
    %v1224 = vmul.f32 %v1128, %v1175
    %v1225 = vmul.f32 %v1129, %v1180
    %v1226 = vmul.f32 %v1130, %v1185
    %v1227 = vmul.f32 %v1131, %v1190
    %v1228 = vmul.f32 %v1132, %v1195
    %v1229 = vmul.f32 %v1133, %v1200
    %v1230 = vmul.f32 %v1134, %v1205
    %v1231 = vmul.f32 %v1135, %v1210
    %v1232 = vmul.f32 %v1136, %v1215
    %vm1233 = vcmp.gt.f32.partialorder %v1217, 0.0
    %vm1234 = vcmp.gt.f32.partialorder %v1218, 0.0
    %vm1235 = vcmp.gt.f32.partialorder %v1219, 0.0
    %vm1236 = vcmp.gt.f32.partialorder %v1220, 0.0
    %vm1237 = vcmp.gt.f32.partialorder %v1221, 0.0
    %vm1238 = vcmp.gt.f32.partialorder %v1222, 0.0
    %vm1239 = vcmp.gt.f32.partialorder %v1223, 0.0
    %vm1240 = vcmp.gt.f32.partialorder %v1224, 0.0
    %vm1241 = vcmp.gt.f32.partialorder %v1225, 0.0
    %vm1242 = vcmp.gt.f32.partialorder %v1226, 0.0
    %vm1243 = vcmp.gt.f32.partialorder %v1227, 0.0
    %vm1244 = vcmp.gt.f32.partialorder %v1228, 0.0
    %vm1245 = vcmp.gt.f32.partialorder %v1229, 0.0
    %vm1246 = vcmp.gt.f32.partialorder %v1230, 0.0
    %vm1247 = vcmp.gt.f32.partialorder %v1231, 0.0
    %vm1248 = vcmp.gt.f32.partialorder %v1232, 0.0
    %v1249 = vmul.f32 %v1217, 1.442695
    %v1250 = vpow.pop %v1249
    %v1251 = vmul.f32 %v1218, 1.442695
    %v1252 = vpow.pop %v1251
    %v1253 = vmul.f32 %v1219, 1.442695
    %v1254 = vpow.pop %v1253
    %v1255 = vmul.f32 %v1220, 1.442695
    %v1256 = vpow.pop %v1255
    %v1257 = vmul.f32 %v1221, 1.442695
    %v1258 = vpow.pop %v1257
    %v1259 = vmul.f32 %v1222, 1.442695
    %v1260 = vpow.pop %v1259
    %v1261 = vmul.f32 %v1223, 1.442695
    %v1262 = vpow.pop %v1261
    %v1263 = vmul.f32 %v1224, 1.442695
    %v1264 = vpow.pop %v1263
    %v1265 = vmul.f32 %v1225, 1.442695
    %v1266 = vpow.pop %v1265
    %v1267 = vmul.f32 %v1226, 1.442695
    %v1268 = vpow.pop %v1267
    %v1269 = vmul.f32 %v1227, 1.442695
    %v1270 = vpow.pop %v1269
    %v1271 = vmul.f32 %v1228, 1.442695
    %v1272 = vpow.pop %v1271
    %v1273 = vmul.f32 %v1229, 1.442695
    %v1274 = vpow.pop %v1273
    %v1275 = vmul.f32 %v1230, 1.442695
    %v1276 = vpow.pop %v1275
    %v1277 = vmul.f32 %v1231, 1.442695
    %v1278 = vpow.pop %v1277
    %v1279 = vmul.f32 %v1232, 1.442695
    %v1280 = vpow.pop %v1279
    %v1281 = vsub.f32 %v1250, 1.0
    %v1282 = vsub.f32 %v1252, 1.0
    %v1283 = vsub.f32 %v1254, 1.0
    %v1284 = vsub.f32 %v1256, 1.0
    %v1285 = vsub.f32 %v1258, 1.0
    %v1286 = vsub.f32 %v1260, 1.0
    %v1287 = vsub.f32 %v1262, 1.0
    %v1288 = vsub.f32 %v1264, 1.0
    %v1289 = vsub.f32 %v1266, 1.0
    %v1290 = vsub.f32 %v1268, 1.0
    %v1291 = vsub.f32 %v1270, 1.0
    %v1292 = vsub.f32 %v1272, 1.0
    %v1293 = vsub.f32 %v1274, 1.0
    %v1294 = vsub.f32 %v1276, 1.0
    %v1295 = vsub.f32 %v1278, 1.0
    %v1296 = vsub.f32 %v1280, 1.0
    %v1297 = vsel %vm1233, %v1217, %v1281
    %v1298 = vsel %vm1234, %v1218, %v1282
    %v1299 = vsel %vm1235, %v1219, %v1283
    %v1300 = vsel %vm1236, %v1220, %v1284
    %v1301 = vsel %vm1237, %v1221, %v1285
    %v1302 = vsel %vm1238, %v1222, %v1286
    %v1303 = vsel %vm1239, %v1223, %v1287
    %v1304 = vsel %vm1240, %v1224, %v1288
    %v1305 = vsel %vm1241, %v1225, %v1289
    %v1306 = vsel %vm1242, %v1226, %v1290
    %v1307 = vsel %vm1243, %v1227, %v1291
    %v1308 = vsel %vm1244, %v1228, %v1292
    %v1309 = vsel %vm1245, %v1229, %v1293
    %v1310 = vsel %vm1246, %v1230, %v1294
    %v1311 = vsel %vm1247, %v1231, %v1295
    %v1312 = vsel %vm1248, %v1232, %v1296
    %v1313 = vpack.c.bf16 %v1298, %v1297
    %v1314 = vpack.c.bf16 %v1300, %v1299
    %v1315 = vpack.c.bf16 %v1302, %v1301
    %v1316 = vpack.c.bf16 %v1304, %v1303
    %v1317 = vpack.c.bf16 %v1306, %v1305
    %v1318 = vpack.c.bf16 %v1308, %v1307
    %v1319 = vpack.c.bf16 %v1310, %v1309
    %v1320 = vpack.c.bf16 %v1312, %v1311
    %v1321 = vld [vmem:[%s4] sm:$0xf]
    %v1322 = vld [vmem:[%s4 + $0x4] sm:$0xf]
    %v1323 = vld [vmem:[%s4 + $0x8] sm:$0xf]
    %v1324 = vld [vmem:[%s4 + $0xc] sm:$0xf]
    %v1325 = vld [vmem:[%s4 + $0x10] sm:$0xf]
    %v1326 = vld [vmem:[%s4 + $0x14] sm:$0xf]
    %v1327 = vld [vmem:[%s4 + $0x18] sm:$0xf]
    %v1328 = vld [vmem:[%s4 + $0x1c] sm:$0xf]
    %v1329 = vld [vmem:[%s4 + $0x20] sm:$0xf]
    %v1330 = vld [vmem:[%s4 + $0x24] sm:$0xf]
    %v1331 = vld [vmem:[%s4 + $0x28] sm:$0xf]
    %v1332 = vld [vmem:[%s4 + $0x2c] sm:$0xf]
    %v1333 = vld [vmem:[%s4 + $0x30] sm:$0xf]
    %v1334 = vld [vmem:[%s4 + $0x34] sm:$0xf]
    %v1335 = vld [vmem:[%s4 + $0x38] sm:$0xf]
    %v1336 = vld [vmem:[%s4 + $0x3c] sm:$0xf]
    %v1353 = vunpack.c.l.b16 %v1321
    %v1354 = vunpack.c.l.b16 %v1322
    %v1355 = vunpack.c.l.b16 %v1323
    %v1356 = vunpack.c.l.b16 %v1324
    %v1357 = vunpack.c.l.b16 %v1325
    %v1358 = vunpack.c.l.b16 %v1326
    %v1359 = vunpack.c.l.b16 %v1327
    %v1360 = vunpack.c.l.b16 %v1328
    %v1361 = vunpack.c.l.b16 %v1329
    %v1362 = vunpack.c.l.b16 %v1330
    %v1363 = vunpack.c.l.b16 %v1331
    %v1364 = vunpack.c.l.b16 %v1332
    %v1365 = vunpack.c.l.b16 %v1333
    %v1366 = vunpack.c.l.b16 %v1334
    %v1367 = vunpack.c.l.b16 %v1335
    %v1368 = vunpack.c.l.b16 %v1336
    %v1369 = vpack.c.b16 %v1354, %v1353
    %v1370 = vpack.c.b16 %v1356, %v1355
    %v1371 = vpack.c.b16 %v1358, %v1357
    %v1372 = vpack.c.b16 %v1360, %v1359
    %v1373 = vpack.c.b16 %v1362, %v1361
    %v1374 = vpack.c.b16 %v1364, %v1363
    %v1375 = vpack.c.b16 %v1366, %v1365
    %v1376 = vpack.c.b16 %v1368, %v1367
    %1385 = vmatprep.subr.bf16.mxu0 0
    %1386 = vmatpush1.bf16.msra.mxu0 %v1369
    %1387 = vmatprep.subr.bf16.mxu0 0
    %1388 = vmatpush1.bf16.msra.mxu0 %v1370
    %1389 = vmatprep.subr.bf16.mxu0 0
    %1390 = vmatpush1.bf16.msra.mxu0 %v1371
    %1391 = vmatprep.subr.bf16.mxu0 0
    %1392 = vmatpush1.bf16.msra.mxu0 %v1372
    %1393 = vmatprep.subr.bf16.mxu0 0
    %1394 = vmatpush1.bf16.msra.mxu0 %v1373
    %1395 = vmatprep.subr.bf16.mxu0 0
    %1396 = vmatpush1.bf16.msra.mxu0 %v1374
    %1397 = vmatprep.subr.bf16.mxu0 0
    %1398 = vmatpush1.bf16.msra.mxu0 %v1375
    %1399 = vmatprep.subr.bf16.mxu0 0
    %1400 = vmatpush1.bf16.msra.mxu0 %v1376
    %1401 = vmatprep.subr.bf16.mxu0 0
    %1402 = vmatpush1.bf16.msra.mxu0 0
    %1403 = vmatprep.subr.bf16.mxu0 0
    %1404 = vmatpush1.bf16.msra.mxu0 0
    %1405 = vmatprep.subr.bf16.mxu0 0
    %1406 = vmatpush1.bf16.msra.mxu0 0
    %1407 = vmatprep.subr.bf16.mxu0 0
    %1408 = vmatpush1.bf16.msra.mxu0 0
    %1409 = vmatprep.subr.bf16.mxu0 0
    %1410 = vmatpush1.bf16.msra.mxu0 0
    %1411 = vmatprep.subr.bf16.mxu0 0
    %1412 = vmatpush1.bf16.msra.mxu0 0
    %1413 = vmatprep.subr.bf16.mxu0 0
    %1414 = vmatpush1.bf16.msra.mxu0 0
    %1415 = vmatprep.subr.bf16.mxu0 0
    %1416 = vmatpush1.bf16.msra.mxu0 0
    %1417 = vmatprep.mubr.bf16.mxu0 0
    %1418 = vmatmul.mubr.bf16.gmra.mrb[0].mxu0 %v1313
    %v1419 = vpop.f32.mrb[0].mxu0
    %v1420 = vadd.f32 0.0, %v1419
    %v1421 = vpop.f32.mrb[0].mxu0
    %v1422 = vpop.f32.mrb[0].mxu0
    %v1423 = vadd.f32 0.0, %v1422
    %v1424 = vpop.f32.mrb[0].mxu0
    %1425 = vmatprep.mubr.bf16.mxu0 0
    %1426 = vmatmul.mubr.bf16.gmra.mrb[0].mxu0 %v1314
    %v1427 = vpop.f32.mrb[0].mxu0
    %v1428 = vadd.f32 0.0, %v1427
    %v1429 = vpop.f32.mrb[0].mxu0
    %v1430 = vpop.f32.mrb[0].mxu0
    %v1431 = vadd.f32 0.0, %v1430
    %v1432 = vpop.f32.mrb[0].mxu0
    %1433 = vmatprep.mubr.bf16.mxu0 0
    %1434 = vmatmul.mubr.bf16.gmra.mrb[0].mxu0 %v1315
    %v1435 = vpop.f32.mrb[0].mxu0
    %v1436 = vadd.f32 0.0, %v1435
    %v1437 = vpop.f32.mrb[0].mxu0
    %v1438 = vpop.f32.mrb[0].mxu0
    %v1439 = vadd.f32 0.0, %v1438
    %v1440 = vpop.f32.mrb[0].mxu0
    %1441 = vmatprep.mubr.bf16.mxu0 0
    %1442 = vmatmul.mubr.bf16.gmra.mrb[0].mxu0 %v1316
    %v1443 = vpop.f32.mrb[0].mxu0
    %v1444 = vadd.f32 0.0, %v1443
    %v1445 = vpop.f32.mrb[0].mxu0
    %v1446 = vpop.f32.mrb[0].mxu0
    %v1447 = vadd.f32 0.0, %v1446
    %v1448 = vpop.f32.mrb[0].mxu0
    %1449 = vmatprep.mubr.bf16.mxu0 0
    %1450 = vmatmul.mubr.bf16.gmra.mrb[0].mxu0 %v1317
    %v1451 = vpop.f32.mrb[0].mxu0
    %v1452 = vadd.f32 0.0, %v1451
    %v1453 = vpop.f32.mrb[0].mxu0
    %v1454 = vpop.f32.mrb[0].mxu0
    %v1455 = vadd.f32 0.0, %v1454
    %v1456 = vpop.f32.mrb[0].mxu0
    %1457 = vmatprep.mubr.bf16.mxu0 0
    %1458 = vmatmul.mubr.bf16.gmra.mrb[0].mxu0 %v1318
    %v1459 = vpop.f32.mrb[0].mxu0
    %v1460 = vadd.f32 0.0, %v1459
    %v1461 = vpop.f32.mrb[0].mxu0
    %v1462 = vpop.f32.mrb[0].mxu0
    %v1463 = vadd.f32 0.0, %v1462
    %v1464 = vpop.f32.mrb[0].mxu0
    %1465 = vmatprep.mubr.bf16.mxu0 0
    %1466 = vmatmul.mubr.bf16.gmra.mrb[0].mxu0 %v1319
    %v1467 = vpop.f32.mrb[0].mxu0
    %v1468 = vadd.f32 0.0, %v1467
    %v1469 = vpop.f32.mrb[0].mxu0
    %v1470 = vpop.f32.mrb[0].mxu0
    %v1471 = vadd.f32 0.0, %v1470
    %v1472 = vpop.f32.mrb[0].mxu0
    %1473 = vmatprep.mubr.bf16.mxu0 0
    %1474 = vmatmul.mubr.bf16.gmra.mrb[0].mxu0 %v1320
    %v1475 = vpop.f32.mrb[0].mxu0
    %v1476 = vadd.f32 0.0, %v1475
    %v1477 = vpop.f32.mrb[0].mxu0
    %v1478 = vpop.f32.mrb[0].mxu0
    %v1479 = vadd.f32 0.0, %v1478
    %v1480 = vpop.f32.mrb[0].mxu0
    %1481 = vdwg.mxu0
    %v1482 = vpack.c.bf16 %v1423, %v1420
    %v1483 = vpack.c.bf16 %v1431, %v1428
    %v1484 = vpack.c.bf16 %v1439, %v1436
    %v1485 = vpack.c.bf16 %v1447, %v1444
    %v1486 = vpack.c.bf16 %v1455, %v1452
    %v1487 = vpack.c.bf16 %v1463, %v1460
    %v1488 = vpack.c.bf16 %v1471, %v1468
    %v1489 = vpack.c.bf16 %v1479, %v1476
    %v1498 = vunpack.c.l.b16 %v1482
    %v1499 = vunpack.c.h.b16 %v1482
    %v1500 = vunpack.c.l.b16 %v1483
    %v1501 = vunpack.c.h.b16 %v1483
    %v1502 = vunpack.c.l.b16 %v1484
    %v1503 = vunpack.c.h.b16 %v1484
    %v1504 = vunpack.c.l.b16 %v1485
    %v1505 = vunpack.c.h.b16 %v1485
    %v1506 = vunpack.c.l.b16 %v1486
    %v1507 = vunpack.c.h.b16 %v1486
    %v1508 = vunpack.c.l.b16 %v1487
    %v1509 = vunpack.c.h.b16 %v1487
    %v1510 = vunpack.c.l.b16 %v1488
    %v1511 = vunpack.c.h.b16 %v1488
    %v1512 = vunpack.c.l.b16 %v1489
    %v1513 = vunpack.c.h.b16 %v1489
    %v1514 = vpack.c.b16 %v1498, %v1498
    %v1515 = vpack.c.b16 %v1499, %v1499
    %v1516 = vpack.c.b16 %v1500, %v1500
    %v1517 = vpack.c.b16 %v1501, %v1501
    %v1518 = vpack.c.b16 %v1502, %v1502
    %v1519 = vpack.c.b16 %v1503, %v1503
    %v1520 = vpack.c.b16 %v1504, %v1504
    %v1521 = vpack.c.b16 %v1505, %v1505
    %v1522 = vpack.c.b16 %v1506, %v1506
    %v1523 = vpack.c.b16 %v1507, %v1507
    %v1524 = vpack.c.b16 %v1508, %v1508
    %v1525 = vpack.c.b16 %v1509, %v1509
    %v1526 = vpack.c.b16 %v1510, %v1510
    %v1527 = vpack.c.b16 %v1511, %v1511
    %v1528 = vpack.c.b16 %v1512, %v1512
    %v1529 = vpack.c.b16 %v1513, %v1513
    %1546 = vst [vmem:[%s6] sm:$0xf] %v1514
    %1547 = vst [vmem:[%s6 + $0x4] sm:$0xf] %v1515
    %1548 = vst [vmem:[%s6 + $0x8] sm:$0xf] %v1516
    %1549 = vst [vmem:[%s6 + $0xc] sm:$0xf] %v1517
    %1550 = vst [vmem:[%s6 + $0x10] sm:$0xf] %v1518
    %1551 = vst [vmem:[%s6 + $0x14] sm:$0xf] %v1519
    %1552 = vst [vmem:[%s6 + $0x18] sm:$0xf] %v1520
    %1553 = vst [vmem:[%s6 + $0x1c] sm:$0xf] %v1521
    %1554 = vst [vmem:[%s6 + $0x20] sm:$0xf] %v1522
    %1555 = vst [vmem:[%s6 + $0x24] sm:$0xf] %v1523
    %1556 = vst [vmem:[%s6 + $0x28] sm:$0xf] %v1524
    %1557 = vst [vmem:[%s6 + $0x2c] sm:$0xf] %v1525
    %1558 = vst [vmem:[%s6 + $0x30] sm:$0xf] %v1526
    %1559 = vst [vmem:[%s6 + $0x34] sm:$0xf] %v1527
    %1560 = vst [vmem:[%s6 + $0x38] sm:$0xf] %v1528
    %1561 = vst [vmem:[%s6 + $0x3c] sm:$0xf] %v1529
    %v1562 = vld [vmem:[%s5] sm:$0xff]
    %v1563 = vld [vmem:[%s5 + $0x8] sm:$0xff]
    %v1564 = vld [vmem:[%s5 + $0x10] sm:$0xff]
    %v1565 = vld [vmem:[%s5 + $0x18] sm:$0xff]
    %v1566 = vld [vmem:[%s5 + $0x20] sm:$0xff]
    %v1567 = vld [vmem:[%s5 + $0x28] sm:$0xff]
    %v1568 = vld [vmem:[%s5 + $0x30] sm:$0xff]
    %v1569 = vld [vmem:[%s5 + $0x38] sm:$0xff]
    %v1570 = vld [vmem:[%s5 + $0x40] sm:$0xff]
    %v1571 = vld [vmem:[%s5 + $0x48] sm:$0xff]
    %v1572 = vld [vmem:[%s5 + $0x50] sm:$0xff]
    %v1573 = vld [vmem:[%s5 + $0x58] sm:$0xff]
    %v1574 = vld [vmem:[%s5 + $0x60] sm:$0xff]
    %v1575 = vld [vmem:[%s5 + $0x68] sm:$0xff]
    %v1576 = vld [vmem:[%s5 + $0x70] sm:$0xff]
    %v1577 = vld [vmem:[%s5 + $0x78] sm:$0xff]
    %1578 = vmatprep.subr.mxu0 0.0
    %1579 = vmatpush1.msra.mxu0 %v1562
    %1580 = vmatprep.subr.mxu0 0.0
    %1581 = vmatpush1.msra.mxu0 %v1563
    %1582 = vmatprep.subr.mxu0 0.0
    %1583 = vmatpush1.msra.mxu0 %v1564
    %1584 = vmatprep.subr.mxu0 0.0
    %1585 = vmatpush1.msra.mxu0 %v1565
    %1586 = vmatprep.subr.mxu0 0.0
    %1587 = vmatpush1.msra.mxu0 %v1566
    %1588 = vmatprep.subr.mxu0 0.0
    %1589 = vmatpush1.msra.mxu0 %v1567
    %1590 = vmatprep.subr.mxu0 0.0
    %1591 = vmatpush1.msra.mxu0 %v1568
    %1592 = vmatprep.subr.mxu0 0.0
    %1593 = vmatpush1.msra.mxu0 %v1569
    %1594 = vmatprep.subr.mxu0 0.0
    %1595 = vmatpush1.msra.mxu0 %v1570
    %1596 = vmatprep.subr.mxu0 0.0
    %1597 = vmatpush1.msra.mxu0 %v1571
    %1598 = vmatprep.subr.mxu0 0.0
    %1599 = vmatpush1.msra.mxu0 %v1572
    %1600 = vmatprep.subr.mxu0 0.0
    %1601 = vmatpush1.msra.mxu0 %v1573
    %1602 = vmatprep.subr.mxu0 0.0
    %1603 = vmatpush1.msra.mxu0 %v1574
    %1604 = vmatprep.subr.mxu0 0.0
    %1605 = vmatpush1.msra.mxu0 %v1575
    %1606 = vmatprep.subr.mxu0 0.0
    %1607 = vmatpush1.msra.mxu0 %v1576
    %1608 = vmatprep.subr.mxu0 0.0
    %1609 = vmatpush1.msra.mxu0 %v1577
    %1610 = vmatprep.subr.mxu0 0.0
    %1611 = vmatpush1.msra.mxu0 0.0
    %1612 = vmatprep.subr.mxu0 0.0
    %1613 = vmatpush1.msra.mxu0 0.0
    %1614 = vmatprep.subr.mxu0 0.0
    %1615 = vmatpush1.msra.mxu0 0.0
    %1616 = vmatprep.subr.mxu0 0.0
    %1617 = vmatpush1.msra.mxu0 0.0
    %1618 = vmatprep.subr.mxu0 0.0
    %1619 = vmatpush1.msra.mxu0 0.0
    %1620 = vmatprep.subr.mxu0 0.0
    %1621 = vmatpush1.msra.mxu0 0.0
    %1622 = vmatprep.subr.mxu0 0.0
    %1623 = vmatpush1.msra.mxu0 0.0
    %1624 = vmatprep.subr.mxu0 0.0
    %1625 = vmatpush1.msra.mxu0 0.0
    %1626 = vmatprep.subr.mxu0 0.0
    %1627 = vmatpush1.msra.mxu0 0.0
    %1628 = vmatprep.subr.mxu0 0.0
    %1629 = vmatpush1.msra.mxu0 0.0
    %1630 = vmatprep.subr.mxu0 0.0
    %1631 = vmatpush1.msra.mxu0 0.0
    %1632 = vmatprep.subr.mxu0 0.0
    %1633 = vmatpush1.msra.mxu0 0.0
    %1634 = vmatprep.subr.mxu0 0.0
    %1635 = vmatpush1.msra.mxu0 0.0
    %1636 = vmatprep.subr.mxu0 0.0
    %1637 = vmatpush1.msra.mxu0 0.0
    %1638 = vmatprep.subr.mxu0 0.0
    %1639 = vmatpush1.msra.mxu0 0.0
    %1640 = vmatprep.subr.mxu0 0.0
    %1641 = vmatpush1.msra.mxu0 0.0
    %1642 = vmatprep.mubr.f32.mxu0 0.0
    %1643 = vmatmul.mubr.f32.gmra.mrb[0].mxu0 %v1420
    %v1644 = vpop.f32.mrb[0].mxu0
    %v1645 = vadd.f32 0.0, %v1644
    %v1646 = vpop.f32.mrb[0].mxu0
    %1647 = vmatprep.mubr.f32.mxu0 0.0
    %1648 = vmatmul.mubr.f32.gmra.mrb[0].mxu0 %v1423
    %v1649 = vpop.f32.mrb[0].mxu0
    %v1650 = vadd.f32 0.0, %v1649
    %v1651 = vpop.f32.mrb[0].mxu0
    %1652 = vmatprep.mubr.f32.mxu0 0.0
    %1653 = vmatmul.mubr.f32.gmra.mrb[0].mxu0 %v1428
    %v1654 = vpop.f32.mrb[0].mxu0
    %v1655 = vadd.f32 0.0, %v1654
    %v1656 = vpop.f32.mrb[0].mxu0
    %1657 = vmatprep.mubr.f32.mxu0 0.0
    %1658 = vmatmul.mubr.f32.gmra.mrb[0].mxu0 %v1431
    %v1659 = vpop.f32.mrb[0].mxu0
    %v1660 = vadd.f32 0.0, %v1659
    %v1661 = vpop.f32.mrb[0].mxu0
    %1662 = vmatprep.mubr.f32.mxu0 0.0
    %1663 = vmatmul.mubr.f32.gmra.mrb[0].mxu0 %v1436
    %v1664 = vpop.f32.mrb[0].mxu0
    %v1665 = vadd.f32 0.0, %v1664
    %v1666 = vpop.f32.mrb[0].mxu0
    %1667 = vmatprep.mubr.f32.mxu0 0.0
    %1668 = vmatmul.mubr.f32.gmra.mrb[0].mxu0 %v1439
    %v1669 = vpop.f32.mrb[0].mxu0
    %v1670 = vadd.f32 0.0, %v1669
    %v1671 = vpop.f32.mrb[0].mxu0
    %1672 = vmatprep.mubr.f32.mxu0 0.0
    %1673 = vmatmul.mubr.f32.gmra.mrb[0].mxu0 %v1444
    %v1674 = vpop.f32.mrb[0].mxu0
    %v1675 = vadd.f32 0.0, %v1674
    %v1676 = vpop.f32.mrb[0].mxu0
    %1677 = vmatprep.mubr.f32.mxu0 0.0
    %1678 = vmatmul.mubr.f32.gmra.mrb[0].mxu0 %v1447
    %v1679 = vpop.f32.mrb[0].mxu0
    %v1680 = vadd.f32 0.0, %v1679
    %v1681 = vpop.f32.mrb[0].mxu0
    %1682 = vmatprep.mubr.f32.mxu0 0.0
    %1683 = vmatmul.mubr.f32.gmra.mrb[0].mxu0 %v1452
    %v1684 = vpop.f32.mrb[0].mxu0
    %v1685 = vadd.f32 0.0, %v1684
    %v1686 = vpop.f32.mrb[0].mxu0
    %1687 = vmatprep.mubr.f32.mxu0 0.0
    %1688 = vmatmul.mubr.f32.gmra.mrb[0].mxu0 %v1455
    %v1689 = vpop.f32.mrb[0].mxu0
    %v1690 = vadd.f32 0.0, %v1689
    %v1691 = vpop.f32.mrb[0].mxu0
    %1692 = vmatprep.mubr.f32.mxu0 0.0
    %1693 = vmatmul.mubr.f32.gmra.mrb[0].mxu0 %v1460
    %v1694 = vpop.f32.mrb[0].mxu0
    %v1695 = vadd.f32 0.0, %v1694
    %v1696 = vpop.f32.mrb[0].mxu0
    %1697 = vmatprep.mubr.f32.mxu0 0.0
    %1698 = vmatmul.mubr.f32.gmra.mrb[0].mxu0 %v1463
    %v1699 = vpop.f32.mrb[0].mxu0
    %v1700 = vadd.f32 0.0, %v1699
    %v1701 = vpop.f32.mrb[0].mxu0
    %1702 = vmatprep.mubr.f32.mxu0 0.0
    %1703 = vmatmul.mubr.f32.gmra.mrb[0].mxu0 %v1468
    %v1704 = vpop.f32.mrb[0].mxu0
    %v1705 = vadd.f32 0.0, %v1704
    %v1706 = vpop.f32.mrb[0].mxu0
    %1707 = vmatprep.mubr.f32.mxu0 0.0
    %1708 = vmatmul.mubr.f32.gmra.mrb[0].mxu0 %v1471
    %v1709 = vpop.f32.mrb[0].mxu0
    %v1710 = vadd.f32 0.0, %v1709
    %v1711 = vpop.f32.mrb[0].mxu0
    %1712 = vmatprep.mubr.f32.mxu0 0.0
    %1713 = vmatmul.mubr.f32.gmra.mrb[0].mxu0 %v1476
    %v1714 = vpop.f32.mrb[0].mxu0
    %v1715 = vadd.f32 0.0, %v1714
    %v1716 = vpop.f32.mrb[0].mxu0
    %1717 = vmatprep.mubr.f32.mxu0 0.0
    %1718 = vmatmul.mubr.f32.gmra.mrb[0].mxu0 %v1479
    %v1719 = vpop.f32.mrb[0].mxu0
    %v1720 = vadd.f32 0.0, %v1719
    %v1721 = vpop.f32.mrb[0].mxu0
    %1722 = vdwg.mxu0
    %vm1723 = vcmask 15360
    %1724 = vst.msk [vmem:[%s7] sm:$0xff] %vm1723, %v1645
    %1725 = vst.msk [vmem:[%s7 + $0x8] sm:$0xff] %vm1723, %v1650
    %1726 = vst.msk [vmem:[%s7 + $0x10] sm:$0xff] %vm1723, %v1655
    %1727 = vst.msk [vmem:[%s7 + $0x18] sm:$0xff] %vm1723, %v1660
    %1728 = vst.msk [vmem:[%s7 + $0x20] sm:$0xff] %vm1723, %v1665
    %1729 = vst.msk [vmem:[%s7 + $0x28] sm:$0xff] %vm1723, %v1670
    %1730 = vst.msk [vmem:[%s7 + $0x30] sm:$0xff] %vm1723, %v1675
    %1731 = vst.msk [vmem:[%s7 + $0x38] sm:$0xff] %vm1723, %v1680
    %1732 = vst.msk [vmem:[%s7 + $0x40] sm:$0xff] %vm1723, %v1685
    %1733 = vst.msk [vmem:[%s7 + $0x48] sm:$0xff] %vm1723, %v1690
    %1734 = vst.msk [vmem:[%s7 + $0x50] sm:$0xff] %vm1723, %v1695
    %1735 = vst.msk [vmem:[%s7 + $0x58] sm:$0xff] %vm1723, %v1700
    %1736 = vst.msk [vmem:[%s7 + $0x60] sm:$0xff] %vm1723, %v1705
    %1737 = vst.msk [vmem:[%s7 + $0x68] sm:$0xff] %vm1723, %v1710
    %1738 = vst.msk [vmem:[%s7 + $0x70] sm:$0xff] %vm1723, %v1715
    %1739 = vst.msk [vmem:[%s7 + $0x78] sm:$0xff] %vm1723, %v1720
  $region33: #{gat_forward.4} parent=0 // pred_fallthru
    _
  // Predicated region
  $region34: #{gat_forward.4} parent=0 // pred_check
    _
  $region35: #{gat_forward.4} parent=0 // pred_check_branch
    %1741 = sbr.rel (0) target = $region37
  $region36: #{gat_forward.4} parent=0 // pred_region
    _
  $region37: #{gat_forward.4} parent=0 // pred_fallthru
    _
  // Predicated region
  $region38: #{gat_forward.4} parent=0 // pred_check
    _
  $region39: #{gat_forward.4} parent=0 // pred_check_branch
    %1743 = sbr.rel (0) target = $region41
  $region40: #{gat_forward.4} parent=0 // pred_region
    _
  $region41: #{gat_forward.4} parent=0 // pred_fallthru
    _
  // Predicated region
  $region42: #{gat_forward.4} parent=0 // pred_check
    _
  $region43: #{gat_forward.4} parent=0 // pred_check_branch
    %1745 = sbr.rel (0) target = $region45
  $region44: #{gat_forward.4} parent=0 // pred_region
    _
  $region45: #{gat_forward.4} parent=0 // pred_fallthru
    _
  // Predicated region
  $region46: #{gat_forward.4} parent=0 // pred_check
    _
  $region47: #{gat_forward.4} parent=0 // pred_check_branch
    %1747 = sbr.rel (0) target = $region49
  $region48: #{gat_forward.4} parent=0 // pred_region
    _
  $region49: #{gat_forward.4} parent=0 // pred_fallthru
    _

</llo_original>
